<compile_context>
chip_gen: v6e
topology: v6e:2x2x1
jax: 0.10.0
libtpu: 0.0.40
codegen_flags: <defaults>
</compile_context>

<pallas_src>
import jax
import jax.numpy as jnp
from jax.experimental import pallas as pl
from jax.experimental.pallas import tpu as pltpu

IN_DIM = 32 * 32 * 3   # 3072
HID = 512
N_OUT = 10
N_PAD = 128            # lane-dense padded output width
MIN_SPLIT_B = 256      # only split batches at least this large into >=2 tiles


def mlp_kernel(x_ref, w1_ref, b1_ref, w2_ref, b2_ref, w3_ref, b3_ref, o_ref):
    # In-kernel cast: f32 x tile -> bf16 for the MXU (avoids a separate serial
    # XLA convert pass over all of x in HBM).
    x = x_ref[...].astype(jnp.bfloat16)
    # Layer 1: (TB, 3072)bf16 @ (3072, 512)bf16 -> f32 acc, bias + ReLU in f32.
    h1 = jnp.dot(x, w1_ref[...], preferred_element_type=jnp.float32)
    h1 = jnp.maximum(h1 + b1_ref[...], 0.0)
    # Layer 2: (TB, 512) @ (512, 512)
    h2 = jnp.dot(h1.astype(jnp.bfloat16), w2_ref[...],
                 preferred_element_type=jnp.float32)
    h2 = jnp.maximum(h2 + b2_ref[...], 0.0)
    # Layer 3 (padded to 128 lanes): (TB, 512) @ (512, 128)
    out = jnp.dot(h2.astype(jnp.bfloat16), w3_ref[...],
                  preferred_element_type=jnp.float32)
    o_ref[...] = (out + b3_ref[...]).astype(o_ref.dtype)


def _round_up(x, m):
    return ((x + m - 1) // m) * m


def _choose_tile_b(batch, max_tile_b):
    """Batch tile: whole batch if small, else >=2 sublane-aligned tiles <= max_tile_b."""
    if batch < min(MIN_SPLIT_B, max_tile_b):
        # Tiny batch: one block whose row dim equals the full array dim
        # (allowed regardless of 8-row divisibility); weight-DMA bound anyway.
        return batch
    n_tiles = max(2, pl.cdiv(batch, max_tile_b))   # >=2 steps -> v7x megacore
    return min(max_tile_b, _round_up(pl.cdiv(batch, n_tiles), 8))


def neural_network_forward(x_nchw, params, max_tile_b=512):
    """x_nchw: (B, 3, 32, 32) float32.  Returns logits (B, 10) float32."""
    w1, b1, w2, b2, w3, b3 = params
    B = x_nchw.shape[0]
    # nn.Flatten(): (B, C, H, W) -> (B, C*H*W), C-major order (matches PyTorch).
    x2d = x_nchw.reshape(B, -1)
    if x2d.dtype != jnp.float32:
        x2d = x2d.astype(jnp.float32)

    # bf16 weights (halved DMA bytes, bf16-native MXU); f32 biases / accumulation.
    w1b = w1.astype(jnp.bfloat16)
    w2b = w2.astype(jnp.bfloat16)
    # Zero-pad the final layer to a lane-dense 128-wide output.
    w3p = jnp.zeros((HID, N_PAD), jnp.bfloat16).at[:, :N_OUT].set(
        w3.astype(jnp.bfloat16))
    b3p = jnp.zeros((1, N_PAD), jnp.float32).at[:, :N_OUT].set(b3)

    TB = _choose_tile_b(B, max_tile_b)
    grid = (pl.cdiv(B, TB),)   # no jnp.pad: last block may be partial (rows independent)

    const = lambda i: (0, 0)   # weights/biases: same block every grid step

    flops = 2 * B * (IN_DIM * HID + HID * HID + HID * N_PAD)
    bytes_accessed = (x2d.size * 4 + w1b.size * 2 + w2b.size * 2 + w3p.size * 2
                      + b1.size * 4 + b2.size * 4 + b3p.size * 4
                      + B * N_PAD * 4)

    out_padded = pl.pallas_call(
        mlp_kernel,
        out_shape=jax.ShapeDtypeStruct((B, N_PAD), jnp.float32),
        grid=grid,
        in_specs=[
            pl.BlockSpec((TB, IN_DIM), lambda i: (i, 0)),   # x tile (pipelined)
            pl.BlockSpec((IN_DIM, HID), const),             # w1 (VMEM-resident)
            pl.BlockSpec((1, HID), const),                  # b1
            pl.BlockSpec((HID, HID), const),                # w2
            pl.BlockSpec((1, HID), const),                  # b2
            pl.BlockSpec((HID, N_PAD), const),              # w3 (padded)
            pl.BlockSpec((1, N_PAD), const),                # b3 (padded)
        ],
        out_specs=pl.BlockSpec((TB, N_PAD), lambda i: (i, 0)),
        compiler_params=pltpu.CompilerParams(
            dimension_semantics=("parallel",),
            # Sized for v7x's 64 MiB physical VMEM; ~26 MiB actually used at TB=512.
            vmem_limit_bytes=48 << 20,
        ),
        cost_estimate=pl.CostEstimate(
            flops=flops, transcendentals=0, bytes_accessed=bytes_accessed),
    )(x2d, w1b, b1, w2b, b2, w3p, b3p)

    return out_padded[:, :N_OUT]


def init_params(key):
    """Deterministic init mimicking nn.Linear default (uniform +-1/sqrt(fan_in))."""
    dims = [(IN_DIM, HID), (HID, HID), (HID, N_OUT)]
    params = []
    for fan_in, fan_out in dims:
        kw, kb, key = jax.random.split(key, 3)
        bound = 1.0 / jnp.sqrt(jnp.float32(fan_in))
        w = jax.random.uniform(kw, (fan_in, fan_out), jnp.float32, -bound, bound)
        b = jax.random.uniform(kb, (1, fan_out), jnp.float32, -bound, bound)
        params.extend([w, b])
    return tuple(params)


def reference_forward_f32(x_nchw, params):
    """Pure-JAX f32 reference (semantics of the PyTorch module)."""
    w1, b1, w2, b2, w3, b3 = params
    x = x_nchw.reshape(x_nchw.shape[0], -1)
    h1 = jnp.maximum(x @ w1 + b1, 0.0)
    h2 = jnp.maximum(h1 @ w2 + b2, 0.0)
    return h2 @ w3 + b3


def reference_forward_bf16(x_nchw, params):
    """Pure-JAX reference using the same bf16 weights / f32 accumulation as the kernel."""
    w1, b1, w2, b2, w3, b3 = params
    x = x_nchw.reshape(x_nchw.shape[0], -1).astype(jnp.bfloat16)
    h1 = jnp.maximum(
        jnp.dot(x, w1.astype(jnp.bfloat16), preferred_element_type=jnp.float32) + b1, 0.0)
    h2 = jnp.maximum(
        jnp.dot(h1.astype(jnp.bfloat16), w2.astype(jnp.bfloat16),
                preferred_element_type=jnp.float32) + b2, 0.0)
    return jnp.dot(h2.astype(jnp.bfloat16), w3.astype(jnp.bfloat16),
                   preferred_element_type=jnp.float32) + b3


if __name__ == "__main__":
    key = jax.random.PRNGKey(0)
    kx, kp = jax.random.split(key)

    # CIFAR-10 shaped input, small batch for the demo.
    x = jax.random.normal(kx, (2, 3, 32, 32), jnp.float32)
    params = init_params(kp)

    logits = neural_network_forward(x, params)
    logits = jax.block_until_ready(logits)
    assert logits.shape == (2, N_OUT)

    # Tight check against a reference using identical bf16 weights / f32 accum.
    ref_bf16 = reference_forward_bf16(x, params)
    assert jnp.allclose(logits, ref_bf16, atol=5e-3, rtol=5e-3)

    # Loose semantics check against the full-f32 PyTorch-equivalent forward.
    ref_f32 = reference_forward_f32(x, params)
    assert jnp.allclose(logits, ref_f32, atol=1e-1, rtol=1e-1)

    print("KERNEL_OK")
</pallas_src>

<mosaic_0001>
module attributes {stable_mosaic.version = 11 : i64} {
  func.func @mlp_kernel(%arg0: i32, %arg1: memref<2x3072xf32, #tpu.memory_space<vmem>>, %arg2: memref<3072x512xbf16, #tpu.memory_space<vmem>>, %arg3: memref<1x512xf32, #tpu.memory_space<vmem>>, %arg4: memref<512x512xbf16, #tpu.memory_space<vmem>>, %arg5: memref<1x512xf32, #tpu.memory_space<vmem>>, %arg6: memref<512x128xbf16, #tpu.memory_space<vmem>>, %arg7: memref<1x128xf32, #tpu.memory_space<vmem>>, %arg8: memref<2x128xf32, #tpu.memory_space<vmem>>) attributes {dimension_semantics = [#tpu.dimension_semantics<parallel>], iteration_bounds = array<i64: 1>, scalar_prefetch = 0 : i64, scratch_operands = 0 : i64, tpu.core_type = #tpu.core_type<tc>, window_params = [{transform_indices = @transform_0, window_bounds = array<i64: 2, 3072>}, {pipeline_mode = #tpu.pipeline_mode<synchronous>, transform_indices = @transform_1, window_bounds = array<i64: 3072, 512>}, {pipeline_mode = #tpu.pipeline_mode<synchronous>, transform_indices = @transform_2, window_bounds = array<i64: 1, 512>}, {pipeline_mode = #tpu.pipeline_mode<synchronous>, transform_indices = @transform_3, window_bounds = array<i64: 512, 512>}, {pipeline_mode = #tpu.pipeline_mode<synchronous>, transform_indices = @transform_4, window_bounds = array<i64: 1, 512>}, {pipeline_mode = #tpu.pipeline_mode<synchronous>, transform_indices = @transform_5, window_bounds = array<i64: 512, 128>}, {pipeline_mode = #tpu.pipeline_mode<synchronous>, transform_indices = @transform_6, window_bounds = array<i64: 1, 128>}, {transform_indices = @transform_7, window_bounds = array<i64: 2, 128>}]} {
    %c0 = arith.constant 0 : index
    %c0_0 = arith.constant 0 : index
    %0 = vector.load %arg1[%c0, %c0_0] : memref<2x3072xf32, #tpu.memory_space<vmem>>, vector<2x3072xf32>
    %1 = arith.truncf %0 : vector<2x3072xf32> to vector<2x3072xbf16>
    %c0_1 = arith.constant 0 : index
    %c0_2 = arith.constant 0 : index
    %2 = vector.load %arg2[%c0_1, %c0_2] : memref<3072x512xbf16, #tpu.memory_space<vmem>>, vector<3072x512xbf16>
    %cst = arith.constant dense<0.000000e+00> : vector<2x512xf32>
    %3 = tpu.matmul %1, %2, %cst {dimension_numbers = #tpu.dot_dimension_numbers<[1], [0], [0], [1], [0, 0, 1, 1], [], []>} : vector<2x3072xbf16>, vector<3072x512xbf16>, vector<2x512xf32> -> vector<2x512xf32>
    %c0_3 = arith.constant 0 : index
    %c0_4 = arith.constant 0 : index
    %4 = vector.load %arg3[%c0_3, %c0_4] : memref<1x512xf32, #tpu.memory_space<vmem>>, vector<1x512xf32>
    %5 = vector.broadcast %4 : vector<1x512xf32> to vector<2x512xf32>
    %6 = arith.addf %3, %5 : vector<2x512xf32>
    %cst_5 = arith.constant 0.000000e+00 : f32
    %7 = vector.broadcast %cst_5 : f32 to vector<2x512xf32>
    %8 = arith.maximumf %6, %7 : vector<2x512xf32>
    %9 = arith.truncf %8 : vector<2x512xf32> to vector<2x512xbf16>
    %c0_6 = arith.constant 0 : index
    %c0_7 = arith.constant 0 : index
    %10 = vector.load %arg4[%c0_6, %c0_7] : memref<512x512xbf16, #tpu.memory_space<vmem>>, vector<512x512xbf16>
    %cst_8 = arith.constant dense<0.000000e+00> : vector<2x512xf32>
    %11 = tpu.matmul %9, %10, %cst_8 {dimension_numbers = #tpu.dot_dimension_numbers<[1], [0], [0], [1], [0, 0, 1, 1], [], []>} : vector<2x512xbf16>, vector<512x512xbf16>, vector<2x512xf32> -> vector<2x512xf32>
    %c0_9 = arith.constant 0 : index
    %c0_10 = arith.constant 0 : index
    %12 = vector.load %arg5[%c0_9, %c0_10] : memref<1x512xf32, #tpu.memory_space<vmem>>, vector<1x512xf32>
    %13 = vector.broadcast %12 : vector<1x512xf32> to vector<2x512xf32>
    %14 = arith.addf %11, %13 : vector<2x512xf32>
    %cst_11 = arith.constant 0.000000e+00 : f32
    %15 = vector.broadcast %cst_11 : f32 to vector<2x512xf32>
    %16 = arith.maximumf %14, %15 : vector<2x512xf32>
    %17 = arith.truncf %16 : vector<2x512xf32> to vector<2x512xbf16>
    %c0_12 = arith.constant 0 : index
    %c0_13 = arith.constant 0 : index
    %18 = vector.load %arg6[%c0_12, %c0_13] : memref<512x128xbf16, #tpu.memory_space<vmem>>, vector<512x128xbf16>
    %cst_14 = arith.constant dense<0.000000e+00> : vector<2x128xf32>
    %19 = tpu.matmul %17, %18, %cst_14 {dimension_numbers = #tpu.dot_dimension_numbers<[1], [0], [0], [1], [0, 0, 1, 1], [], []>} : vector<2x512xbf16>, vector<512x128xbf16>, vector<2x128xf32> -> vector<2x128xf32>
    %c0_15 = arith.constant 0 : index
    %c0_16 = arith.constant 0 : index
    %20 = vector.load %arg7[%c0_15, %c0_16] : memref<1x128xf32, #tpu.memory_space<vmem>>, vector<1x128xf32>
    %21 = vector.broadcast %20 : vector<1x128xf32> to vector<2x128xf32>
    %22 = arith.addf %19, %21 : vector<2x128xf32>
    %c0_17 = arith.constant 0 : index
    %c0_18 = arith.constant 0 : index
    %23 = vector.load %arg8[%c0_17, %c0_18] : memref<2x128xf32, #tpu.memory_space<vmem>>, vector<2x128xf32>
    tpu.vector_store %arg8[%c0_17, %c0_18], %22 {strides = array<i32>} : memref<2x128xf32, #tpu.memory_space<vmem>>, vector<2x128xf32>,
    return
  }
  func.func @transform_0(%arg0: i32) -> (i32, i32) {
    %c0_i32 = arith.constant 0 : i32
    %c0_i32_0 = arith.constant 0 : i32
    return %arg0, %c0_i32 : i32, i32
  }
  func.func @transform_1(%arg0: i32) -> (i32, i32) {
    %c0_i32 = arith.constant 0 : i32
    %c0_i32_0 = arith.constant 0 : i32
    %c0_i32_1 = arith.constant 0 : i32
    return %c0_i32, %c0_i32_0 : i32, i32
  }
  func.func @transform_2(%arg0: i32) -> (i32, i32) {
    %c0_i32 = arith.constant 0 : i32
    %c0_i32_0 = arith.constant 0 : i32
    %c0_i32_1 = arith.constant 0 : i32
    return %c0_i32, %c0_i32_0 : i32, i32
  }
  func.func @transform_3(%arg0: i32) -> (i32, i32) {
    %c0_i32 = arith.constant 0 : i32
    %c0_i32_0 = arith.constant 0 : i32
    %c0_i32_1 = arith.constant 0 : i32
    return %c0_i32, %c0_i32_0 : i32, i32
  }
  func.func @transform_4(%arg0: i32) -> (i32, i32) {
    %c0_i32 = arith.constant 0 : i32
    %c0_i32_0 = arith.constant 0 : i32
    %c0_i32_1 = arith.constant 0 : i32
    return %c0_i32, %c0_i32_0 : i32, i32
  }
  func.func @transform_5(%arg0: i32) -> (i32, i32) {
    %c0_i32 = arith.constant 0 : i32
    %c0_i32_0 = arith.constant 0 : i32
    %c0_i32_1 = arith.constant 0 : i32
    return %c0_i32, %c0_i32_0 : i32, i32
  }
  func.func @transform_6(%arg0: i32) -> (i32, i32) {
    %c0_i32 = arith.constant 0 : i32
    %c0_i32_0 = arith.constant 0 : i32
    %c0_i32_1 = arith.constant 0 : i32
    return %c0_i32, %c0_i32_0 : i32, i32
  }
  func.func @transform_7(%arg0: i32) -> (i32, i32) {
    %c0_i32 = arith.constant 0 : i32
    %c0_i32_0 = arith.constant 0 : i32
    return %arg0, %c0_i32 : i32, i32
  }
}

</mosaic_0001>

<llo_original>
// kernel: tpu_custom_call.1
$region0: #{tpu_custom_call.1}
  #allocation0 [shape = 'u32[]', space=smem, size = 0x4, offset = 0x4, fixed_abs, tag = 'smem constant byte address 0x4 - core index']
  #allocation1 [shape = 'u32[144,128]{1,0:T(1,128)}', space=vmem, size = 0x12000, scoped, tag = 'internal scratch']
  %s0 = inlined_call_operand.hbm [shape: f32[2,3072], index: 0, kind: input, shape index: {}]
  %s1 = inlined_call_operand.hbm [shape: bf16[3072,512], index: 1, kind: input, shape index: {}]
  %s2 = inlined_call_operand.hbm [shape: f32[1,512], index: 2, kind: input, shape index: {}]
  %s3 = inlined_call_operand.hbm [shape: bf16[512,512], index: 3, kind: input, shape index: {}]
  %s4 = inlined_call_operand.hbm [shape: f32[1,512], index: 4, kind: input, shape index: {}]
  %s5 = inlined_call_operand.hbm [shape: bf16[512,128], index: 5, kind: input, shape index: {}]
  %s6 = inlined_call_operand.hbm [shape: f32[1,128], index: 6, kind: input, shape index: {}]
  %s7 = inlined_call_operand.hbm [shape: f32[2,128], index: 7, kind: output, shape index: {}]
  %s8 = sld [smem:[#allocation0]]
  $region66: #{tpu_custom_call.1} parent=0
    _
  %s10 = ssub.s32 1, %s8
  %s11 = scalar_select 0, %s10, %s8
  $region1: #{tpu_custom_call.1} parent=0
    #allocation2 [shape = 'u8[24576]{0}', space=vmem, size = 0x6000, scoped, tag = 'input window, operand 0, single buffered']
    #allocation3 [shape = 's32[1]{0}', space=sflag, size = 0x4, scoped, tag = 'scoped memory for tpu_custom_call.1']
    #allocation4 [shape = 's32[1]{0}', space=sflag, size = 0x4, scoped, tag = 'scoped memory for tpu_custom_call.1']
    #allocation5 [shape = 'u8[3145728]{0}', space=vmem, size = 0x300000, scoped, tag = 'input window, operand 1, single buffered']
    #allocation6 [shape = 's32[1]{0}', space=sflag, size = 0x4, scoped, tag = 'scoped memory for tpu_custom_call.1']
    #allocation7 [shape = 'u8[2048]{0}', space=vmem, size = 0x800, scoped, tag = 'input window, operand 2, single buffered']
    #allocation8 [shape = 'u8[524288]{0}', space=vmem, size = 0x80000, scoped, tag = 'input window, operand 3, single buffered']
    #allocation9 [shape = 's32[1]{0}', space=sflag, size = 0x4, scoped, tag = 'scoped memory for tpu_custom_call.1']
    #allocation10 [shape = 'u8[2048]{0}', space=vmem, size = 0x800, scoped, tag = 'input window, operand 4, single buffered']
    #allocation11 [shape = 'u8[131072]{0}', space=vmem, size = 0x20000, scoped, tag = 'input window, operand 5, single buffered']
    #allocation12 [shape = 's32[1]{0}', space=sflag, size = 0x4, scoped, tag = 'scoped memory for tpu_custom_call.1']
    #allocation13 [shape = 'u8[512]{0}', space=vmem, size = 0x400, scoped, tag = 'input window, operand 6, single buffered']
    #allocation14 [shape = 'u8[1024]{0}', space=vmem, size = 0x400, scoped, tag = 'output window, operand 0, single buffered']
    %12 = vsyncpa [#allocation3], 0
    %13 = vsyncpa [#allocation6], 0
    %14 = vsyncpa [#allocation9], 0
    %15 = vsyncpa [#allocation12], 0
    %16 = vsyncpa [#allocation4], 0
    // Predicated region
    $region2: #{tpu_custom_call.1} parent=1 // pred_check
      _
    $region3: #{tpu_custom_call.1} parent=1 // pred_check_branch
      %18 = sbr.rel (0) target = $region5
    $region4: #{tpu_custom_call.1} parent=1 // pred_region
      %s20 = ssub.s32 768, 768
      %21 = vsyncadd [#allocation3], %s20
      %s23 = sshll.u32 [#allocation2], 4
      %s24 = int_to_ptr.vmem [resolvable:$true] %s23
      %26 = dma.hbm_to_vmem [thread:$0]  %s0, 768, %s24, [#allocation3]
    $region5: #{tpu_custom_call.1} parent=1 // pred_fallthru
      _
    // Predicated region
    $region6: #{tpu_custom_call.1} parent=1 // pred_check
      _
    $region7: #{tpu_custom_call.1} parent=1 // pred_check_branch
      %28 = sbr.rel (0) target = $region9
    $region8: #{tpu_custom_call.1} parent=1 // pred_region
      %s30 = ssub.s32 98304, 98304
      %31 = vsyncadd [#allocation6], %s30
      %s32 = sshll.u32 [#allocation5], 4
      %s33 = int_to_ptr.vmem [resolvable:$true] %s32
      %38 = dma.hbm_to_vmem [thread:$0]  %s1, 98304, %s33, [#allocation6], 256, 256, 16
    $region9: #{tpu_custom_call.1} parent=1 // pred_fallthru
      _
    // Predicated region
    $region10: #{tpu_custom_call.1} parent=1 // pred_check
      _
    $region11: #{tpu_custom_call.1} parent=1 // pred_check_branch
      %40 = sbr.rel (0) target = $region13
    $region12: #{tpu_custom_call.1} parent=1 // pred_region
      %s42 = ssub.s32 64, 64
      %43 = vsyncadd [#allocation6], %s42
      %s45 = sshll.u32 [#allocation7], 4
      %s46 = int_to_ptr.vmem [resolvable:$true] %s45
      %48 = dma.hbm_to_vmem [thread:$0]  %s2, 64, %s46, [#allocation6]
    $region13: #{tpu_custom_call.1} parent=1 // pred_fallthru
      _
    // Predicated region
    $region14: #{tpu_custom_call.1} parent=1 // pred_check
      _
    $region15: #{tpu_custom_call.1} parent=1 // pred_check_branch
      %50 = sbr.rel (0) target = $region17
    $region16: #{tpu_custom_call.1} parent=1 // pred_region
      %s52 = ssub.s32 16384, 16384
      %53 = vsyncadd [#allocation9], %s52
      %s54 = sshll.u32 [#allocation8], 4
      %s55 = int_to_ptr.vmem [resolvable:$true] %s54
      %60 = dma.hbm_to_vmem [thread:$0]  %s3, 16384, %s55, [#allocation9], 256, 256, 16
    $region17: #{tpu_custom_call.1} parent=1 // pred_fallthru
      _
    // Predicated region
    $region18: #{tpu_custom_call.1} parent=1 // pred_check
      _
    $region19: #{tpu_custom_call.1} parent=1 // pred_check_branch
      %62 = sbr.rel (0) target = $region21
    $region20: #{tpu_custom_call.1} parent=1 // pred_region
      %s64 = ssub.s32 64, 64
      %65 = vsyncadd [#allocation9], %s64
      %s67 = sshll.u32 [#allocation10], 4
      %s68 = int_to_ptr.vmem [resolvable:$true] %s67
      %70 = dma.hbm_to_vmem [thread:$0]  %s4, 64, %s68, [#allocation9]
    $region21: #{tpu_custom_call.1} parent=1 // pred_fallthru
      _
    // Predicated region
    $region22: #{tpu_custom_call.1} parent=1 // pred_check
      _
    $region23: #{tpu_custom_call.1} parent=1 // pred_check_branch
      %72 = sbr.rel (0) target = $region25
    $region24: #{tpu_custom_call.1} parent=1 // pred_region
      %s74 = ssub.s32 4096, 4096
      %75 = vsyncadd [#allocation12], %s74
      %s76 = sshll.u32 [#allocation11], 4
      %s77 = int_to_ptr.vmem [resolvable:$true] %s76
      %82 = dma.hbm_to_vmem [thread:$0]  %s5, 4096, %s77, [#allocation12], 64, 64, 4
    $region25: #{tpu_custom_call.1} parent=1 // pred_fallthru
      _
    // Predicated region
    $region26: #{tpu_custom_call.1} parent=1 // pred_check
      _
    $region27: #{tpu_custom_call.1} parent=1 // pred_check_branch
      %84 = sbr.rel (0) target = $region29
    $region28: #{tpu_custom_call.1} parent=1 // pred_region
      %s86 = ssub.s32 16, 16
      %87 = vsyncadd [#allocation12], %s86
      %s89 = sshll.u32 [#allocation13], 4
      %s90 = int_to_ptr.vmem [resolvable:$true] %s89
      %92 = dma.hbm_to_vmem [thread:$0]  %s6, 16, %s90, [#allocation12]
    $region29: #{tpu_custom_call.1} parent=1 // pred_fallthru
      _
    // Predicated region
    $region30: #{tpu_custom_call.1} parent=1 // pred_check
      _
    $region31: #{tpu_custom_call.1} parent=1 // pred_check_branch
      %94 = sbr.rel (0) target = $region33
    $region32: #{tpu_custom_call.1} parent=1 // pred_region
      %95 = dma.done [#allocation3], 768
    $region33: #{tpu_custom_call.1} parent=1 // pred_fallthru
      _
    // Predicated region
    $region34: #{tpu_custom_call.1} parent=1 // pred_check
      _
    $region35: #{tpu_custom_call.1} parent=1 // pred_check_branch
      %97 = sbr.rel (0) target = $region37
    $region36: #{tpu_custom_call.1} parent=1 // pred_region
      %98 = dma.done [#allocation6], 98304
    $region37: #{tpu_custom_call.1} parent=1 // pred_fallthru
      _
    // Predicated region
    $region38: #{tpu_custom_call.1} parent=1 // pred_check
      _
    $region39: #{tpu_custom_call.1} parent=1 // pred_check_branch
      %100 = sbr.rel (0) target = $region41
    $region40: #{tpu_custom_call.1} parent=1 // pred_region
      %101 = dma.done [#allocation6], 64
    $region41: #{tpu_custom_call.1} parent=1 // pred_fallthru
      _
    // Predicated region
    $region42: #{tpu_custom_call.1} parent=1 // pred_check
      _
    $region43: #{tpu_custom_call.1} parent=1 // pred_check_branch
      %103 = sbr.rel (0) target = $region45
    $region44: #{tpu_custom_call.1} parent=1 // pred_region
      %104 = dma.done [#allocation9], 16384
    $region45: #{tpu_custom_call.1} parent=1 // pred_fallthru
      _
    // Predicated region
    $region46: #{tpu_custom_call.1} parent=1 // pred_check
      _
    $region47: #{tpu_custom_call.1} parent=1 // pred_check_branch
      %106 = sbr.rel (0) target = $region49
    $region48: #{tpu_custom_call.1} parent=1 // pred_region
      %107 = dma.done [#allocation9], 64
    $region49: #{tpu_custom_call.1} parent=1 // pred_fallthru
      _
    // Predicated region
    $region50: #{tpu_custom_call.1} parent=1 // pred_check
      _
    $region51: #{tpu_custom_call.1} parent=1 // pred_check_branch
      %109 = sbr.rel (0) target = $region53
    $region52: #{tpu_custom_call.1} parent=1 // pred_region
      %110 = dma.done [#allocation12], 4096
    $region53: #{tpu_custom_call.1} parent=1 // pred_fallthru
      _
    // Predicated region
    $region54: #{tpu_custom_call.1} parent=1 // pred_check
      _
    $region55: #{tpu_custom_call.1} parent=1 // pred_check_branch
      %112 = sbr.rel (0) target = $region57
    $region56: #{tpu_custom_call.1} parent=1 // pred_region
      %113 = dma.done [#allocation12], 16
    $region57: #{tpu_custom_call.1} parent=1 // pred_fallthru
      _
    %v115 = vld [vmem:[#allocation2] sm:$0xff]
    %v116 = vld [vmem:[#allocation2 + $0x8] sm:$0xff]
    %v117 = vld [vmem:[#allocation2 + $0x10] sm:$0xff]
    %v118 = vld [vmem:[#allocation2 + $0x18] sm:$0xff]
    %v119 = vld [vmem:[#allocation2 + $0x20] sm:$0xff]
    %v120 = vld [vmem:[#allocation2 + $0x28] sm:$0xff]
    %v127 = vcombine.high %v115, %v115
    %v129 = vunpack.c.l.s4 1983009808
    %v130 = vunpack.c.0.s8 %v129
    %v131 = vlaneseq
    %v132 = vshrl.u32 %v131, 7
    %v133 = vsub.s32 %v130, %v132
    %v134 = vrot.slane %v115, %v133
    %v136 = vunpack.c.l.s4 1983009808
    %v137 = vunpack.c.0.s8 %v136
    %v138 = vlaneseq
    %v139 = vshrl.u32 %v138, 7
    %v140 = vsub.s32 %v137, %v139
    %v141 = vrot.slane %v127, %v140
    %v142 = vcombine.high %v134, %v134
    %v143 = vcombine.high %v141, %v141
    %v144 = vcombine.high %v116, %v116
    %v146 = vunpack.c.l.s4 1983009808
    %v147 = vunpack.c.0.s8 %v146
    %v148 = vlaneseq
    %v149 = vshrl.u32 %v148, 7
    %v150 = vsub.s32 %v147, %v149
    %v151 = vrot.slane %v116, %v150
    %v153 = vunpack.c.l.s4 1983009808
    %v154 = vunpack.c.0.s8 %v153
    %v155 = vlaneseq
    %v156 = vshrl.u32 %v155, 7
    %v157 = vsub.s32 %v154, %v156
    %v158 = vrot.slane %v144, %v157
    %v159 = vcombine.high %v151, %v151
    %v160 = vcombine.high %v158, %v158
    %v161 = vcombine.high %v117, %v117
    %v163 = vunpack.c.l.s4 1983009808
    %v164 = vunpack.c.0.s8 %v163
    %v165 = vlaneseq
    %v166 = vshrl.u32 %v165, 7
    %v167 = vsub.s32 %v164, %v166
    %v168 = vrot.slane %v117, %v167
    %v170 = vunpack.c.l.s4 1983009808
    %v171 = vunpack.c.0.s8 %v170
    %v172 = vlaneseq
    %v173 = vshrl.u32 %v172, 7
    %v174 = vsub.s32 %v171, %v173
    %v175 = vrot.slane %v161, %v174
    %v176 = vcombine.high %v168, %v168
    %v177 = vcombine.high %v175, %v175
    %v178 = vcombine.high %v118, %v118
    %v180 = vunpack.c.l.s4 1983009808
    %v181 = vunpack.c.0.s8 %v180
    %v182 = vlaneseq
    %v183 = vshrl.u32 %v182, 7
    %v184 = vsub.s32 %v181, %v183
    %v185 = vrot.slane %v118, %v184
    %v187 = vunpack.c.l.s4 1983009808
    %v188 = vunpack.c.0.s8 %v187
    %v189 = vlaneseq
    %v190 = vshrl.u32 %v189, 7
    %v191 = vsub.s32 %v188, %v190
    %v192 = vrot.slane %v178, %v191
    %v193 = vcombine.high %v185, %v185
    %v194 = vcombine.high %v192, %v192
    %v195 = vcombine.high %v119, %v119
    %v197 = vunpack.c.l.s4 1983009808
    %v198 = vunpack.c.0.s8 %v197
    %v199 = vlaneseq
    %v200 = vshrl.u32 %v199, 7
    %v201 = vsub.s32 %v198, %v200
    %v202 = vrot.slane %v119, %v201
    %v204 = vunpack.c.l.s4 1983009808
    %v205 = vunpack.c.0.s8 %v204
    %v206 = vlaneseq
    %v207 = vshrl.u32 %v206, 7
    %v208 = vsub.s32 %v205, %v207
    %v209 = vrot.slane %v195, %v208
    %v210 = vcombine.high %v202, %v202
    %v211 = vcombine.high %v209, %v209
    %v212 = vcombine.high %v120, %v120
    %v214 = vunpack.c.l.s4 1983009808
    %v215 = vunpack.c.0.s8 %v214
    %v216 = vlaneseq
    %v217 = vshrl.u32 %v216, 7
    %v218 = vsub.s32 %v215, %v217
    %v219 = vrot.slane %v120, %v218
    %v221 = vunpack.c.l.s4 1983009808
    %v222 = vunpack.c.0.s8 %v221
    %v223 = vlaneseq
    %v224 = vshrl.u32 %v223, 7
    %v225 = vsub.s32 %v222, %v224
    %v226 = vrot.slane %v212, %v225
    %v227 = vcombine.high %v219, %v219
    %v228 = vcombine.high %v226, %v226
    %v253 = vpack.c.bf16 %v134, %v134
    %v254 = vpack.c.bf16 %v142, %v142
    %v255 = vpack.c.bf16 %v141, %v141
    %v256 = vpack.c.bf16 %v143, %v143
    %v257 = vpack.c.bf16 %v151, %v151
    %v258 = vpack.c.bf16 %v159, %v159
    %v259 = vpack.c.bf16 %v158, %v158
    %v260 = vpack.c.bf16 %v160, %v160
    %v261 = vpack.c.bf16 %v168, %v168
    %v262 = vpack.c.bf16 %v176, %v176
    %v263 = vpack.c.bf16 %v175, %v175
    %v264 = vpack.c.bf16 %v177, %v177
    %v265 = vpack.c.bf16 %v185, %v185
    %v266 = vpack.c.bf16 %v193, %v193
    %v267 = vpack.c.bf16 %v192, %v192
    %v268 = vpack.c.bf16 %v194, %v194
    %v269 = vpack.c.bf16 %v202, %v202
    %v270 = vpack.c.bf16 %v210, %v210
    %v271 = vpack.c.bf16 %v209, %v209
    %v272 = vpack.c.bf16 %v211, %v211
    %v273 = vpack.c.bf16 %v219, %v219
    %v274 = vpack.c.bf16 %v227, %v227
    %v275 = vpack.c.bf16 %v226, %v226
    %v276 = vpack.c.bf16 %v228, %v228
    %v277 = vld [vmem:[#allocation5] sm:$0xff]
    %v278 = vld [vmem:[#allocation5 + $0x8] sm:$0xff]
    %v279 = vld [vmem:[#allocation5 + $0x10] sm:$0xff]
    %v280 = vld [vmem:[#allocation5 + $0x18] sm:$0xff]
    %v281 = vld [vmem:[#allocation5 + $0x20] sm:$0xff]
    %v282 = vld [vmem:[#allocation5 + $0x28] sm:$0xff]
    %v283 = vld [vmem:[#allocation5 + $0x30] sm:$0xff]
    %v284 = vld [vmem:[#allocation5 + $0x38] sm:$0xff]
    %v285 = vld [vmem:[#allocation5 + $0x40] sm:$0xff]
    %v286 = vld [vmem:[#allocation5 + $0x48] sm:$0xff]
    %v287 = vld [vmem:[#allocation5 + $0x50] sm:$0xff]
    %v288 = vld [vmem:[#allocation5 + $0x58] sm:$0xff]
    %v289 = vld [vmem:[#allocation5 + $0x60] sm:$0xff]
    %v290 = vld [vmem:[#allocation5 + $0x68] sm:$0xff]
    %v291 = vld [vmem:[#allocation5 + $0x70] sm:$0xff]
    %v292 = vld [vmem:[#allocation5 + $0x78] sm:$0xff]
    %v293 = vld [vmem:[#allocation5 + $0x80] sm:$0xff]
    %v294 = vld [vmem:[#allocation5 + $0x88] sm:$0xff]
    %v295 = vld [vmem:[#allocation5 + $0x90] sm:$0xff]
    %v296 = vld [vmem:[#allocation5 + $0x98] sm:$0xff]
    %v297 = vld [vmem:[#allocation5 + $0xa0] sm:$0xff]
    %v298 = vld [vmem:[#allocation5 + $0xa8] sm:$0xff]
    %v299 = vld [vmem:[#allocation5 + $0xb0] sm:$0xff]
    %v300 = vld [vmem:[#allocation5 + $0xb8] sm:$0xff]
    %v301 = vld [vmem:[#allocation5 + $0xc0] sm:$0xff]
    %v302 = vld [vmem:[#allocation5 + $0xc8] sm:$0xff]
    %v303 = vld [vmem:[#allocation5 + $0xd0] sm:$0xff]
    %v304 = vld [vmem:[#allocation5 + $0xd8] sm:$0xff]
    %v305 = vld [vmem:[#allocation5 + $0xe0] sm:$0xff]
    %v306 = vld [vmem:[#allocation5 + $0xe8] sm:$0xff]
    %v307 = vld [vmem:[#allocation5 + $0xf0] sm:$0xff]
    %v308 = vld [vmem:[#allocation5 + $0xf8] sm:$0xff]
    %v309 = vld [vmem:[#allocation5 + $0x100] sm:$0xff]
    %v310 = vld [vmem:[#allocation5 + $0x108] sm:$0xff]
    %v311 = vld [vmem:[#allocation5 + $0x110] sm:$0xff]
    %v312 = vld [vmem:[#allocation5 + $0x118] sm:$0xff]
    %v313 = vld [vmem:[#allocation5 + $0x120] sm:$0xff]
    %v314 = vld [vmem:[#allocation5 + $0x128] sm:$0xff]
    %v315 = vld [vmem:[#allocation5 + $0x130] sm:$0xff]
    %v316 = vld [vmem:[#allocation5 + $0x138] sm:$0xff]
    %v317 = vld [vmem:[#allocation5 + $0x140] sm:$0xff]
    %v318 = vld [vmem:[#allocation5 + $0x148] sm:$0xff]
    %v319 = vld [vmem:[#allocation5 + $0x150] sm:$0xff]
    %v320 = vld [vmem:[#allocation5 + $0x158] sm:$0xff]
    %v321 = vld [vmem:[#allocation5 + $0x160] sm:$0xff]
    %v322 = vld [vmem:[#allocation5 + $0x168] sm:$0xff]
    %v323 = vld [vmem:[#allocation5 + $0x170] sm:$0xff]
    %v324 = vld [vmem:[#allocation5 + $0x178] sm:$0xff]
    %v325 = vld [vmem:[#allocation5 + $0x180] sm:$0xff]
    %v326 = vld [vmem:[#allocation5 + $0x188] sm:$0xff]
    %v327 = vld [vmem:[#allocation5 + $0x190] sm:$0xff]
    %v328 = vld [vmem:[#allocation5 + $0x198] sm:$0xff]
    %v329 = vld [vmem:[#allocation5 + $0x1a0] sm:$0xff]
    %v330 = vld [vmem:[#allocation5 + $0x1a8] sm:$0xff]
    %v331 = vld [vmem:[#allocation5 + $0x1b0] sm:$0xff]
    %v332 = vld [vmem:[#allocation5 + $0x1b8] sm:$0xff]
    %v333 = vld [vmem:[#allocation5 + $0x1c0] sm:$0xff]
    %v334 = vld [vmem:[#allocation5 + $0x1c8] sm:$0xff]
    %v335 = vld [vmem:[#allocation5 + $0x1d0] sm:$0xff]
    %v336 = vld [vmem:[#allocation5 + $0x1d8] sm:$0xff]
    %v337 = vld [vmem:[#allocation5 + $0x1e0] sm:$0xff]
    %v338 = vld [vmem:[#allocation5 + $0x1e8] sm:$0xff]
    %v339 = vld [vmem:[#allocation5 + $0x1f0] sm:$0xff]
    %v340 = vld [vmem:[#allocation5 + $0x1f8] sm:$0xff]
    %v341 = vld [vmem:[#allocation5 + $0x200] sm:$0xff]
    %v342 = vld [vmem:[#allocation5 + $0x208] sm:$0xff]
    %v343 = vld [vmem:[#allocation5 + $0x210] sm:$0xff]
    %v344 = vld [vmem:[#allocation5 + $0x218] sm:$0xff]
    %v345 = vld [vmem:[#allocation5 + $0x220] sm:$0xff]
    %v346 = vld [vmem:[#allocation5 + $0x228] sm:$0xff]
    %v347 = vld [vmem:[#allocation5 + $0x230] sm:$0xff]
    %v348 = vld [vmem:[#allocation5 + $0x238] sm:$0xff]
    %v349 = vld [vmem:[#allocation5 + $0x240] sm:$0xff]
    %v350 = vld [vmem:[#allocation5 + $0x248] sm:$0xff]
    %v351 = vld [vmem:[#allocation5 + $0x250] sm:$0xff]
    %v352 = vld [vmem:[#allocation5 + $0x258] sm:$0xff]
    %v353 = vld [vmem:[#allocation5 + $0x260] sm:$0xff]
    %v354 = vld [vmem:[#allocation5 + $0x268] sm:$0xff]
    %v355 = vld [vmem:[#allocation5 + $0x270] sm:$0xff]
    %v356 = vld [vmem:[#allocation5 + $0x278] sm:$0xff]
    %v357 = vld [vmem:[#allocation5 + $0x280] sm:$0xff]
    %v358 = vld [vmem:[#allocation5 + $0x288] sm:$0xff]
    %v359 = vld [vmem:[#allocation5 + $0x290] sm:$0xff]
    %v360 = vld [vmem:[#allocation5 + $0x298] sm:$0xff]
    %v361 = vld [vmem:[#allocation5 + $0x2a0] sm:$0xff]
    %v362 = vld [vmem:[#allocation5 + $0x2a8] sm:$0xff]
    %v363 = vld [vmem:[#allocation5 + $0x2b0] sm:$0xff]
    %v364 = vld [vmem:[#allocation5 + $0x2b8] sm:$0xff]
    %v365 = vld [vmem:[#allocation5 + $0x2c0] sm:$0xff]
    %v366 = vld [vmem:[#allocation5 + $0x2c8] sm:$0xff]
    %v367 = vld [vmem:[#allocation5 + $0x2d0] sm:$0xff]
    %v368 = vld [vmem:[#allocation5 + $0x2d8] sm:$0xff]
    %v369 = vld [vmem:[#allocation5 + $0x2e0] sm:$0xff]
    %v370 = vld [vmem:[#allocation5 + $0x2e8] sm:$0xff]
    %v371 = vld [vmem:[#allocation5 + $0x2f0] sm:$0xff]
    %v372 = vld [vmem:[#allocation5 + $0x2f8] sm:$0xff]
    %v373 = vld [vmem:[#allocation5 + $0x300] sm:$0xff]
    %v374 = vld [vmem:[#allocation5 + $0x308] sm:$0xff]
    %v375 = vld [vmem:[#allocation5 + $0x310] sm:$0xff]
    %v376 = vld [vmem:[#allocation5 + $0x318] sm:$0xff]
    %v377 = vld [vmem:[#allocation5 + $0x320] sm:$0xff]
    %v378 = vld [vmem:[#allocation5 + $0x328] sm:$0xff]
    %v379 = vld [vmem:[#allocation5 + $0x330] sm:$0xff]
    %v380 = vld [vmem:[#allocation5 + $0x338] sm:$0xff]
    %v381 = vld [vmem:[#allocation5 + $0x340] sm:$0xff]
    %v382 = vld [vmem:[#allocation5 + $0x348] sm:$0xff]
    %v383 = vld [vmem:[#allocation5 + $0x350] sm:$0xff]
    %v384 = vld [vmem:[#allocation5 + $0x358] sm:$0xff]
    %v385 = vld [vmem:[#allocation5 + $0x360] sm:$0xff]
    %v386 = vld [vmem:[#allocation5 + $0x368] sm:$0xff]
    %v387 = vld [vmem:[#allocation5 + $0x370] sm:$0xff]
    %v388 = vld [vmem:[#allocation5 + $0x378] sm:$0xff]
    %v389 = vld [vmem:[#allocation5 + $0x380] sm:$0xff]
    %v390 = vld [vmem:[#allocation5 + $0x388] sm:$0xff]
    %v391 = vld [vmem:[#allocation5 + $0x390] sm:$0xff]
    %v392 = vld [vmem:[#allocation5 + $0x398] sm:$0xff]
    %v393 = vld [vmem:[#allocation5 + $0x3a0] sm:$0xff]
    %v394 = vld [vmem:[#allocation5 + $0x3a8] sm:$0xff]
    %v395 = vld [vmem:[#allocation5 + $0x3b0] sm:$0xff]
    %v396 = vld [vmem:[#allocation5 + $0x3b8] sm:$0xff]
    %v397 = vld [vmem:[#allocation5 + $0x3c0] sm:$0xff]
    %v398 = vld [vmem:[#allocation5 + $0x3c8] sm:$0xff]
    %v399 = vld [vmem:[#allocation5 + $0x3d0] sm:$0xff]
    %v400 = vld [vmem:[#allocation5 + $0x3d8] sm:$0xff]
    %v401 = vld [vmem:[#allocation5 + $0x3e0] sm:$0xff]
    %v402 = vld [vmem:[#allocation5 + $0x3e8] sm:$0xff]
    %v403 = vld [vmem:[#allocation5 + $0x3f0] sm:$0xff]
    %v404 = vld [vmem:[#allocation5 + $0x3f8] sm:$0xff]
    %v405 = vld [vmem:[#allocation5 + $0x400] sm:$0xff]
    %v406 = vld [vmem:[#allocation5 + $0x408] sm:$0xff]
    %v407 = vld [vmem:[#allocation5 + $0x410] sm:$0xff]
    %v408 = vld [vmem:[#allocation5 + $0x418] sm:$0xff]
    %v409 = vld [vmem:[#allocation5 + $0x420] sm:$0xff]
    %v410 = vld [vmem:[#allocation5 + $0x428] sm:$0xff]
    %v411 = vld [vmem:[#allocation5 + $0x430] sm:$0xff]
    %v412 = vld [vmem:[#allocation5 + $0x438] sm:$0xff]
    %v413 = vld [vmem:[#allocation5 + $0x440] sm:$0xff]
    %v414 = vld [vmem:[#allocation5 + $0x448] sm:$0xff]
    %v415 = vld [vmem:[#allocation5 + $0x450] sm:$0xff]
    %v416 = vld [vmem:[#allocation5 + $0x458] sm:$0xff]
    %v417 = vld [vmem:[#allocation5 + $0x460] sm:$0xff]
    %v418 = vld [vmem:[#allocation5 + $0x468] sm:$0xff]
    %v419 = vld [vmem:[#allocation5 + $0x470] sm:$0xff]
    %v420 = vld [vmem:[#allocation5 + $0x478] sm:$0xff]
    %v421 = vld [vmem:[#allocation5 + $0x480] sm:$0xff]
    %v422 = vld [vmem:[#allocation5 + $0x488] sm:$0xff]
    %v423 = vld [vmem:[#allocation5 + $0x490] sm:$0xff]
    %v424 = vld [vmem:[#allocation5 + $0x498] sm:$0xff]
    %v425 = vld [vmem:[#allocation5 + $0x4a0] sm:$0xff]
    %v426 = vld [vmem:[#allocation5 + $0x4a8] sm:$0xff]
    %v427 = vld [vmem:[#allocation5 + $0x4b0] sm:$0xff]
    %v428 = vld [vmem:[#allocation5 + $0x4b8] sm:$0xff]
    %v429 = vld [vmem:[#allocation5 + $0x4c0] sm:$0xff]
    %v430 = vld [vmem:[#allocation5 + $0x4c8] sm:$0xff]
    %v431 = vld [vmem:[#allocation5 + $0x4d0] sm:$0xff]
    %v432 = vld [vmem:[#allocation5 + $0x4d8] sm:$0xff]
    %v433 = vld [vmem:[#allocation5 + $0x4e0] sm:$0xff]
    %v434 = vld [vmem:[#allocation5 + $0x4e8] sm:$0xff]
    %v435 = vld [vmem:[#allocation5 + $0x4f0] sm:$0xff]
    %v436 = vld [vmem:[#allocation5 + $0x4f8] sm:$0xff]
    %v437 = vld [vmem:[#allocation5 + $0x500] sm:$0xff]
    %v438 = vld [vmem:[#allocation5 + $0x508] sm:$0xff]
    %v439 = vld [vmem:[#allocation5 + $0x510] sm:$0xff]
    %v440 = vld [vmem:[#allocation5 + $0x518] sm:$0xff]
    %v441 = vld [vmem:[#allocation5 + $0x520] sm:$0xff]
    %v442 = vld [vmem:[#allocation5 + $0x528] sm:$0xff]
    %v443 = vld [vmem:[#allocation5 + $0x530] sm:$0xff]
    %v444 = vld [vmem:[#allocation5 + $0x538] sm:$0xff]
    %v445 = vld [vmem:[#allocation5 + $0x540] sm:$0xff]
    %v446 = vld [vmem:[#allocation5 + $0x548] sm:$0xff]
    %v447 = vld [vmem:[#allocation5 + $0x550] sm:$0xff]
    %v448 = vld [vmem:[#allocation5 + $0x558] sm:$0xff]
    %v449 = vld [vmem:[#allocation5 + $0x560] sm:$0xff]
    %v450 = vld [vmem:[#allocation5 + $0x568] sm:$0xff]
    %v451 = vld [vmem:[#allocation5 + $0x570] sm:$0xff]
    %v452 = vld [vmem:[#allocation5 + $0x578] sm:$0xff]
    %v453 = vld [vmem:[#allocation5 + $0x580] sm:$0xff]
    %v454 = vld [vmem:[#allocation5 + $0x588] sm:$0xff]
    %v455 = vld [vmem:[#allocation5 + $0x590] sm:$0xff]
    %v456 = vld [vmem:[#allocation5 + $0x598] sm:$0xff]
    %v457 = vld [vmem:[#allocation5 + $0x5a0] sm:$0xff]
    %v458 = vld [vmem:[#allocation5 + $0x5a8] sm:$0xff]
    %v459 = vld [vmem:[#allocation5 + $0x5b0] sm:$0xff]
    %v460 = vld [vmem:[#allocation5 + $0x5b8] sm:$0xff]
    %v461 = vld [vmem:[#allocation5 + $0x5c0] sm:$0xff]
    %v462 = vld [vmem:[#allocation5 + $0x5c8] sm:$0xff]
    %v463 = vld [vmem:[#allocation5 + $0x5d0] sm:$0xff]
    %v464 = vld [vmem:[#allocation5 + $0x5d8] sm:$0xff]
    %v465 = vld [vmem:[#allocation5 + $0x5e0] sm:$0xff]
    %v466 = vld [vmem:[#allocation5 + $0x5e8] sm:$0xff]
    %v467 = vld [vmem:[#allocation5 + $0x5f0] sm:$0xff]
    %v468 = vld [vmem:[#allocation5 + $0x5f8] sm:$0xff]
    %v469 = vld [vmem:[#allocation5 + $0x600] sm:$0xff]
    %v470 = vld [vmem:[#allocation5 + $0x608] sm:$0xff]
    %v471 = vld [vmem:[#allocation5 + $0x610] sm:$0xff]
    %v472 = vld [vmem:[#allocation5 + $0x618] sm:$0xff]
    %v473 = vld [vmem:[#allocation5 + $0x620] sm:$0xff]
    %v474 = vld [vmem:[#allocation5 + $0x628] sm:$0xff]
    %v475 = vld [vmem:[#allocation5 + $0x630] sm:$0xff]
    %v476 = vld [vmem:[#allocation5 + $0x638] sm:$0xff]
    %v477 = vld [vmem:[#allocation5 + $0x640] sm:$0xff]
    %v478 = vld [vmem:[#allocation5 + $0x648] sm:$0xff]
    %v479 = vld [vmem:[#allocation5 + $0x650] sm:$0xff]
    %v480 = vld [vmem:[#allocation5 + $0x658] sm:$0xff]
    %v481 = vld [vmem:[#allocation5 + $0x660] sm:$0xff]
    %v482 = vld [vmem:[#allocation5 + $0x668] sm:$0xff]
    %v483 = vld [vmem:[#allocation5 + $0x670] sm:$0xff]
    %v484 = vld [vmem:[#allocation5 + $0x678] sm:$0xff]
    %v485 = vld [vmem:[#allocation5 + $0x680] sm:$0xff]
    %v486 = vld [vmem:[#allocation5 + $0x688] sm:$0xff]
    %v487 = vld [vmem:[#allocation5 + $0x690] sm:$0xff]
    %v488 = vld [vmem:[#allocation5 + $0x698] sm:$0xff]
    %v489 = vld [vmem:[#allocation5 + $0x6a0] sm:$0xff]
    %v490 = vld [vmem:[#allocation5 + $0x6a8] sm:$0xff]
    %v491 = vld [vmem:[#allocation5 + $0x6b0] sm:$0xff]
    %v492 = vld [vmem:[#allocation5 + $0x6b8] sm:$0xff]
    %v493 = vld [vmem:[#allocation5 + $0x6c0] sm:$0xff]
    %v494 = vld [vmem:[#allocation5 + $0x6c8] sm:$0xff]
    %v495 = vld [vmem:[#allocation5 + $0x6d0] sm:$0xff]
    %v496 = vld [vmem:[#allocation5 + $0x6d8] sm:$0xff]
    %v497 = vld [vmem:[#allocation5 + $0x6e0] sm:$0xff]
    %v498 = vld [vmem:[#allocation5 + $0x6e8] sm:$0xff]
    %v499 = vld [vmem:[#allocation5 + $0x6f0] sm:$0xff]
    %v500 = vld [vmem:[#allocation5 + $0x6f8] sm:$0xff]
    %v501 = vld [vmem:[#allocation5 + $0x700] sm:$0xff]
    %v502 = vld [vmem:[#allocation5 + $0x708] sm:$0xff]
    %v503 = vld [vmem:[#allocation5 + $0x710] sm:$0xff]
    %v504 = vld [vmem:[#allocation5 + $0x718] sm:$0xff]
    %v505 = vld [vmem:[#allocation5 + $0x720] sm:$0xff]
    %v506 = vld [vmem:[#allocation5 + $0x728] sm:$0xff]
    %v507 = vld [vmem:[#allocation5 + $0x730] sm:$0xff]
    %v508 = vld [vmem:[#allocation5 + $0x738] sm:$0xff]
    %v509 = vld [vmem:[#allocation5 + $0x740] sm:$0xff]
    %v510 = vld [vmem:[#allocation5 + $0x748] sm:$0xff]
    %v511 = vld [vmem:[#allocation5 + $0x750] sm:$0xff]
    %v512 = vld [vmem:[#allocation5 + $0x758] sm:$0xff]
    %v513 = vld [vmem:[#allocation5 + $0x760] sm:$0xff]
    %v514 = vld [vmem:[#allocation5 + $0x768] sm:$0xff]
    %v515 = vld [vmem:[#allocation5 + $0x770] sm:$0xff]
    %v516 = vld [vmem:[#allocation5 + $0x778] sm:$0xff]
    %v517 = vld [vmem:[#allocation5 + $0x780] sm:$0xff]
    %v518 = vld [vmem:[#allocation5 + $0x788] sm:$0xff]
    %v519 = vld [vmem:[#allocation5 + $0x790] sm:$0xff]
    %v520 = vld [vmem:[#allocation5 + $0x798] sm:$0xff]
    %v521 = vld [vmem:[#allocation5 + $0x7a0] sm:$0xff]
    %v522 = vld [vmem:[#allocation5 + $0x7a8] sm:$0xff]
    %v523 = vld [vmem:[#allocation5 + $0x7b0] sm:$0xff]
    %v524 = vld [vmem:[#allocation5 + $0x7b8] sm:$0xff]
    %v525 = vld [vmem:[#allocation5 + $0x7c0] sm:$0xff]
    %v526 = vld [vmem:[#allocation5 + $0x7c8] sm:$0xff]
    %v527 = vld [vmem:[#allocation5 + $0x7d0] sm:$0xff]
    %v528 = vld [vmem:[#allocation5 + $0x7d8] sm:$0xff]
    %v529 = vld [vmem:[#allocation5 + $0x7e0] sm:$0xff]
    %v530 = vld [vmem:[#allocation5 + $0x7e8] sm:$0xff]
    %v531 = vld [vmem:[#allocation5 + $0x7f0] sm:$0xff]
    %v532 = vld [vmem:[#allocation5 + $0x7f8] sm:$0xff]
    %v533 = vld [vmem:[#allocation5 + $0x800] sm:$0xff]
    %v534 = vld [vmem:[#allocation5 + $0x808] sm:$0xff]
    %v535 = vld [vmem:[#allocation5 + $0x810] sm:$0xff]
    %v536 = vld [vmem:[#allocation5 + $0x818] sm:$0xff]
    %v537 = vld [vmem:[#allocation5 + $0x820] sm:$0xff]
    %v538 = vld [vmem:[#allocation5 + $0x828] sm:$0xff]
    %v539 = vld [vmem:[#allocation5 + $0x830] sm:$0xff]
    %v540 = vld [vmem:[#allocation5 + $0x838] sm:$0xff]
    %v541 = vld [vmem:[#allocation5 + $0x840] sm:$0xff]
    %v542 = vld [vmem:[#allocation5 + $0x848] sm:$0xff]
    %v543 = vld [vmem:[#allocation5 + $0x850] sm:$0xff]
    %v544 = vld [vmem:[#allocation5 + $0x858] sm:$0xff]
    %v545 = vld [vmem:[#allocation5 + $0x860] sm:$0xff]
    %v546 = vld [vmem:[#allocation5 + $0x868] sm:$0xff]
    %v547 = vld [vmem:[#allocation5 + $0x870] sm:$0xff]
    %v548 = vld [vmem:[#allocation5 + $0x878] sm:$0xff]
    %v549 = vld [vmem:[#allocation5 + $0x880] sm:$0xff]
    %v550 = vld [vmem:[#allocation5 + $0x888] sm:$0xff]
    %v551 = vld [vmem:[#allocation5 + $0x890] sm:$0xff]
    %v552 = vld [vmem:[#allocation5 + $0x898] sm:$0xff]
    %v553 = vld [vmem:[#allocation5 + $0x8a0] sm:$0xff]
    %v554 = vld [vmem:[#allocation5 + $0x8a8] sm:$0xff]
    %v555 = vld [vmem:[#allocation5 + $0x8b0] sm:$0xff]
    %v556 = vld [vmem:[#allocation5 + $0x8b8] sm:$0xff]
    %v557 = vld [vmem:[#allocation5 + $0x8c0] sm:$0xff]
    %v558 = vld [vmem:[#allocation5 + $0x8c8] sm:$0xff]
    %v559 = vld [vmem:[#allocation5 + $0x8d0] sm:$0xff]
    %v560 = vld [vmem:[#allocation5 + $0x8d8] sm:$0xff]
    %v561 = vld [vmem:[#allocation5 + $0x8e0] sm:$0xff]
    %v562 = vld [vmem:[#allocation5 + $0x8e8] sm:$0xff]
    %v563 = vld [vmem:[#allocation5 + $0x8f0] sm:$0xff]
    %v564 = vld [vmem:[#allocation5 + $0x8f8] sm:$0xff]
    %v565 = vld [vmem:[#allocation5 + $0x900] sm:$0xff]
    %v566 = vld [vmem:[#allocation5 + $0x908] sm:$0xff]
    %v567 = vld [vmem:[#allocation5 + $0x910] sm:$0xff]
    %v568 = vld [vmem:[#allocation5 + $0x918] sm:$0xff]
    %v569 = vld [vmem:[#allocation5 + $0x920] sm:$0xff]
    %v570 = vld [vmem:[#allocation5 + $0x928] sm:$0xff]
    %v571 = vld [vmem:[#allocation5 + $0x930] sm:$0xff]
    %v572 = vld [vmem:[#allocation5 + $0x938] sm:$0xff]
    %v573 = vld [vmem:[#allocation5 + $0x940] sm:$0xff]
    %v574 = vld [vmem:[#allocation5 + $0x948] sm:$0xff]
    %v575 = vld [vmem:[#allocation5 + $0x950] sm:$0xff]
    %v576 = vld [vmem:[#allocation5 + $0x958] sm:$0xff]
    %v577 = vld [vmem:[#allocation5 + $0x960] sm:$0xff]
    %v578 = vld [vmem:[#allocation5 + $0x968] sm:$0xff]
    %v579 = vld [vmem:[#allocation5 + $0x970] sm:$0xff]
    %v580 = vld [vmem:[#allocation5 + $0x978] sm:$0xff]
    %v581 = vld [vmem:[#allocation5 + $0x980] sm:$0xff]
    %v582 = vld [vmem:[#allocation5 + $0x988] sm:$0xff]
    %v583 = vld [vmem:[#allocation5 + $0x990] sm:$0xff]
    %v584 = vld [vmem:[#allocation5 + $0x998] sm:$0xff]
    %v585 = vld [vmem:[#allocation5 + $0x9a0] sm:$0xff]
    %v586 = vld [vmem:[#allocation5 + $0x9a8] sm:$0xff]
    %v587 = vld [vmem:[#allocation5 + $0x9b0] sm:$0xff]
    %v588 = vld [vmem:[#allocation5 + $0x9b8] sm:$0xff]
    %v589 = vld [vmem:[#allocation5 + $0x9c0] sm:$0xff]
    %v590 = vld [vmem:[#allocation5 + $0x9c8] sm:$0xff]
    %v591 = vld [vmem:[#allocation5 + $0x9d0] sm:$0xff]
    %v592 = vld [vmem:[#allocation5 + $0x9d8] sm:$0xff]
    %v593 = vld [vmem:[#allocation5 + $0x9e0] sm:$0xff]
    %v594 = vld [vmem:[#allocation5 + $0x9e8] sm:$0xff]
    %v595 = vld [vmem:[#allocation5 + $0x9f0] sm:$0xff]
    %v596 = vld [vmem:[#allocation5 + $0x9f8] sm:$0xff]
    %v597 = vld [vmem:[#allocation5 + $0xa00] sm:$0xff]
    %v598 = vld [vmem:[#allocation5 + $0xa08] sm:$0xff]
    %v599 = vld [vmem:[#allocation5 + $0xa10] sm:$0xff]
    %v600 = vld [vmem:[#allocation5 + $0xa18] sm:$0xff]
    %v601 = vld [vmem:[#allocation5 + $0xa20] sm:$0xff]
    %v602 = vld [vmem:[#allocation5 + $0xa28] sm:$0xff]
    %v603 = vld [vmem:[#allocation5 + $0xa30] sm:$0xff]
    %v604 = vld [vmem:[#allocation5 + $0xa38] sm:$0xff]
    %v605 = vld [vmem:[#allocation5 + $0xa40] sm:$0xff]
    %v606 = vld [vmem:[#allocation5 + $0xa48] sm:$0xff]
    %v607 = vld [vmem:[#allocation5 + $0xa50] sm:$0xff]
    %v608 = vld [vmem:[#allocation5 + $0xa58] sm:$0xff]
    %v609 = vld [vmem:[#allocation5 + $0xa60] sm:$0xff]
    %v610 = vld [vmem:[#allocation5 + $0xa68] sm:$0xff]
    %v611 = vld [vmem:[#allocation5 + $0xa70] sm:$0xff]
    %v612 = vld [vmem:[#allocation5 + $0xa78] sm:$0xff]
    %v613 = vld [vmem:[#allocation5 + $0xa80] sm:$0xff]
    %v614 = vld [vmem:[#allocation5 + $0xa88] sm:$0xff]
    %v615 = vld [vmem:[#allocation5 + $0xa90] sm:$0xff]
    %v616 = vld [vmem:[#allocation5 + $0xa98] sm:$0xff]
    %v617 = vld [vmem:[#allocation5 + $0xaa0] sm:$0xff]
    %v618 = vld [vmem:[#allocation5 + $0xaa8] sm:$0xff]
    %v619 = vld [vmem:[#allocation5 + $0xab0] sm:$0xff]
    %v620 = vld [vmem:[#allocation5 + $0xab8] sm:$0xff]
    %v621 = vld [vmem:[#allocation5 + $0xac0] sm:$0xff]
    %v622 = vld [vmem:[#allocation5 + $0xac8] sm:$0xff]
    %v623 = vld [vmem:[#allocation5 + $0xad0] sm:$0xff]
    %v624 = vld [vmem:[#allocation5 + $0xad8] sm:$0xff]
    %v625 = vld [vmem:[#allocation5 + $0xae0] sm:$0xff]
    %v626 = vld [vmem:[#allocation5 + $0xae8] sm:$0xff]
    %v627 = vld [vmem:[#allocation5 + $0xaf0] sm:$0xff]
    %v628 = vld [vmem:[#allocation5 + $0xaf8] sm:$0xff]
    %v629 = vld [vmem:[#allocation5 + $0xb00] sm:$0xff]
    %v630 = vld [vmem:[#allocation5 + $0xb08] sm:$0xff]
    %v631 = vld [vmem:[#allocation5 + $0xb10] sm:$0xff]
    %v632 = vld [vmem:[#allocation5 + $0xb18] sm:$0xff]
    %v633 = vld [vmem:[#allocation5 + $0xb20] sm:$0xff]
    %v634 = vld [vmem:[#allocation5 + $0xb28] sm:$0xff]
    %v635 = vld [vmem:[#allocation5 + $0xb30] sm:$0xff]
    %v636 = vld [vmem:[#allocation5 + $0xb38] sm:$0xff]
    %v637 = vld [vmem:[#allocation5 + $0xb40] sm:$0xff]
    %v638 = vld [vmem:[#allocation5 + $0xb48] sm:$0xff]
    %v639 = vld [vmem:[#allocation5 + $0xb50] sm:$0xff]
    %v640 = vld [vmem:[#allocation5 + $0xb58] sm:$0xff]
    %v641 = vld [vmem:[#allocation5 + $0xb60] sm:$0xff]
    %v642 = vld [vmem:[#allocation5 + $0xb68] sm:$0xff]
    %v643 = vld [vmem:[#allocation5 + $0xb70] sm:$0xff]
    %v644 = vld [vmem:[#allocation5 + $0xb78] sm:$0xff]
    %v645 = vld [vmem:[#allocation5 + $0xb80] sm:$0xff]
    %v646 = vld [vmem:[#allocation5 + $0xb88] sm:$0xff]
    %v647 = vld [vmem:[#allocation5 + $0xb90] sm:$0xff]
    %v648 = vld [vmem:[#allocation5 + $0xb98] sm:$0xff]
    %v649 = vld [vmem:[#allocation5 + $0xba0] sm:$0xff]
    %v650 = vld [vmem:[#allocation5 + $0xba8] sm:$0xff]
    %v651 = vld [vmem:[#allocation5 + $0xbb0] sm:$0xff]
    %v652 = vld [vmem:[#allocation5 + $0xbb8] sm:$0xff]
    %v653 = vld [vmem:[#allocation5 + $0xbc0] sm:$0xff]
    %v654 = vld [vmem:[#allocation5 + $0xbc8] sm:$0xff]
    %v655 = vld [vmem:[#allocation5 + $0xbd0] sm:$0xff]
    %v656 = vld [vmem:[#allocation5 + $0xbd8] sm:$0xff]
    %v657 = vld [vmem:[#allocation5 + $0xbe0] sm:$0xff]
    %v658 = vld [vmem:[#allocation5 + $0xbe8] sm:$0xff]
    %v659 = vld [vmem:[#allocation5 + $0xbf0] sm:$0xff]
    %v660 = vld [vmem:[#allocation5 + $0xbf8] sm:$0xff]
    %v661 = vld [vmem:[#allocation5 + $0xc00] sm:$0xff]
    %v662 = vld [vmem:[#allocation5 + $0xc08] sm:$0xff]
    %v663 = vld [vmem:[#allocation5 + $0xc10] sm:$0xff]
    %v664 = vld [vmem:[#allocation5 + $0xc18] sm:$0xff]
    %v665 = vld [vmem:[#allocation5 + $0xc20] sm:$0xff]
    %v666 = vld [vmem:[#allocation5 + $0xc28] sm:$0xff]
    %v667 = vld [vmem:[#allocation5 + $0xc30] sm:$0xff]
    %v668 = vld [vmem:[#allocation5 + $0xc38] sm:$0xff]
    %v669 = vld [vmem:[#allocation5 + $0xc40] sm:$0xff]
    %v670 = vld [vmem:[#allocation5 + $0xc48] sm:$0xff]
    %v671 = vld [vmem:[#allocation5 + $0xc50] sm:$0xff]
    %v672 = vld [vmem:[#allocation5 + $0xc58] sm:$0xff]
    %v673 = vld [vmem:[#allocation5 + $0xc60] sm:$0xff]
    %v674 = vld [vmem:[#allocation5 + $0xc68] sm:$0xff]
    %v675 = vld [vmem:[#allocation5 + $0xc70] sm:$0xff]
    %v676 = vld [vmem:[#allocation5 + $0xc78] sm:$0xff]
    %v677 = vld [vmem:[#allocation5 + $0xc80] sm:$0xff]
    %v678 = vld [vmem:[#allocation5 + $0xc88] sm:$0xff]
    %v679 = vld [vmem:[#allocation5 + $0xc90] sm:$0xff]
    %v680 = vld [vmem:[#allocation5 + $0xc98] sm:$0xff]
    %v681 = vld [vmem:[#allocation5 + $0xca0] sm:$0xff]
    %v682 = vld [vmem:[#allocation5 + $0xca8] sm:$0xff]
    %v683 = vld [vmem:[#allocation5 + $0xcb0] sm:$0xff]
    %v684 = vld [vmem:[#allocation5 + $0xcb8] sm:$0xff]
    %v685 = vld [vmem:[#allocation5 + $0xcc0] sm:$0xff]
    %v686 = vld [vmem:[#allocation5 + $0xcc8] sm:$0xff]
    %v687 = vld [vmem:[#allocation5 + $0xcd0] sm:$0xff]
    %v688 = vld [vmem:[#allocation5 + $0xcd8] sm:$0xff]
    %v689 = vld [vmem:[#allocation5 + $0xce0] sm:$0xff]
    %v690 = vld [vmem:[#allocation5 + $0xce8] sm:$0xff]
    %v691 = vld [vmem:[#allocation5 + $0xcf0] sm:$0xff]
    %v692 = vld [vmem:[#allocation5 + $0xcf8] sm:$0xff]
    %v693 = vld [vmem:[#allocation5 + $0xd00] sm:$0xff]
    %v694 = vld [vmem:[#allocation5 + $0xd08] sm:$0xff]
    %v695 = vld [vmem:[#allocation5 + $0xd10] sm:$0xff]
    %v696 = vld [vmem:[#allocation5 + $0xd18] sm:$0xff]
    %v697 = vld [vmem:[#allocation5 + $0xd20] sm:$0xff]
    %v698 = vld [vmem:[#allocation5 + $0xd28] sm:$0xff]
    %v699 = vld [vmem:[#allocation5 + $0xd30] sm:$0xff]
    %v700 = vld [vmem:[#allocation5 + $0xd38] sm:$0xff]
    %v701 = vld [vmem:[#allocation5 + $0xd40] sm:$0xff]
    %v702 = vld [vmem:[#allocation5 + $0xd48] sm:$0xff]
    %v703 = vld [vmem:[#allocation5 + $0xd50] sm:$0xff]
    %v704 = vld [vmem:[#allocation5 + $0xd58] sm:$0xff]
    %v705 = vld [vmem:[#allocation5 + $0xd60] sm:$0xff]
    %v706 = vld [vmem:[#allocation5 + $0xd68] sm:$0xff]
    %v707 = vld [vmem:[#allocation5 + $0xd70] sm:$0xff]
    %v708 = vld [vmem:[#allocation5 + $0xd78] sm:$0xff]
    %v709 = vld [vmem:[#allocation5 + $0xd80] sm:$0xff]
    %v710 = vld [vmem:[#allocation5 + $0xd88] sm:$0xff]
    %v711 = vld [vmem:[#allocation5 + $0xd90] sm:$0xff]
    %v712 = vld [vmem:[#allocation5 + $0xd98] sm:$0xff]
    %v713 = vld [vmem:[#allocation5 + $0xda0] sm:$0xff]
    %v714 = vld [vmem:[#allocation5 + $0xda8] sm:$0xff]
    %v715 = vld [vmem:[#allocation5 + $0xdb0] sm:$0xff]
    %v716 = vld [vmem:[#allocation5 + $0xdb8] sm:$0xff]
    %v717 = vld [vmem:[#allocation5 + $0xdc0] sm:$0xff]
    %v718 = vld [vmem:[#allocation5 + $0xdc8] sm:$0xff]
    %v719 = vld [vmem:[#allocation5 + $0xdd0] sm:$0xff]
    %v720 = vld [vmem:[#allocation5 + $0xdd8] sm:$0xff]
    %v721 = vld [vmem:[#allocation5 + $0xde0] sm:$0xff]
    %v722 = vld [vmem:[#allocation5 + $0xde8] sm:$0xff]
    %v723 = vld [vmem:[#allocation5 + $0xdf0] sm:$0xff]
    %v724 = vld [vmem:[#allocation5 + $0xdf8] sm:$0xff]
    %v725 = vld [vmem:[#allocation5 + $0xe00] sm:$0xff]
    %v726 = vld [vmem:[#allocation5 + $0xe08] sm:$0xff]
    %v727 = vld [vmem:[#allocation5 + $0xe10] sm:$0xff]
    %v728 = vld [vmem:[#allocation5 + $0xe18] sm:$0xff]
    %v729 = vld [vmem:[#allocation5 + $0xe20] sm:$0xff]
    %v730 = vld [vmem:[#allocation5 + $0xe28] sm:$0xff]
    %v731 = vld [vmem:[#allocation5 + $0xe30] sm:$0xff]
    %v732 = vld [vmem:[#allocation5 + $0xe38] sm:$0xff]
    %v733 = vld [vmem:[#allocation5 + $0xe40] sm:$0xff]
    %v734 = vld [vmem:[#allocation5 + $0xe48] sm:$0xff]
    %v735 = vld [vmem:[#allocation5 + $0xe50] sm:$0xff]
    %v736 = vld [vmem:[#allocation5 + $0xe58] sm:$0xff]
    %v737 = vld [vmem:[#allocation5 + $0xe60] sm:$0xff]
    %v738 = vld [vmem:[#allocation5 + $0xe68] sm:$0xff]
    %v739 = vld [vmem:[#allocation5 + $0xe70] sm:$0xff]
    %v740 = vld [vmem:[#allocation5 + $0xe78] sm:$0xff]
    %v741 = vld [vmem:[#allocation5 + $0xe80] sm:$0xff]
    %v742 = vld [vmem:[#allocation5 + $0xe88] sm:$0xff]
    %v743 = vld [vmem:[#allocation5 + $0xe90] sm:$0xff]
    %v744 = vld [vmem:[#allocation5 + $0xe98] sm:$0xff]
    %v745 = vld [vmem:[#allocation5 + $0xea0] sm:$0xff]
    %v746 = vld [vmem:[#allocation5 + $0xea8] sm:$0xff]
    %v747 = vld [vmem:[#allocation5 + $0xeb0] sm:$0xff]
    %v748 = vld [vmem:[#allocation5 + $0xeb8] sm:$0xff]
    %v749 = vld [vmem:[#allocation5 + $0xec0] sm:$0xff]
    %v750 = vld [vmem:[#allocation5 + $0xec8] sm:$0xff]
    %v751 = vld [vmem:[#allocation5 + $0xed0] sm:$0xff]
    %v752 = vld [vmem:[#allocation5 + $0xed8] sm:$0xff]
    %v753 = vld [vmem:[#allocation5 + $0xee0] sm:$0xff]
    %v754 = vld [vmem:[#allocation5 + $0xee8] sm:$0xff]
    %v755 = vld [vmem:[#allocation5 + $0xef0] sm:$0xff]
    %v756 = vld [vmem:[#allocation5 + $0xef8] sm:$0xff]
    %v757 = vld [vmem:[#allocation5 + $0xf00] sm:$0xff]
    %v758 = vld [vmem:[#allocation5 + $0xf08] sm:$0xff]
    %v759 = vld [vmem:[#allocation5 + $0xf10] sm:$0xff]
    %v760 = vld [vmem:[#allocation5 + $0xf18] sm:$0xff]
    %v761 = vld [vmem:[#allocation5 + $0xf20] sm:$0xff]
    %v762 = vld [vmem:[#allocation5 + $0xf28] sm:$0xff]
    %v763 = vld [vmem:[#allocation5 + $0xf30] sm:$0xff]
    %v764 = vld [vmem:[#allocation5 + $0xf38] sm:$0xff]
    %v765 = vld [vmem:[#allocation5 + $0xf40] sm:$0xff]
    %v766 = vld [vmem:[#allocation5 + $0xf48] sm:$0xff]
    %v767 = vld [vmem:[#allocation5 + $0xf50] sm:$0xff]
    %v768 = vld [vmem:[#allocation5 + $0xf58] sm:$0xff]
    %v769 = vld [vmem:[#allocation5 + $0xf60] sm:$0xff]
    %v770 = vld [vmem:[#allocation5 + $0xf68] sm:$0xff]
    %v771 = vld [vmem:[#allocation5 + $0xf70] sm:$0xff]
    %v772 = vld [vmem:[#allocation5 + $0xf78] sm:$0xff]
    %v773 = vld [vmem:[#allocation5 + $0xf80] sm:$0xff]
    %v774 = vld [vmem:[#allocation5 + $0xf88] sm:$0xff]
    %v775 = vld [vmem:[#allocation5 + $0xf90] sm:$0xff]
    %v776 = vld [vmem:[#allocation5 + $0xf98] sm:$0xff]
    %v777 = vld [vmem:[#allocation5 + $0xfa0] sm:$0xff]
    %v778 = vld [vmem:[#allocation5 + $0xfa8] sm:$0xff]
    %v779 = vld [vmem:[#allocation5 + $0xfb0] sm:$0xff]
    %v780 = vld [vmem:[#allocation5 + $0xfb8] sm:$0xff]
    %v781 = vld [vmem:[#allocation5 + $0xfc0] sm:$0xff]
    %v782 = vld [vmem:[#allocation5 + $0xfc8] sm:$0xff]
    %v783 = vld [vmem:[#allocation5 + $0xfd0] sm:$0xff]
    %v784 = vld [vmem:[#allocation5 + $0xfd8] sm:$0xff]
    %v785 = vld [vmem:[#allocation5 + $0xfe0] sm:$0xff]
    %v786 = vld [vmem:[#allocation5 + $0xfe8] sm:$0xff]
    %v787 = vld [vmem:[#allocation5 + $0xff0] sm:$0xff]
    %v788 = vld [vmem:[#allocation5 + $0xff8] sm:$0xff]
    %v789 = vld [vmem:[#allocation5 + $0x1000] sm:$0xff]
    %v790 = vld [vmem:[#allocation5 + $0x1008] sm:$0xff]
    %v791 = vld [vmem:[#allocation5 + $0x1010] sm:$0xff]
    %v792 = vld [vmem:[#allocation5 + $0x1018] sm:$0xff]
    %v793 = vld [vmem:[#allocation5 + $0x1020] sm:$0xff]
    %v794 = vld [vmem:[#allocation5 + $0x1028] sm:$0xff]
    %v795 = vld [vmem:[#allocation5 + $0x1030] sm:$0xff]
    %v796 = vld [vmem:[#allocation5 + $0x1038] sm:$0xff]
    %v797 = vld [vmem:[#allocation5 + $0x1040] sm:$0xff]
    %v798 = vld [vmem:[#allocation5 + $0x1048] sm:$0xff]
    %v799 = vld [vmem:[#allocation5 + $0x1050] sm:$0xff]
    %v800 = vld [vmem:[#allocation5 + $0x1058] sm:$0xff]
    %v801 = vld [vmem:[#allocation5 + $0x1060] sm:$0xff]
    %v802 = vld [vmem:[#allocation5 + $0x1068] sm:$0xff]
    %v803 = vld [vmem:[#allocation5 + $0x1070] sm:$0xff]
    %v804 = vld [vmem:[#allocation5 + $0x1078] sm:$0xff]
    %v805 = vld [vmem:[#allocation5 + $0x1080] sm:$0xff]
    %v806 = vld [vmem:[#allocation5 + $0x1088] sm:$0xff]
    %v807 = vld [vmem:[#allocation5 + $0x1090] sm:$0xff]
    %v808 = vld [vmem:[#allocation5 + $0x1098] sm:$0xff]
    %v809 = vld [vmem:[#allocation5 + $0x10a0] sm:$0xff]
    %v810 = vld [vmem:[#allocation5 + $0x10a8] sm:$0xff]
    %v811 = vld [vmem:[#allocation5 + $0x10b0] sm:$0xff]
    %v812 = vld [vmem:[#allocation5 + $0x10b8] sm:$0xff]
    %v813 = vld [vmem:[#allocation5 + $0x10c0] sm:$0xff]
    %v814 = vld [vmem:[#allocation5 + $0x10c8] sm:$0xff]
    %v815 = vld [vmem:[#allocation5 + $0x10d0] sm:$0xff]
    %v816 = vld [vmem:[#allocation5 + $0x10d8] sm:$0xff]
    %v817 = vld [vmem:[#allocation5 + $0x10e0] sm:$0xff]
    %v818 = vld [vmem:[#allocation5 + $0x10e8] sm:$0xff]
    %v819 = vld [vmem:[#allocation5 + $0x10f0] sm:$0xff]
    %v820 = vld [vmem:[#allocation5 + $0x10f8] sm:$0xff]
    %v821 = vld [vmem:[#allocation5 + $0x1100] sm:$0xff]
    %v822 = vld [vmem:[#allocation5 + $0x1108] sm:$0xff]
    %v823 = vld [vmem:[#allocation5 + $0x1110] sm:$0xff]
    %v824 = vld [vmem:[#allocation5 + $0x1118] sm:$0xff]
    %v825 = vld [vmem:[#allocation5 + $0x1120] sm:$0xff]
    %v826 = vld [vmem:[#allocation5 + $0x1128] sm:$0xff]
    %v827 = vld [vmem:[#allocation5 + $0x1130] sm:$0xff]
    %v828 = vld [vmem:[#allocation5 + $0x1138] sm:$0xff]
    %v829 = vld [vmem:[#allocation5 + $0x1140] sm:$0xff]
    %v830 = vld [vmem:[#allocation5 + $0x1148] sm:$0xff]
    %v831 = vld [vmem:[#allocation5 + $0x1150] sm:$0xff]
    %v832 = vld [vmem:[#allocation5 + $0x1158] sm:$0xff]
    %v833 = vld [vmem:[#allocation5 + $0x1160] sm:$0xff]
    %v834 = vld [vmem:[#allocation5 + $0x1168] sm:$0xff]
    %v835 = vld [vmem:[#allocation5 + $0x1170] sm:$0xff]
    %v836 = vld [vmem:[#allocation5 + $0x1178] sm:$0xff]
    %v837 = vld [vmem:[#allocation5 + $0x1180] sm:$0xff]
    %v838 = vld [vmem:[#allocation5 + $0x1188] sm:$0xff]
    %v839 = vld [vmem:[#allocation5 + $0x1190] sm:$0xff]
    %v840 = vld [vmem:[#allocation5 + $0x1198] sm:$0xff]
    %v841 = vld [vmem:[#allocation5 + $0x11a0] sm:$0xff]
    %v842 = vld [vmem:[#allocation5 + $0x11a8] sm:$0xff]
    %v843 = vld [vmem:[#allocation5 + $0x11b0] sm:$0xff]
    %v844 = vld [vmem:[#allocation5 + $0x11b8] sm:$0xff]
    %v845 = vld [vmem:[#allocation5 + $0x11c0] sm:$0xff]
    %v846 = vld [vmem:[#allocation5 + $0x11c8] sm:$0xff]
    %v847 = vld [vmem:[#allocation5 + $0x11d0] sm:$0xff]
    %v848 = vld [vmem:[#allocation5 + $0x11d8] sm:$0xff]
    %v849 = vld [vmem:[#allocation5 + $0x11e0] sm:$0xff]
    %v850 = vld [vmem:[#allocation5 + $0x11e8] sm:$0xff]
    %v851 = vld [vmem:[#allocation5 + $0x11f0] sm:$0xff]
    %v852 = vld [vmem:[#allocation5 + $0x11f8] sm:$0xff]
    %v853 = vld [vmem:[#allocation5 + $0x1200] sm:$0xff]
    %v854 = vld [vmem:[#allocation5 + $0x1208] sm:$0xff]
    %v855 = vld [vmem:[#allocation5 + $0x1210] sm:$0xff]
    %v856 = vld [vmem:[#allocation5 + $0x1218] sm:$0xff]
    %v857 = vld [vmem:[#allocation5 + $0x1220] sm:$0xff]
    %v858 = vld [vmem:[#allocation5 + $0x1228] sm:$0xff]
    %v859 = vld [vmem:[#allocation5 + $0x1230] sm:$0xff]
    %v860 = vld [vmem:[#allocation5 + $0x1238] sm:$0xff]
    %v861 = vld [vmem:[#allocation5 + $0x1240] sm:$0xff]
    %v862 = vld [vmem:[#allocation5 + $0x1248] sm:$0xff]
    %v863 = vld [vmem:[#allocation5 + $0x1250] sm:$0xff]
    %v864 = vld [vmem:[#allocation5 + $0x1258] sm:$0xff]
    %v865 = vld [vmem:[#allocation5 + $0x1260] sm:$0xff]
    %v866 = vld [vmem:[#allocation5 + $0x1268] sm:$0xff]
    %v867 = vld [vmem:[#allocation5 + $0x1270] sm:$0xff]
    %v868 = vld [vmem:[#allocation5 + $0x1278] sm:$0xff]
    %v869 = vld [vmem:[#allocation5 + $0x1280] sm:$0xff]
    %v870 = vld [vmem:[#allocation5 + $0x1288] sm:$0xff]
    %v871 = vld [vmem:[#allocation5 + $0x1290] sm:$0xff]
    %v872 = vld [vmem:[#allocation5 + $0x1298] sm:$0xff]
    %v873 = vld [vmem:[#allocation5 + $0x12a0] sm:$0xff]
    %v874 = vld [vmem:[#allocation5 + $0x12a8] sm:$0xff]
    %v875 = vld [vmem:[#allocation5 + $0x12b0] sm:$0xff]
    %v876 = vld [vmem:[#allocation5 + $0x12b8] sm:$0xff]
    %v877 = vld [vmem:[#allocation5 + $0x12c0] sm:$0xff]
    %v878 = vld [vmem:[#allocation5 + $0x12c8] sm:$0xff]
    %v879 = vld [vmem:[#allocation5 + $0x12d0] sm:$0xff]
    %v880 = vld [vmem:[#allocation5 + $0x12d8] sm:$0xff]
    %v881 = vld [vmem:[#allocation5 + $0x12e0] sm:$0xff]
    %v882 = vld [vmem:[#allocation5 + $0x12e8] sm:$0xff]
    %v883 = vld [vmem:[#allocation5 + $0x12f0] sm:$0xff]
    %v884 = vld [vmem:[#allocation5 + $0x12f8] sm:$0xff]
    %v885 = vld [vmem:[#allocation5 + $0x1300] sm:$0xff]
    %v886 = vld [vmem:[#allocation5 + $0x1308] sm:$0xff]
    %v887 = vld [vmem:[#allocation5 + $0x1310] sm:$0xff]
    %v888 = vld [vmem:[#allocation5 + $0x1318] sm:$0xff]
    %v889 = vld [vmem:[#allocation5 + $0x1320] sm:$0xff]
    %v890 = vld [vmem:[#allocation5 + $0x1328] sm:$0xff]
    %v891 = vld [vmem:[#allocation5 + $0x1330] sm:$0xff]
    %v892 = vld [vmem:[#allocation5 + $0x1338] sm:$0xff]
    %v893 = vld [vmem:[#allocation5 + $0x1340] sm:$0xff]
    %v894 = vld [vmem:[#allocation5 + $0x1348] sm:$0xff]
    %v895 = vld [vmem:[#allocation5 + $0x1350] sm:$0xff]
    %v896 = vld [vmem:[#allocation5 + $0x1358] sm:$0xff]
    %v897 = vld [vmem:[#allocation5 + $0x1360] sm:$0xff]
    %v898 = vld [vmem:[#allocation5 + $0x1368] sm:$0xff]
    %v899 = vld [vmem:[#allocation5 + $0x1370] sm:$0xff]
    %v900 = vld [vmem:[#allocation5 + $0x1378] sm:$0xff]
    %v901 = vld [vmem:[#allocation5 + $0x1380] sm:$0xff]
    %v902 = vld [vmem:[#allocation5 + $0x1388] sm:$0xff]
    %v903 = vld [vmem:[#allocation5 + $0x1390] sm:$0xff]
    %v904 = vld [vmem:[#allocation5 + $0x1398] sm:$0xff]
    %v905 = vld [vmem:[#allocation5 + $0x13a0] sm:$0xff]
    %v906 = vld [vmem:[#allocation5 + $0x13a8] sm:$0xff]
    %v907 = vld [vmem:[#allocation5 + $0x13b0] sm:$0xff]
    %v908 = vld [vmem:[#allocation5 + $0x13b8] sm:$0xff]
    %v909 = vld [vmem:[#allocation5 + $0x13c0] sm:$0xff]
    %v910 = vld [vmem:[#allocation5 + $0x13c8] sm:$0xff]
    %v911 = vld [vmem:[#allocation5 + $0x13d0] sm:$0xff]
    %v912 = vld [vmem:[#allocation5 + $0x13d8] sm:$0xff]
    %v913 = vld [vmem:[#allocation5 + $0x13e0] sm:$0xff]
    %v914 = vld [vmem:[#allocation5 + $0x13e8] sm:$0xff]
    %v915 = vld [vmem:[#allocation5 + $0x13f0] sm:$0xff]
    %v916 = vld [vmem:[#allocation5 + $0x13f8] sm:$0xff]
    %v917 = vld [vmem:[#allocation5 + $0x1400] sm:$0xff]
    %v918 = vld [vmem:[#allocation5 + $0x1408] sm:$0xff]
    %v919 = vld [vmem:[#allocation5 + $0x1410] sm:$0xff]
    %v920 = vld [vmem:[#allocation5 + $0x1418] sm:$0xff]
    %v921 = vld [vmem:[#allocation5 + $0x1420] sm:$0xff]
    %v922 = vld [vmem:[#allocation5 + $0x1428] sm:$0xff]
    %v923 = vld [vmem:[#allocation5 + $0x1430] sm:$0xff]
    %v924 = vld [vmem:[#allocation5 + $0x1438] sm:$0xff]
    %v925 = vld [vmem:[#allocation5 + $0x1440] sm:$0xff]
    %v926 = vld [vmem:[#allocation5 + $0x1448] sm:$0xff]
    %v927 = vld [vmem:[#allocation5 + $0x1450] sm:$0xff]
    %v928 = vld [vmem:[#allocation5 + $0x1458] sm:$0xff]
    %v929 = vld [vmem:[#allocation5 + $0x1460] sm:$0xff]
    %v930 = vld [vmem:[#allocation5 + $0x1468] sm:$0xff]
    %v931 = vld [vmem:[#allocation5 + $0x1470] sm:$0xff]
    %v932 = vld [vmem:[#allocation5 + $0x1478] sm:$0xff]
    %v933 = vld [vmem:[#allocation5 + $0x1480] sm:$0xff]
    %v934 = vld [vmem:[#allocation5 + $0x1488] sm:$0xff]
    %v935 = vld [vmem:[#allocation5 + $0x1490] sm:$0xff]
    %v936 = vld [vmem:[#allocation5 + $0x1498] sm:$0xff]
    %v937 = vld [vmem:[#allocation5 + $0x14a0] sm:$0xff]
    %v938 = vld [vmem:[#allocation5 + $0x14a8] sm:$0xff]
    %v939 = vld [vmem:[#allocation5 + $0x14b0] sm:$0xff]
    %v940 = vld [vmem:[#allocation5 + $0x14b8] sm:$0xff]
    %v941 = vld [vmem:[#allocation5 + $0x14c0] sm:$0xff]
    %v942 = vld [vmem:[#allocation5 + $0x14c8] sm:$0xff]
    %v943 = vld [vmem:[#allocation5 + $0x14d0] sm:$0xff]
    %v944 = vld [vmem:[#allocation5 + $0x14d8] sm:$0xff]
    %v945 = vld [vmem:[#allocation5 + $0x14e0] sm:$0xff]
    %v946 = vld [vmem:[#allocation5 + $0x14e8] sm:$0xff]
    %v947 = vld [vmem:[#allocation5 + $0x14f0] sm:$0xff]
    %v948 = vld [vmem:[#allocation5 + $0x14f8] sm:$0xff]
    %v949 = vld [vmem:[#allocation5 + $0x1500] sm:$0xff]
    %v950 = vld [vmem:[#allocation5 + $0x1508] sm:$0xff]
    %v951 = vld [vmem:[#allocation5 + $0x1510] sm:$0xff]
    %v952 = vld [vmem:[#allocation5 + $0x1518] sm:$0xff]
    %v953 = vld [vmem:[#allocation5 + $0x1520] sm:$0xff]
    %v954 = vld [vmem:[#allocation5 + $0x1528] sm:$0xff]
    %v955 = vld [vmem:[#allocation5 + $0x1530] sm:$0xff]
    %v956 = vld [vmem:[#allocation5 + $0x1538] sm:$0xff]
    %v957 = vld [vmem:[#allocation5 + $0x1540] sm:$0xff]
    %v958 = vld [vmem:[#allocation5 + $0x1548] sm:$0xff]
    %v959 = vld [vmem:[#allocation5 + $0x1550] sm:$0xff]
    %v960 = vld [vmem:[#allocation5 + $0x1558] sm:$0xff]
    %v961 = vld [vmem:[#allocation5 + $0x1560] sm:$0xff]
    %v962 = vld [vmem:[#allocation5 + $0x1568] sm:$0xff]
    %v963 = vld [vmem:[#allocation5 + $0x1570] sm:$0xff]
    %v964 = vld [vmem:[#allocation5 + $0x1578] sm:$0xff]
    %v965 = vld [vmem:[#allocation5 + $0x1580] sm:$0xff]
    %v966 = vld [vmem:[#allocation5 + $0x1588] sm:$0xff]
    %v967 = vld [vmem:[#allocation5 + $0x1590] sm:$0xff]
    %v968 = vld [vmem:[#allocation5 + $0x1598] sm:$0xff]
    %v969 = vld [vmem:[#allocation5 + $0x15a0] sm:$0xff]
    %v970 = vld [vmem:[#allocation5 + $0x15a8] sm:$0xff]
    %v971 = vld [vmem:[#allocation5 + $0x15b0] sm:$0xff]
    %v972 = vld [vmem:[#allocation5 + $0x15b8] sm:$0xff]
    %v973 = vld [vmem:[#allocation5 + $0x15c0] sm:$0xff]
    %v974 = vld [vmem:[#allocation5 + $0x15c8] sm:$0xff]
    %v975 = vld [vmem:[#allocation5 + $0x15d0] sm:$0xff]
    %v976 = vld [vmem:[#allocation5 + $0x15d8] sm:$0xff]
    %v977 = vld [vmem:[#allocation5 + $0x15e0] sm:$0xff]
    %v978 = vld [vmem:[#allocation5 + $0x15e8] sm:$0xff]
    %v979 = vld [vmem:[#allocation5 + $0x15f0] sm:$0xff]
    %v980 = vld [vmem:[#allocation5 + $0x15f8] sm:$0xff]
    %v981 = vld [vmem:[#allocation5 + $0x1600] sm:$0xff]
    %v982 = vld [vmem:[#allocation5 + $0x1608] sm:$0xff]
    %v983 = vld [vmem:[#allocation5 + $0x1610] sm:$0xff]
    %v984 = vld [vmem:[#allocation5 + $0x1618] sm:$0xff]
    %v985 = vld [vmem:[#allocation5 + $0x1620] sm:$0xff]
    %v986 = vld [vmem:[#allocation5 + $0x1628] sm:$0xff]
    %v987 = vld [vmem:[#allocation5 + $0x1630] sm:$0xff]
    %v988 = vld [vmem:[#allocation5 + $0x1638] sm:$0xff]
    %v989 = vld [vmem:[#allocation5 + $0x1640] sm:$0xff]
    %v990 = vld [vmem:[#allocation5 + $0x1648] sm:$0xff]
    %v991 = vld [vmem:[#allocation5 + $0x1650] sm:$0xff]
    %v992 = vld [vmem:[#allocation5 + $0x1658] sm:$0xff]
    %v993 = vld [vmem:[#allocation5 + $0x1660] sm:$0xff]
    %v994 = vld [vmem:[#allocation5 + $0x1668] sm:$0xff]
    %v995 = vld [vmem:[#allocation5 + $0x1670] sm:$0xff]
    %v996 = vld [vmem:[#allocation5 + $0x1678] sm:$0xff]
    %v997 = vld [vmem:[#allocation5 + $0x1680] sm:$0xff]
    %v998 = vld [vmem:[#allocation5 + $0x1688] sm:$0xff]
    %v999 = vld [vmem:[#allocation5 + $0x1690] sm:$0xff]
    %v1000 = vld [vmem:[#allocation5 + $0x1698] sm:$0xff]
    %v1001 = vld [vmem:[#allocation5 + $0x16a0] sm:$0xff]
    %v1002 = vld [vmem:[#allocation5 + $0x16a8] sm:$0xff]
    %v1003 = vld [vmem:[#allocation5 + $0x16b0] sm:$0xff]
    %v1004 = vld [vmem:[#allocation5 + $0x16b8] sm:$0xff]
    %v1005 = vld [vmem:[#allocation5 + $0x16c0] sm:$0xff]
    %v1006 = vld [vmem:[#allocation5 + $0x16c8] sm:$0xff]
    %v1007 = vld [vmem:[#allocation5 + $0x16d0] sm:$0xff]
    %v1008 = vld [vmem:[#allocation5 + $0x16d8] sm:$0xff]
    %v1009 = vld [vmem:[#allocation5 + $0x16e0] sm:$0xff]
    %v1010 = vld [vmem:[#allocation5 + $0x16e8] sm:$0xff]
    %v1011 = vld [vmem:[#allocation5 + $0x16f0] sm:$0xff]
    %v1012 = vld [vmem:[#allocation5 + $0x16f8] sm:$0xff]
    %v1013 = vld [vmem:[#allocation5 + $0x1700] sm:$0xff]
    %v1014 = vld [vmem:[#allocation5 + $0x1708] sm:$0xff]
    %v1015 = vld [vmem:[#allocation5 + $0x1710] sm:$0xff]
    %v1016 = vld [vmem:[#allocation5 + $0x1718] sm:$0xff]
    %v1017 = vld [vmem:[#allocation5 + $0x1720] sm:$0xff]
    %v1018 = vld [vmem:[#allocation5 + $0x1728] sm:$0xff]
    %v1019 = vld [vmem:[#allocation5 + $0x1730] sm:$0xff]
    %v1020 = vld [vmem:[#allocation5 + $0x1738] sm:$0xff]
    %v1021 = vld [vmem:[#allocation5 + $0x1740] sm:$0xff]
    %v1022 = vld [vmem:[#allocation5 + $0x1748] sm:$0xff]
    %v1023 = vld [vmem:[#allocation5 + $0x1750] sm:$0xff]
    %v1024 = vld [vmem:[#allocation5 + $0x1758] sm:$0xff]
    %v1025 = vld [vmem:[#allocation5 + $0x1760] sm:$0xff]
    %v1026 = vld [vmem:[#allocation5 + $0x1768] sm:$0xff]
    %v1027 = vld [vmem:[#allocation5 + $0x1770] sm:$0xff]
    %v1028 = vld [vmem:[#allocation5 + $0x1778] sm:$0xff]
    %v1029 = vld [vmem:[#allocation5 + $0x1780] sm:$0xff]
    %v1030 = vld [vmem:[#allocation5 + $0x1788] sm:$0xff]
    %v1031 = vld [vmem:[#allocation5 + $0x1790] sm:$0xff]
    %v1032 = vld [vmem:[#allocation5 + $0x1798] sm:$0xff]
    %v1033 = vld [vmem:[#allocation5 + $0x17a0] sm:$0xff]
    %v1034 = vld [vmem:[#allocation5 + $0x17a8] sm:$0xff]
    %v1035 = vld [vmem:[#allocation5 + $0x17b0] sm:$0xff]
    %v1036 = vld [vmem:[#allocation5 + $0x17b8] sm:$0xff]
    %v1037 = vld [vmem:[#allocation5 + $0x17c0] sm:$0xff]
    %v1038 = vld [vmem:[#allocation5 + $0x17c8] sm:$0xff]
    %v1039 = vld [vmem:[#allocation5 + $0x17d0] sm:$0xff]
    %v1040 = vld [vmem:[#allocation5 + $0x17d8] sm:$0xff]
    %v1041 = vld [vmem:[#allocation5 + $0x17e0] sm:$0xff]
    %v1042 = vld [vmem:[#allocation5 + $0x17e8] sm:$0xff]
    %v1043 = vld [vmem:[#allocation5 + $0x17f0] sm:$0xff]
    %v1044 = vld [vmem:[#allocation5 + $0x17f8] sm:$0xff]
    %v1045 = vld [vmem:[#allocation7] sm:$0xf]
    %v1047 = vlaneseq
    %v1048 = vshrl.u32 %v1047, 7
    %v1049 = vsub.s32 0, %v1048
    %v1050 = vrot.slane %v1045, %v1049
    %v1051 = vlaneseq
    %v1052 = vshrl.u32 %v1051, 7
    %v1053 = vsub.s32 1, %v1052
    %v1054 = vrot.slane %v1045, %v1053
    %v1055 = vlaneseq
    %v1056 = vshrl.u32 %v1055, 7
    %v1057 = vsub.s32 2, %v1056
    %v1058 = vrot.slane %v1045, %v1057
    %v1059 = vlaneseq
    %v1060 = vshrl.u32 %v1059, 7
    %v1061 = vsub.s32 3, %v1060
    %v1062 = vrot.slane %v1045, %v1061
    %v1835 = vunpack.c.l.b16 %v277
    %v1836 = vunpack.c.h.b16 %v277
    %v1837 = vunpack.c.l.b16 %v278
    %v1838 = vunpack.c.h.b16 %v278
    %v1839 = vunpack.c.l.b16 %v279
    %v1840 = vunpack.c.h.b16 %v279
    %v1841 = vunpack.c.l.b16 %v280
    %v1842 = vunpack.c.h.b16 %v280
    %v1843 = vunpack.c.l.b16 %v281
    %v1844 = vunpack.c.h.b16 %v281
    %v1845 = vunpack.c.l.b16 %v282
    %v1846 = vunpack.c.h.b16 %v282
    %v1847 = vunpack.c.l.b16 %v283
    %v1848 = vunpack.c.h.b16 %v283
    %v1849 = vunpack.c.l.b16 %v284
    %v1850 = vunpack.c.h.b16 %v284
    %v1851 = vunpack.c.l.b16 %v285
    %v1852 = vunpack.c.h.b16 %v285
    %v1853 = vunpack.c.l.b16 %v286
    %v1854 = vunpack.c.h.b16 %v286
    %v1855 = vunpack.c.l.b16 %v287
    %v1856 = vunpack.c.h.b16 %v287
    %v1857 = vunpack.c.l.b16 %v288
    %v1858 = vunpack.c.h.b16 %v288
    %v1859 = vunpack.c.l.b16 %v289
    %v1860 = vunpack.c.h.b16 %v289
    %v1861 = vunpack.c.l.b16 %v290
    %v1862 = vunpack.c.h.b16 %v290
    %v1863 = vunpack.c.l.b16 %v291
    %v1864 = vunpack.c.h.b16 %v291
    %v1865 = vunpack.c.l.b16 %v292
    %v1866 = vunpack.c.h.b16 %v292
    %v1867 = vunpack.c.l.b16 %v293
    %v1868 = vunpack.c.h.b16 %v293
    %v1869 = vunpack.c.l.b16 %v294
    %v1870 = vunpack.c.h.b16 %v294
    %v1871 = vunpack.c.l.b16 %v295
    %v1872 = vunpack.c.h.b16 %v295
    %v1873 = vunpack.c.l.b16 %v296
    %v1874 = vunpack.c.h.b16 %v296
    %v1875 = vunpack.c.l.b16 %v297
    %v1876 = vunpack.c.h.b16 %v297
    %v1877 = vunpack.c.l.b16 %v298
    %v1878 = vunpack.c.h.b16 %v298
    %v1879 = vunpack.c.l.b16 %v299
    %v1880 = vunpack.c.h.b16 %v299
    %v1881 = vunpack.c.l.b16 %v300
    %v1882 = vunpack.c.h.b16 %v300
    %v1883 = vunpack.c.l.b16 %v301
    %v1884 = vunpack.c.h.b16 %v301
    %v1885 = vunpack.c.l.b16 %v302
    %v1886 = vunpack.c.h.b16 %v302
    %v1887 = vunpack.c.l.b16 %v303
    %v1888 = vunpack.c.h.b16 %v303
    %v1889 = vunpack.c.l.b16 %v304
    %v1890 = vunpack.c.h.b16 %v304
    %v1891 = vunpack.c.l.b16 %v305
    %v1892 = vunpack.c.h.b16 %v305
    %v1893 = vunpack.c.l.b16 %v306
    %v1894 = vunpack.c.h.b16 %v306
    %v1895 = vunpack.c.l.b16 %v307
    %v1896 = vunpack.c.h.b16 %v307
    %v1897 = vunpack.c.l.b16 %v308
    %v1898 = vunpack.c.h.b16 %v308
    %v1899 = vunpack.c.l.b16 %v309
    %v1900 = vunpack.c.h.b16 %v309
    %v1901 = vunpack.c.l.b16 %v310
    %v1902 = vunpack.c.h.b16 %v310
    %v1903 = vunpack.c.l.b16 %v311
    %v1904 = vunpack.c.h.b16 %v311
    %v1905 = vunpack.c.l.b16 %v312
    %v1906 = vunpack.c.h.b16 %v312
    %v1907 = vunpack.c.l.b16 %v313
    %v1908 = vunpack.c.h.b16 %v313
    %v1909 = vunpack.c.l.b16 %v314
    %v1910 = vunpack.c.h.b16 %v314
    %v1911 = vunpack.c.l.b16 %v315
    %v1912 = vunpack.c.h.b16 %v315
    %v1913 = vunpack.c.l.b16 %v316
    %v1914 = vunpack.c.h.b16 %v316
    %v1915 = vunpack.c.l.b16 %v317
    %v1916 = vunpack.c.h.b16 %v317
    %v1917 = vunpack.c.l.b16 %v318
    %v1918 = vunpack.c.h.b16 %v318
    %v1919 = vunpack.c.l.b16 %v319
    %v1920 = vunpack.c.h.b16 %v319
    %v1921 = vunpack.c.l.b16 %v320
    %v1922 = vunpack.c.h.b16 %v320
    %v1923 = vunpack.c.l.b16 %v321
    %v1924 = vunpack.c.h.b16 %v321
    %v1925 = vunpack.c.l.b16 %v322
    %v1926 = vunpack.c.h.b16 %v322
    %v1927 = vunpack.c.l.b16 %v323
    %v1928 = vunpack.c.h.b16 %v323
    %v1929 = vunpack.c.l.b16 %v324
    %v1930 = vunpack.c.h.b16 %v324
    %v1931 = vunpack.c.l.b16 %v325
    %v1932 = vunpack.c.h.b16 %v325
    %v1933 = vunpack.c.l.b16 %v326
    %v1934 = vunpack.c.h.b16 %v326
    %v1935 = vunpack.c.l.b16 %v327
    %v1936 = vunpack.c.h.b16 %v327
    %v1937 = vunpack.c.l.b16 %v328
    %v1938 = vunpack.c.h.b16 %v328
    %v1939 = vunpack.c.l.b16 %v329
    %v1940 = vunpack.c.h.b16 %v329
    %v1941 = vunpack.c.l.b16 %v330
    %v1942 = vunpack.c.h.b16 %v330
    %v1943 = vunpack.c.l.b16 %v331
    %v1944 = vunpack.c.h.b16 %v331
    %v1945 = vunpack.c.l.b16 %v332
    %v1946 = vunpack.c.h.b16 %v332
    %v1947 = vunpack.c.l.b16 %v333
    %v1948 = vunpack.c.h.b16 %v333
    %v1949 = vunpack.c.l.b16 %v334
    %v1950 = vunpack.c.h.b16 %v334
    %v1951 = vunpack.c.l.b16 %v335
    %v1952 = vunpack.c.h.b16 %v335
    %v1953 = vunpack.c.l.b16 %v336
    %v1954 = vunpack.c.h.b16 %v336
    %v1955 = vunpack.c.l.b16 %v337
    %v1956 = vunpack.c.h.b16 %v337
    %v1957 = vunpack.c.l.b16 %v338
    %v1958 = vunpack.c.h.b16 %v338
    %v1959 = vunpack.c.l.b16 %v339
    %v1960 = vunpack.c.h.b16 %v339
    %v1961 = vunpack.c.l.b16 %v340
    %v1962 = vunpack.c.h.b16 %v340
    %v1963 = vunpack.c.l.b16 %v341
    %v1964 = vunpack.c.h.b16 %v341
    %v1965 = vunpack.c.l.b16 %v342
    %v1966 = vunpack.c.h.b16 %v342
    %v1967 = vunpack.c.l.b16 %v343
    %v1968 = vunpack.c.h.b16 %v343
    %v1969 = vunpack.c.l.b16 %v344
    %v1970 = vunpack.c.h.b16 %v344
    %v1971 = vunpack.c.l.b16 %v345
    %v1972 = vunpack.c.h.b16 %v345
    %v1973 = vunpack.c.l.b16 %v346
    %v1974 = vunpack.c.h.b16 %v346
    %v1975 = vunpack.c.l.b16 %v347
    %v1976 = vunpack.c.h.b16 %v347
    %v1977 = vunpack.c.l.b16 %v348
    %v1978 = vunpack.c.h.b16 %v348
    %v1979 = vunpack.c.l.b16 %v349
    %v1980 = vunpack.c.h.b16 %v349
    %v1981 = vunpack.c.l.b16 %v350
    %v1982 = vunpack.c.h.b16 %v350
    %v1983 = vunpack.c.l.b16 %v351
    %v1984 = vunpack.c.h.b16 %v351
    %v1985 = vunpack.c.l.b16 %v352
    %v1986 = vunpack.c.h.b16 %v352
    %v1987 = vunpack.c.l.b16 %v353
    %v1988 = vunpack.c.h.b16 %v353
    %v1989 = vunpack.c.l.b16 %v354
    %v1990 = vunpack.c.h.b16 %v354
    %v1991 = vunpack.c.l.b16 %v355
    %v1992 = vunpack.c.h.b16 %v355
    %v1993 = vunpack.c.l.b16 %v356
    %v1994 = vunpack.c.h.b16 %v356
    %v1995 = vunpack.c.l.b16 %v357
    %v1996 = vunpack.c.h.b16 %v357
    %v1997 = vunpack.c.l.b16 %v358
    %v1998 = vunpack.c.h.b16 %v358
    %v1999 = vunpack.c.l.b16 %v359
    %v2000 = vunpack.c.h.b16 %v359
    %v2001 = vunpack.c.l.b16 %v360
    %v2002 = vunpack.c.h.b16 %v360
    %v2003 = vunpack.c.l.b16 %v361
    %v2004 = vunpack.c.h.b16 %v361
    %v2005 = vunpack.c.l.b16 %v362
    %v2006 = vunpack.c.h.b16 %v362
    %v2007 = vunpack.c.l.b16 %v363
    %v2008 = vunpack.c.h.b16 %v363
    %v2009 = vunpack.c.l.b16 %v364
    %v2010 = vunpack.c.h.b16 %v364
    %v2011 = vunpack.c.l.b16 %v365
    %v2012 = vunpack.c.h.b16 %v365
    %v2013 = vunpack.c.l.b16 %v366
    %v2014 = vunpack.c.h.b16 %v366
    %v2015 = vunpack.c.l.b16 %v367
    %v2016 = vunpack.c.h.b16 %v367
    %v2017 = vunpack.c.l.b16 %v368
    %v2018 = vunpack.c.h.b16 %v368
    %v2019 = vunpack.c.l.b16 %v369
    %v2020 = vunpack.c.h.b16 %v369
    %v2021 = vunpack.c.l.b16 %v370
    %v2022 = vunpack.c.h.b16 %v370
    %v2023 = vunpack.c.l.b16 %v371
    %v2024 = vunpack.c.h.b16 %v371
    %v2025 = vunpack.c.l.b16 %v372
    %v2026 = vunpack.c.h.b16 %v372
    %v2027 = vunpack.c.l.b16 %v373
    %v2028 = vunpack.c.h.b16 %v373
    %v2029 = vunpack.c.l.b16 %v374
    %v2030 = vunpack.c.h.b16 %v374
    %v2031 = vunpack.c.l.b16 %v375
    %v2032 = vunpack.c.h.b16 %v375
    %v2033 = vunpack.c.l.b16 %v376
    %v2034 = vunpack.c.h.b16 %v376
    %v2035 = vunpack.c.l.b16 %v377
    %v2036 = vunpack.c.h.b16 %v377
    %v2037 = vunpack.c.l.b16 %v378
    %v2038 = vunpack.c.h.b16 %v378
    %v2039 = vunpack.c.l.b16 %v379
    %v2040 = vunpack.c.h.b16 %v379
    %v2041 = vunpack.c.l.b16 %v380
    %v2042 = vunpack.c.h.b16 %v380
    %v2043 = vunpack.c.l.b16 %v381
    %v2044 = vunpack.c.h.b16 %v381
    %v2045 = vunpack.c.l.b16 %v382
    %v2046 = vunpack.c.h.b16 %v382
    %v2047 = vunpack.c.l.b16 %v383
    %v2048 = vunpack.c.h.b16 %v383
    %v2049 = vunpack.c.l.b16 %v384
    %v2050 = vunpack.c.h.b16 %v384
    %v2051 = vunpack.c.l.b16 %v385
    %v2052 = vunpack.c.h.b16 %v385
    %v2053 = vunpack.c.l.b16 %v386
    %v2054 = vunpack.c.h.b16 %v386
    %v2055 = vunpack.c.l.b16 %v387
    %v2056 = vunpack.c.h.b16 %v387
    %v2057 = vunpack.c.l.b16 %v388
    %v2058 = vunpack.c.h.b16 %v388
    %v2059 = vunpack.c.l.b16 %v389
    %v2060 = vunpack.c.h.b16 %v389
    %v2061 = vunpack.c.l.b16 %v390
    %v2062 = vunpack.c.h.b16 %v390
    %v2063 = vunpack.c.l.b16 %v391
    %v2064 = vunpack.c.h.b16 %v391
    %v2065 = vunpack.c.l.b16 %v392
    %v2066 = vunpack.c.h.b16 %v392
    %v2067 = vunpack.c.l.b16 %v393
    %v2068 = vunpack.c.h.b16 %v393
    %v2069 = vunpack.c.l.b16 %v394
    %v2070 = vunpack.c.h.b16 %v394
    %v2071 = vunpack.c.l.b16 %v395
    %v2072 = vunpack.c.h.b16 %v395
    %v2073 = vunpack.c.l.b16 %v396
    %v2074 = vunpack.c.h.b16 %v396
    %v2075 = vunpack.c.l.b16 %v397
    %v2076 = vunpack.c.h.b16 %v397
    %v2077 = vunpack.c.l.b16 %v398
    %v2078 = vunpack.c.h.b16 %v398
    %v2079 = vunpack.c.l.b16 %v399
    %v2080 = vunpack.c.h.b16 %v399
    %v2081 = vunpack.c.l.b16 %v400
    %v2082 = vunpack.c.h.b16 %v400
    %v2083 = vunpack.c.l.b16 %v401
    %v2084 = vunpack.c.h.b16 %v401
    %v2085 = vunpack.c.l.b16 %v402
    %v2086 = vunpack.c.h.b16 %v402
    %v2087 = vunpack.c.l.b16 %v403
    %v2088 = vunpack.c.h.b16 %v403
    %v2089 = vunpack.c.l.b16 %v404
    %v2090 = vunpack.c.h.b16 %v404
    %v2091 = vunpack.c.l.b16 %v405
    %v2092 = vunpack.c.h.b16 %v405
    %v2093 = vunpack.c.l.b16 %v406
    %v2094 = vunpack.c.h.b16 %v406
    %v2095 = vunpack.c.l.b16 %v407
    %v2096 = vunpack.c.h.b16 %v407
    %v2097 = vunpack.c.l.b16 %v408
    %v2098 = vunpack.c.h.b16 %v408
    %v2099 = vunpack.c.l.b16 %v409
    %v2100 = vunpack.c.h.b16 %v409
    %v2101 = vunpack.c.l.b16 %v410
    %v2102 = vunpack.c.h.b16 %v410
    %v2103 = vunpack.c.l.b16 %v411
    %v2104 = vunpack.c.h.b16 %v411
    %v2105 = vunpack.c.l.b16 %v412
    %v2106 = vunpack.c.h.b16 %v412
    %v2107 = vunpack.c.l.b16 %v413
    %v2108 = vunpack.c.h.b16 %v413
    %v2109 = vunpack.c.l.b16 %v414
    %v2110 = vunpack.c.h.b16 %v414
    %v2111 = vunpack.c.l.b16 %v415
    %v2112 = vunpack.c.h.b16 %v415
    %v2113 = vunpack.c.l.b16 %v416
    %v2114 = vunpack.c.h.b16 %v416
    %v2115 = vunpack.c.l.b16 %v417
    %v2116 = vunpack.c.h.b16 %v417
    %v2117 = vunpack.c.l.b16 %v418
    %v2118 = vunpack.c.h.b16 %v418
    %v2119 = vunpack.c.l.b16 %v419
    %v2120 = vunpack.c.h.b16 %v419
    %v2121 = vunpack.c.l.b16 %v420
    %v2122 = vunpack.c.h.b16 %v420
    %v2123 = vunpack.c.l.b16 %v421
    %v2124 = vunpack.c.h.b16 %v421
    %v2125 = vunpack.c.l.b16 %v422
    %v2126 = vunpack.c.h.b16 %v422
    %v2127 = vunpack.c.l.b16 %v423
    %v2128 = vunpack.c.h.b16 %v423
    %v2129 = vunpack.c.l.b16 %v424
    %v2130 = vunpack.c.h.b16 %v424
    %v2131 = vunpack.c.l.b16 %v425
    %v2132 = vunpack.c.h.b16 %v425
    %v2133 = vunpack.c.l.b16 %v426
    %v2134 = vunpack.c.h.b16 %v426
    %v2135 = vunpack.c.l.b16 %v427
    %v2136 = vunpack.c.h.b16 %v427
    %v2137 = vunpack.c.l.b16 %v428
    %v2138 = vunpack.c.h.b16 %v428
    %v2139 = vunpack.c.l.b16 %v429
    %v2140 = vunpack.c.h.b16 %v429
    %v2141 = vunpack.c.l.b16 %v430
    %v2142 = vunpack.c.h.b16 %v430
    %v2143 = vunpack.c.l.b16 %v431
    %v2144 = vunpack.c.h.b16 %v431
    %v2145 = vunpack.c.l.b16 %v432
    %v2146 = vunpack.c.h.b16 %v432
    %v2147 = vunpack.c.l.b16 %v433
    %v2148 = vunpack.c.h.b16 %v433
    %v2149 = vunpack.c.l.b16 %v434
    %v2150 = vunpack.c.h.b16 %v434
    %v2151 = vunpack.c.l.b16 %v435
    %v2152 = vunpack.c.h.b16 %v435
    %v2153 = vunpack.c.l.b16 %v436
    %v2154 = vunpack.c.h.b16 %v436
    %v2155 = vunpack.c.l.b16 %v437
    %v2156 = vunpack.c.h.b16 %v437
    %v2157 = vunpack.c.l.b16 %v438
    %v2158 = vunpack.c.h.b16 %v438
    %v2159 = vunpack.c.l.b16 %v439
    %v2160 = vunpack.c.h.b16 %v439
    %v2161 = vunpack.c.l.b16 %v440
    %v2162 = vunpack.c.h.b16 %v440
    %v2163 = vunpack.c.l.b16 %v441
    %v2164 = vunpack.c.h.b16 %v441
    %v2165 = vunpack.c.l.b16 %v442
    %v2166 = vunpack.c.h.b16 %v442
    %v2167 = vunpack.c.l.b16 %v443
    %v2168 = vunpack.c.h.b16 %v443
    %v2169 = vunpack.c.l.b16 %v444
    %v2170 = vunpack.c.h.b16 %v444
    %v2171 = vunpack.c.l.b16 %v445
    %v2172 = vunpack.c.h.b16 %v445
    %v2173 = vunpack.c.l.b16 %v446
    %v2174 = vunpack.c.h.b16 %v446
    %v2175 = vunpack.c.l.b16 %v447
    %v2176 = vunpack.c.h.b16 %v447
    %v2177 = vunpack.c.l.b16 %v448
    %v2178 = vunpack.c.h.b16 %v448
    %v2179 = vunpack.c.l.b16 %v449
    %v2180 = vunpack.c.h.b16 %v449
    %v2181 = vunpack.c.l.b16 %v450
    %v2182 = vunpack.c.h.b16 %v450
    %v2183 = vunpack.c.l.b16 %v451
    %v2184 = vunpack.c.h.b16 %v451
    %v2185 = vunpack.c.l.b16 %v452
    %v2186 = vunpack.c.h.b16 %v452
    %v2187 = vunpack.c.l.b16 %v453
    %v2188 = vunpack.c.h.b16 %v453
    %v2189 = vunpack.c.l.b16 %v454
    %v2190 = vunpack.c.h.b16 %v454
    %v2191 = vunpack.c.l.b16 %v455
    %v2192 = vunpack.c.h.b16 %v455
    %v2193 = vunpack.c.l.b16 %v456
    %v2194 = vunpack.c.h.b16 %v456
    %v2195 = vunpack.c.l.b16 %v457
    %v2196 = vunpack.c.h.b16 %v457
    %v2197 = vunpack.c.l.b16 %v458
    %v2198 = vunpack.c.h.b16 %v458
    %v2199 = vunpack.c.l.b16 %v459
    %v2200 = vunpack.c.h.b16 %v459
    %v2201 = vunpack.c.l.b16 %v460
    %v2202 = vunpack.c.h.b16 %v460
    %v2203 = vunpack.c.l.b16 %v461
    %v2204 = vunpack.c.h.b16 %v461
    %v2205 = vunpack.c.l.b16 %v462
    %v2206 = vunpack.c.h.b16 %v462
    %v2207 = vunpack.c.l.b16 %v463
    %v2208 = vunpack.c.h.b16 %v463
    %v2209 = vunpack.c.l.b16 %v464
    %v2210 = vunpack.c.h.b16 %v464
    %v2211 = vunpack.c.l.b16 %v465
    %v2212 = vunpack.c.h.b16 %v465
    %v2213 = vunpack.c.l.b16 %v466
    %v2214 = vunpack.c.h.b16 %v466
    %v2215 = vunpack.c.l.b16 %v467
    %v2216 = vunpack.c.h.b16 %v467
    %v2217 = vunpack.c.l.b16 %v468
    %v2218 = vunpack.c.h.b16 %v468
    %v2219 = vunpack.c.l.b16 %v469
    %v2220 = vunpack.c.h.b16 %v469
    %v2221 = vunpack.c.l.b16 %v470
    %v2222 = vunpack.c.h.b16 %v470
    %v2223 = vunpack.c.l.b16 %v471
    %v2224 = vunpack.c.h.b16 %v471
    %v2225 = vunpack.c.l.b16 %v472
    %v2226 = vunpack.c.h.b16 %v472
    %v2227 = vunpack.c.l.b16 %v473
    %v2228 = vunpack.c.h.b16 %v473
    %v2229 = vunpack.c.l.b16 %v474
    %v2230 = vunpack.c.h.b16 %v474
    %v2231 = vunpack.c.l.b16 %v475
    %v2232 = vunpack.c.h.b16 %v475
    %v2233 = vunpack.c.l.b16 %v476
    %v2234 = vunpack.c.h.b16 %v476
    %v2235 = vunpack.c.l.b16 %v477
    %v2236 = vunpack.c.h.b16 %v477
    %v2237 = vunpack.c.l.b16 %v478
    %v2238 = vunpack.c.h.b16 %v478
    %v2239 = vunpack.c.l.b16 %v479
    %v2240 = vunpack.c.h.b16 %v479
    %v2241 = vunpack.c.l.b16 %v480
    %v2242 = vunpack.c.h.b16 %v480
    %v2243 = vunpack.c.l.b16 %v481
    %v2244 = vunpack.c.h.b16 %v481
    %v2245 = vunpack.c.l.b16 %v482
    %v2246 = vunpack.c.h.b16 %v482
    %v2247 = vunpack.c.l.b16 %v483
    %v2248 = vunpack.c.h.b16 %v483
    %v2249 = vunpack.c.l.b16 %v484
    %v2250 = vunpack.c.h.b16 %v484
    %v2251 = vunpack.c.l.b16 %v485
    %v2252 = vunpack.c.h.b16 %v485
    %v2253 = vunpack.c.l.b16 %v486
    %v2254 = vunpack.c.h.b16 %v486
    %v2255 = vunpack.c.l.b16 %v487
    %v2256 = vunpack.c.h.b16 %v487
    %v2257 = vunpack.c.l.b16 %v488
    %v2258 = vunpack.c.h.b16 %v488
    %v2259 = vunpack.c.l.b16 %v489
    %v2260 = vunpack.c.h.b16 %v489
    %v2261 = vunpack.c.l.b16 %v490
    %v2262 = vunpack.c.h.b16 %v490
    %v2263 = vunpack.c.l.b16 %v491
    %v2264 = vunpack.c.h.b16 %v491
    %v2265 = vunpack.c.l.b16 %v492
    %v2266 = vunpack.c.h.b16 %v492
    %v2267 = vunpack.c.l.b16 %v493
    %v2268 = vunpack.c.h.b16 %v493
    %v2269 = vunpack.c.l.b16 %v494
    %v2270 = vunpack.c.h.b16 %v494
    %v2271 = vunpack.c.l.b16 %v495
    %v2272 = vunpack.c.h.b16 %v495
    %v2273 = vunpack.c.l.b16 %v496
    %v2274 = vunpack.c.h.b16 %v496
    %v2275 = vunpack.c.l.b16 %v497
    %v2276 = vunpack.c.h.b16 %v497
    %v2277 = vunpack.c.l.b16 %v498
    %v2278 = vunpack.c.h.b16 %v498
    %v2279 = vunpack.c.l.b16 %v499
    %v2280 = vunpack.c.h.b16 %v499
    %v2281 = vunpack.c.l.b16 %v500
    %v2282 = vunpack.c.h.b16 %v500
    %v2283 = vunpack.c.l.b16 %v501
    %v2284 = vunpack.c.h.b16 %v501
    %v2285 = vunpack.c.l.b16 %v502
    %v2286 = vunpack.c.h.b16 %v502
    %v2287 = vunpack.c.l.b16 %v503
    %v2288 = vunpack.c.h.b16 %v503
    %v2289 = vunpack.c.l.b16 %v504
    %v2290 = vunpack.c.h.b16 %v504
    %v2291 = vunpack.c.l.b16 %v505
    %v2292 = vunpack.c.h.b16 %v505
    %v2293 = vunpack.c.l.b16 %v506
    %v2294 = vunpack.c.h.b16 %v506
    %v2295 = vunpack.c.l.b16 %v507
    %v2296 = vunpack.c.h.b16 %v507
    %v2297 = vunpack.c.l.b16 %v508
    %v2298 = vunpack.c.h.b16 %v508
    %v2299 = vunpack.c.l.b16 %v509
    %v2300 = vunpack.c.h.b16 %v509
    %v2301 = vunpack.c.l.b16 %v510
    %v2302 = vunpack.c.h.b16 %v510
    %v2303 = vunpack.c.l.b16 %v511
    %v2304 = vunpack.c.h.b16 %v511
    %v2305 = vunpack.c.l.b16 %v512
    %v2306 = vunpack.c.h.b16 %v512
    %v2307 = vunpack.c.l.b16 %v513
    %v2308 = vunpack.c.h.b16 %v513
    %v2309 = vunpack.c.l.b16 %v514
    %v2310 = vunpack.c.h.b16 %v514
    %v2311 = vunpack.c.l.b16 %v515
    %v2312 = vunpack.c.h.b16 %v515
    %v2313 = vunpack.c.l.b16 %v516
    %v2314 = vunpack.c.h.b16 %v516
    %v2315 = vunpack.c.l.b16 %v517
    %v2316 = vunpack.c.h.b16 %v517
    %v2317 = vunpack.c.l.b16 %v518
    %v2318 = vunpack.c.h.b16 %v518
    %v2319 = vunpack.c.l.b16 %v519
    %v2320 = vunpack.c.h.b16 %v519
    %v2321 = vunpack.c.l.b16 %v520
    %v2322 = vunpack.c.h.b16 %v520
    %v2323 = vunpack.c.l.b16 %v521
    %v2324 = vunpack.c.h.b16 %v521
    %v2325 = vunpack.c.l.b16 %v522
    %v2326 = vunpack.c.h.b16 %v522
    %v2327 = vunpack.c.l.b16 %v523
    %v2328 = vunpack.c.h.b16 %v523
    %v2329 = vunpack.c.l.b16 %v524
    %v2330 = vunpack.c.h.b16 %v524
    %v2331 = vunpack.c.l.b16 %v525
    %v2332 = vunpack.c.h.b16 %v525
    %v2333 = vunpack.c.l.b16 %v526
    %v2334 = vunpack.c.h.b16 %v526
    %v2335 = vunpack.c.l.b16 %v527
    %v2336 = vunpack.c.h.b16 %v527
    %v2337 = vunpack.c.l.b16 %v528
    %v2338 = vunpack.c.h.b16 %v528
    %v2339 = vunpack.c.l.b16 %v529
    %v2340 = vunpack.c.h.b16 %v529
    %v2341 = vunpack.c.l.b16 %v530
    %v2342 = vunpack.c.h.b16 %v530
    %v2343 = vunpack.c.l.b16 %v531
    %v2344 = vunpack.c.h.b16 %v531
    %v2345 = vunpack.c.l.b16 %v532
    %v2346 = vunpack.c.h.b16 %v532
    %v2347 = vunpack.c.l.b16 %v533
    %v2348 = vunpack.c.h.b16 %v533
    %v2349 = vunpack.c.l.b16 %v534
    %v2350 = vunpack.c.h.b16 %v534
    %v2351 = vunpack.c.l.b16 %v535
    %v2352 = vunpack.c.h.b16 %v535
    %v2353 = vunpack.c.l.b16 %v536
    %v2354 = vunpack.c.h.b16 %v536
    %v2355 = vunpack.c.l.b16 %v537
    %v2356 = vunpack.c.h.b16 %v537
    %v2357 = vunpack.c.l.b16 %v538
    %v2358 = vunpack.c.h.b16 %v538
    %v2359 = vunpack.c.l.b16 %v539
    %v2360 = vunpack.c.h.b16 %v539
    %v2361 = vunpack.c.l.b16 %v540
    %v2362 = vunpack.c.h.b16 %v540
    %v2363 = vunpack.c.l.b16 %v541
    %v2364 = vunpack.c.h.b16 %v541
    %v2365 = vunpack.c.l.b16 %v542
    %v2366 = vunpack.c.h.b16 %v542
    %v2367 = vunpack.c.l.b16 %v543
    %v2368 = vunpack.c.h.b16 %v543
    %v2369 = vunpack.c.l.b16 %v544
    %v2370 = vunpack.c.h.b16 %v544
    %v2371 = vunpack.c.l.b16 %v545
    %v2372 = vunpack.c.h.b16 %v545
    %v2373 = vunpack.c.l.b16 %v546
    %v2374 = vunpack.c.h.b16 %v546
    %v2375 = vunpack.c.l.b16 %v547
    %v2376 = vunpack.c.h.b16 %v547
    %v2377 = vunpack.c.l.b16 %v548
    %v2378 = vunpack.c.h.b16 %v548
    %v2379 = vunpack.c.l.b16 %v549
    %v2380 = vunpack.c.h.b16 %v549
    %v2381 = vunpack.c.l.b16 %v550
    %v2382 = vunpack.c.h.b16 %v550
    %v2383 = vunpack.c.l.b16 %v551
    %v2384 = vunpack.c.h.b16 %v551
    %v2385 = vunpack.c.l.b16 %v552
    %v2386 = vunpack.c.h.b16 %v552
    %v2387 = vunpack.c.l.b16 %v553
    %v2388 = vunpack.c.h.b16 %v553
    %v2389 = vunpack.c.l.b16 %v554
    %v2390 = vunpack.c.h.b16 %v554
    %v2391 = vunpack.c.l.b16 %v555
    %v2392 = vunpack.c.h.b16 %v555
    %v2393 = vunpack.c.l.b16 %v556
    %v2394 = vunpack.c.h.b16 %v556
    %v2395 = vunpack.c.l.b16 %v557
    %v2396 = vunpack.c.h.b16 %v557
    %v2397 = vunpack.c.l.b16 %v558
    %v2398 = vunpack.c.h.b16 %v558
    %v2399 = vunpack.c.l.b16 %v559
    %v2400 = vunpack.c.h.b16 %v559
    %v2401 = vunpack.c.l.b16 %v560
    %v2402 = vunpack.c.h.b16 %v560
    %v2403 = vunpack.c.l.b16 %v561
    %v2404 = vunpack.c.h.b16 %v561
    %v2405 = vunpack.c.l.b16 %v562
    %v2406 = vunpack.c.h.b16 %v562
    %v2407 = vunpack.c.l.b16 %v563
    %v2408 = vunpack.c.h.b16 %v563
    %v2409 = vunpack.c.l.b16 %v564
    %v2410 = vunpack.c.h.b16 %v564
    %v2411 = vunpack.c.l.b16 %v565
    %v2412 = vunpack.c.h.b16 %v565
    %v2413 = vunpack.c.l.b16 %v566
    %v2414 = vunpack.c.h.b16 %v566
    %v2415 = vunpack.c.l.b16 %v567
    %v2416 = vunpack.c.h.b16 %v567
    %v2417 = vunpack.c.l.b16 %v568
    %v2418 = vunpack.c.h.b16 %v568
    %v2419 = vunpack.c.l.b16 %v569
    %v2420 = vunpack.c.h.b16 %v569
    %v2421 = vunpack.c.l.b16 %v570
    %v2422 = vunpack.c.h.b16 %v570
    %v2423 = vunpack.c.l.b16 %v571
    %v2424 = vunpack.c.h.b16 %v571
    %v2425 = vunpack.c.l.b16 %v572
    %v2426 = vunpack.c.h.b16 %v572
    %v2427 = vunpack.c.l.b16 %v573
    %v2428 = vunpack.c.h.b16 %v573
    %v2429 = vunpack.c.l.b16 %v574
    %v2430 = vunpack.c.h.b16 %v574
    %v2431 = vunpack.c.l.b16 %v575
    %v2432 = vunpack.c.h.b16 %v575
    %v2433 = vunpack.c.l.b16 %v576
    %v2434 = vunpack.c.h.b16 %v576
    %v2435 = vunpack.c.l.b16 %v577
    %v2436 = vunpack.c.h.b16 %v577
    %v2437 = vunpack.c.l.b16 %v578
    %v2438 = vunpack.c.h.b16 %v578
    %v2439 = vunpack.c.l.b16 %v579
    %v2440 = vunpack.c.h.b16 %v579
    %v2441 = vunpack.c.l.b16 %v580
    %v2442 = vunpack.c.h.b16 %v580
    %v2443 = vunpack.c.l.b16 %v581
    %v2444 = vunpack.c.h.b16 %v581
    %v2445 = vunpack.c.l.b16 %v582
    %v2446 = vunpack.c.h.b16 %v582
    %v2447 = vunpack.c.l.b16 %v583
    %v2448 = vunpack.c.h.b16 %v583
    %v2449 = vunpack.c.l.b16 %v584
    %v2450 = vunpack.c.h.b16 %v584
    %v2451 = vunpack.c.l.b16 %v585
    %v2452 = vunpack.c.h.b16 %v585
    %v2453 = vunpack.c.l.b16 %v586
    %v2454 = vunpack.c.h.b16 %v586
    %v2455 = vunpack.c.l.b16 %v587
    %v2456 = vunpack.c.h.b16 %v587
    %v2457 = vunpack.c.l.b16 %v588
    %v2458 = vunpack.c.h.b16 %v588
    %v2459 = vunpack.c.l.b16 %v589
    %v2460 = vunpack.c.h.b16 %v589
    %v2461 = vunpack.c.l.b16 %v590
    %v2462 = vunpack.c.h.b16 %v590
    %v2463 = vunpack.c.l.b16 %v591
    %v2464 = vunpack.c.h.b16 %v591
    %v2465 = vunpack.c.l.b16 %v592
    %v2466 = vunpack.c.h.b16 %v592
    %v2467 = vunpack.c.l.b16 %v593
    %v2468 = vunpack.c.h.b16 %v593
    %v2469 = vunpack.c.l.b16 %v594
    %v2470 = vunpack.c.h.b16 %v594
    %v2471 = vunpack.c.l.b16 %v595
    %v2472 = vunpack.c.h.b16 %v595
    %v2473 = vunpack.c.l.b16 %v596
    %v2474 = vunpack.c.h.b16 %v596
    %v2475 = vunpack.c.l.b16 %v597
    %v2476 = vunpack.c.h.b16 %v597
    %v2477 = vunpack.c.l.b16 %v598
    %v2478 = vunpack.c.h.b16 %v598
    %v2479 = vunpack.c.l.b16 %v599
    %v2480 = vunpack.c.h.b16 %v599
    %v2481 = vunpack.c.l.b16 %v600
    %v2482 = vunpack.c.h.b16 %v600
    %v2483 = vunpack.c.l.b16 %v601
    %v2484 = vunpack.c.h.b16 %v601
    %v2485 = vunpack.c.l.b16 %v602
    %v2486 = vunpack.c.h.b16 %v602
    %v2487 = vunpack.c.l.b16 %v603
    %v2488 = vunpack.c.h.b16 %v603
    %v2489 = vunpack.c.l.b16 %v604
    %v2490 = vunpack.c.h.b16 %v604
    %v2491 = vunpack.c.l.b16 %v605
    %v2492 = vunpack.c.h.b16 %v605
    %v2493 = vunpack.c.l.b16 %v606
    %v2494 = vunpack.c.h.b16 %v606
    %v2495 = vunpack.c.l.b16 %v607
    %v2496 = vunpack.c.h.b16 %v607
    %v2497 = vunpack.c.l.b16 %v608
    %v2498 = vunpack.c.h.b16 %v608
    %v2499 = vunpack.c.l.b16 %v609
    %v2500 = vunpack.c.h.b16 %v609
    %v2501 = vunpack.c.l.b16 %v610
    %v2502 = vunpack.c.h.b16 %v610
    %v2503 = vunpack.c.l.b16 %v611
    %v2504 = vunpack.c.h.b16 %v611
    %v2505 = vunpack.c.l.b16 %v612
    %v2506 = vunpack.c.h.b16 %v612
    %v2507 = vunpack.c.l.b16 %v613
    %v2508 = vunpack.c.h.b16 %v613
    %v2509 = vunpack.c.l.b16 %v614
    %v2510 = vunpack.c.h.b16 %v614
    %v2511 = vunpack.c.l.b16 %v615
    %v2512 = vunpack.c.h.b16 %v615
    %v2513 = vunpack.c.l.b16 %v616
    %v2514 = vunpack.c.h.b16 %v616
    %v2515 = vunpack.c.l.b16 %v617
    %v2516 = vunpack.c.h.b16 %v617
    %v2517 = vunpack.c.l.b16 %v618
    %v2518 = vunpack.c.h.b16 %v618
    %v2519 = vunpack.c.l.b16 %v619
    %v2520 = vunpack.c.h.b16 %v619
    %v2521 = vunpack.c.l.b16 %v620
    %v2522 = vunpack.c.h.b16 %v620
    %v2523 = vunpack.c.l.b16 %v621
    %v2524 = vunpack.c.h.b16 %v621
    %v2525 = vunpack.c.l.b16 %v622
    %v2526 = vunpack.c.h.b16 %v622
    %v2527 = vunpack.c.l.b16 %v623
    %v2528 = vunpack.c.h.b16 %v623
    %v2529 = vunpack.c.l.b16 %v624
    %v2530 = vunpack.c.h.b16 %v624
    %v2531 = vunpack.c.l.b16 %v625
    %v2532 = vunpack.c.h.b16 %v625
    %v2533 = vunpack.c.l.b16 %v626
    %v2534 = vunpack.c.h.b16 %v626
    %v2535 = vunpack.c.l.b16 %v627
    %v2536 = vunpack.c.h.b16 %v627
    %v2537 = vunpack.c.l.b16 %v628
    %v2538 = vunpack.c.h.b16 %v628
    %v2539 = vunpack.c.l.b16 %v629
    %v2540 = vunpack.c.h.b16 %v629
    %v2541 = vunpack.c.l.b16 %v630
    %v2542 = vunpack.c.h.b16 %v630
    %v2543 = vunpack.c.l.b16 %v631
    %v2544 = vunpack.c.h.b16 %v631
    %v2545 = vunpack.c.l.b16 %v632
    %v2546 = vunpack.c.h.b16 %v632
    %v2547 = vunpack.c.l.b16 %v633
    %v2548 = vunpack.c.h.b16 %v633
    %v2549 = vunpack.c.l.b16 %v634
    %v2550 = vunpack.c.h.b16 %v634
    %v2551 = vunpack.c.l.b16 %v635
    %v2552 = vunpack.c.h.b16 %v635
    %v2553 = vunpack.c.l.b16 %v636
    %v2554 = vunpack.c.h.b16 %v636
    %v2555 = vunpack.c.l.b16 %v637
    %v2556 = vunpack.c.h.b16 %v637
    %v2557 = vunpack.c.l.b16 %v638
    %v2558 = vunpack.c.h.b16 %v638
    %v2559 = vunpack.c.l.b16 %v639
    %v2560 = vunpack.c.h.b16 %v639
    %v2561 = vunpack.c.l.b16 %v640
    %v2562 = vunpack.c.h.b16 %v640
    %v2563 = vunpack.c.l.b16 %v641
    %v2564 = vunpack.c.h.b16 %v641
    %v2565 = vunpack.c.l.b16 %v642
    %v2566 = vunpack.c.h.b16 %v642
    %v2567 = vunpack.c.l.b16 %v643
    %v2568 = vunpack.c.h.b16 %v643
    %v2569 = vunpack.c.l.b16 %v644
    %v2570 = vunpack.c.h.b16 %v644
    %v2571 = vunpack.c.l.b16 %v645
    %v2572 = vunpack.c.h.b16 %v645
    %v2573 = vunpack.c.l.b16 %v646
    %v2574 = vunpack.c.h.b16 %v646
    %v2575 = vunpack.c.l.b16 %v647
    %v2576 = vunpack.c.h.b16 %v647
    %v2577 = vunpack.c.l.b16 %v648
    %v2578 = vunpack.c.h.b16 %v648
    %v2579 = vunpack.c.l.b16 %v649
    %v2580 = vunpack.c.h.b16 %v649
    %v2581 = vunpack.c.l.b16 %v650
    %v2582 = vunpack.c.h.b16 %v650
    %v2583 = vunpack.c.l.b16 %v651
    %v2584 = vunpack.c.h.b16 %v651
    %v2585 = vunpack.c.l.b16 %v652
    %v2586 = vunpack.c.h.b16 %v652
    %v2587 = vunpack.c.l.b16 %v653
    %v2588 = vunpack.c.h.b16 %v653
    %v2589 = vunpack.c.l.b16 %v654
    %v2590 = vunpack.c.h.b16 %v654
    %v2591 = vunpack.c.l.b16 %v655
    %v2592 = vunpack.c.h.b16 %v655
    %v2593 = vunpack.c.l.b16 %v656
    %v2594 = vunpack.c.h.b16 %v656
    %v2595 = vunpack.c.l.b16 %v657
    %v2596 = vunpack.c.h.b16 %v657
    %v2597 = vunpack.c.l.b16 %v658
    %v2598 = vunpack.c.h.b16 %v658
    %v2599 = vunpack.c.l.b16 %v659
    %v2600 = vunpack.c.h.b16 %v659
    %v2601 = vunpack.c.l.b16 %v660
    %v2602 = vunpack.c.h.b16 %v660
    %v2603 = vunpack.c.l.b16 %v661
    %v2604 = vunpack.c.h.b16 %v661
    %v2605 = vunpack.c.l.b16 %v662
    %v2606 = vunpack.c.h.b16 %v662
    %v2607 = vunpack.c.l.b16 %v663
    %v2608 = vunpack.c.h.b16 %v663
    %v2609 = vunpack.c.l.b16 %v664
    %v2610 = vunpack.c.h.b16 %v664
    %v2611 = vunpack.c.l.b16 %v665
    %v2612 = vunpack.c.h.b16 %v665
    %v2613 = vunpack.c.l.b16 %v666
    %v2614 = vunpack.c.h.b16 %v666
    %v2615 = vunpack.c.l.b16 %v667
    %v2616 = vunpack.c.h.b16 %v667
    %v2617 = vunpack.c.l.b16 %v668
    %v2618 = vunpack.c.h.b16 %v668
    %v2619 = vunpack.c.l.b16 %v669
    %v2620 = vunpack.c.h.b16 %v669
    %v2621 = vunpack.c.l.b16 %v670
    %v2622 = vunpack.c.h.b16 %v670
    %v2623 = vunpack.c.l.b16 %v671
    %v2624 = vunpack.c.h.b16 %v671
    %v2625 = vunpack.c.l.b16 %v672
    %v2626 = vunpack.c.h.b16 %v672
    %v2627 = vunpack.c.l.b16 %v673
    %v2628 = vunpack.c.h.b16 %v673
    %v2629 = vunpack.c.l.b16 %v674
    %v2630 = vunpack.c.h.b16 %v674
    %v2631 = vunpack.c.l.b16 %v675
    %v2632 = vunpack.c.h.b16 %v675
    %v2633 = vunpack.c.l.b16 %v676
    %v2634 = vunpack.c.h.b16 %v676
    %v2635 = vunpack.c.l.b16 %v677
    %v2636 = vunpack.c.h.b16 %v677
    %v2637 = vunpack.c.l.b16 %v678
    %v2638 = vunpack.c.h.b16 %v678
    %v2639 = vunpack.c.l.b16 %v679
    %v2640 = vunpack.c.h.b16 %v679
    %v2641 = vunpack.c.l.b16 %v680
    %v2642 = vunpack.c.h.b16 %v680
    %v2643 = vunpack.c.l.b16 %v681
    %v2644 = vunpack.c.h.b16 %v681
    %v2645 = vunpack.c.l.b16 %v682
    %v2646 = vunpack.c.h.b16 %v682
    %v2647 = vunpack.c.l.b16 %v683
    %v2648 = vunpack.c.h.b16 %v683
    %v2649 = vunpack.c.l.b16 %v684
    %v2650 = vunpack.c.h.b16 %v684
    %v2651 = vunpack.c.l.b16 %v685
    %v2652 = vunpack.c.h.b16 %v685
    %v2653 = vunpack.c.l.b16 %v686
    %v2654 = vunpack.c.h.b16 %v686
    %v2655 = vunpack.c.l.b16 %v687
    %v2656 = vunpack.c.h.b16 %v687
    %v2657 = vunpack.c.l.b16 %v688
    %v2658 = vunpack.c.h.b16 %v688
    %v2659 = vunpack.c.l.b16 %v689
    %v2660 = vunpack.c.h.b16 %v689
    %v2661 = vunpack.c.l.b16 %v690
    %v2662 = vunpack.c.h.b16 %v690
    %v2663 = vunpack.c.l.b16 %v691
    %v2664 = vunpack.c.h.b16 %v691
    %v2665 = vunpack.c.l.b16 %v692
    %v2666 = vunpack.c.h.b16 %v692
    %v2667 = vunpack.c.l.b16 %v693
    %v2668 = vunpack.c.h.b16 %v693
    %v2669 = vunpack.c.l.b16 %v694
    %v2670 = vunpack.c.h.b16 %v694
    %v2671 = vunpack.c.l.b16 %v695
    %v2672 = vunpack.c.h.b16 %v695
    %v2673 = vunpack.c.l.b16 %v696
    %v2674 = vunpack.c.h.b16 %v696
    %v2675 = vunpack.c.l.b16 %v697
    %v2676 = vunpack.c.h.b16 %v697
    %v2677 = vunpack.c.l.b16 %v698
    %v2678 = vunpack.c.h.b16 %v698
    %v2679 = vunpack.c.l.b16 %v699
    %v2680 = vunpack.c.h.b16 %v699
    %v2681 = vunpack.c.l.b16 %v700
    %v2682 = vunpack.c.h.b16 %v700
    %v2683 = vunpack.c.l.b16 %v701
    %v2684 = vunpack.c.h.b16 %v701
    %v2685 = vunpack.c.l.b16 %v702
    %v2686 = vunpack.c.h.b16 %v702
    %v2687 = vunpack.c.l.b16 %v703
    %v2688 = vunpack.c.h.b16 %v703
    %v2689 = vunpack.c.l.b16 %v704
    %v2690 = vunpack.c.h.b16 %v704
    %v2691 = vunpack.c.l.b16 %v705
    %v2692 = vunpack.c.h.b16 %v705
    %v2693 = vunpack.c.l.b16 %v706
    %v2694 = vunpack.c.h.b16 %v706
    %v2695 = vunpack.c.l.b16 %v707
    %v2696 = vunpack.c.h.b16 %v707
    %v2697 = vunpack.c.l.b16 %v708
    %v2698 = vunpack.c.h.b16 %v708
    %v2699 = vunpack.c.l.b16 %v709
    %v2700 = vunpack.c.h.b16 %v709
    %v2701 = vunpack.c.l.b16 %v710
    %v2702 = vunpack.c.h.b16 %v710
    %v2703 = vunpack.c.l.b16 %v711
    %v2704 = vunpack.c.h.b16 %v711
    %v2705 = vunpack.c.l.b16 %v712
    %v2706 = vunpack.c.h.b16 %v712
    %v2707 = vunpack.c.l.b16 %v713
    %v2708 = vunpack.c.h.b16 %v713
    %v2709 = vunpack.c.l.b16 %v714
    %v2710 = vunpack.c.h.b16 %v714
    %v2711 = vunpack.c.l.b16 %v715
    %v2712 = vunpack.c.h.b16 %v715
    %v2713 = vunpack.c.l.b16 %v716
    %v2714 = vunpack.c.h.b16 %v716
    %v2715 = vunpack.c.l.b16 %v717
    %v2716 = vunpack.c.h.b16 %v717
    %v2717 = vunpack.c.l.b16 %v718
    %v2718 = vunpack.c.h.b16 %v718
    %v2719 = vunpack.c.l.b16 %v719
    %v2720 = vunpack.c.h.b16 %v719
    %v2721 = vunpack.c.l.b16 %v720
    %v2722 = vunpack.c.h.b16 %v720
    %v2723 = vunpack.c.l.b16 %v721
    %v2724 = vunpack.c.h.b16 %v721
    %v2725 = vunpack.c.l.b16 %v722
    %v2726 = vunpack.c.h.b16 %v722
    %v2727 = vunpack.c.l.b16 %v723
    %v2728 = vunpack.c.h.b16 %v723
    %v2729 = vunpack.c.l.b16 %v724
    %v2730 = vunpack.c.h.b16 %v724
    %v2731 = vunpack.c.l.b16 %v725
    %v2732 = vunpack.c.h.b16 %v725
    %v2733 = vunpack.c.l.b16 %v726
    %v2734 = vunpack.c.h.b16 %v726
    %v2735 = vunpack.c.l.b16 %v727
    %v2736 = vunpack.c.h.b16 %v727
    %v2737 = vunpack.c.l.b16 %v728
    %v2738 = vunpack.c.h.b16 %v728
    %v2739 = vunpack.c.l.b16 %v729
    %v2740 = vunpack.c.h.b16 %v729
    %v2741 = vunpack.c.l.b16 %v730
    %v2742 = vunpack.c.h.b16 %v730
    %v2743 = vunpack.c.l.b16 %v731
    %v2744 = vunpack.c.h.b16 %v731
    %v2745 = vunpack.c.l.b16 %v732
    %v2746 = vunpack.c.h.b16 %v732
    %v2747 = vunpack.c.l.b16 %v733
    %v2748 = vunpack.c.h.b16 %v733
    %v2749 = vunpack.c.l.b16 %v734
    %v2750 = vunpack.c.h.b16 %v734
    %v2751 = vunpack.c.l.b16 %v735
    %v2752 = vunpack.c.h.b16 %v735
    %v2753 = vunpack.c.l.b16 %v736
    %v2754 = vunpack.c.h.b16 %v736
    %v2755 = vunpack.c.l.b16 %v737
    %v2756 = vunpack.c.h.b16 %v737
    %v2757 = vunpack.c.l.b16 %v738
    %v2758 = vunpack.c.h.b16 %v738
    %v2759 = vunpack.c.l.b16 %v739
    %v2760 = vunpack.c.h.b16 %v739
    %v2761 = vunpack.c.l.b16 %v740
    %v2762 = vunpack.c.h.b16 %v740
    %v2763 = vunpack.c.l.b16 %v741
    %v2764 = vunpack.c.h.b16 %v741
    %v2765 = vunpack.c.l.b16 %v742
    %v2766 = vunpack.c.h.b16 %v742
    %v2767 = vunpack.c.l.b16 %v743
    %v2768 = vunpack.c.h.b16 %v743
    %v2769 = vunpack.c.l.b16 %v744
    %v2770 = vunpack.c.h.b16 %v744
    %v2771 = vunpack.c.l.b16 %v745
    %v2772 = vunpack.c.h.b16 %v745
    %v2773 = vunpack.c.l.b16 %v746
    %v2774 = vunpack.c.h.b16 %v746
    %v2775 = vunpack.c.l.b16 %v747
    %v2776 = vunpack.c.h.b16 %v747
    %v2777 = vunpack.c.l.b16 %v748
    %v2778 = vunpack.c.h.b16 %v748
    %v2779 = vunpack.c.l.b16 %v749
    %v2780 = vunpack.c.h.b16 %v749
    %v2781 = vunpack.c.l.b16 %v750
    %v2782 = vunpack.c.h.b16 %v750
    %v2783 = vunpack.c.l.b16 %v751
    %v2784 = vunpack.c.h.b16 %v751
    %v2785 = vunpack.c.l.b16 %v752
    %v2786 = vunpack.c.h.b16 %v752
    %v2787 = vunpack.c.l.b16 %v753
    %v2788 = vunpack.c.h.b16 %v753
    %v2789 = vunpack.c.l.b16 %v754
    %v2790 = vunpack.c.h.b16 %v754
    %v2791 = vunpack.c.l.b16 %v755
    %v2792 = vunpack.c.h.b16 %v755
    %v2793 = vunpack.c.l.b16 %v756
    %v2794 = vunpack.c.h.b16 %v756
    %v2795 = vunpack.c.l.b16 %v757
    %v2796 = vunpack.c.h.b16 %v757
    %v2797 = vunpack.c.l.b16 %v758
    %v2798 = vunpack.c.h.b16 %v758
    %v2799 = vunpack.c.l.b16 %v759
    %v2800 = vunpack.c.h.b16 %v759
    %v2801 = vunpack.c.l.b16 %v760
    %v2802 = vunpack.c.h.b16 %v760
    %v2803 = vunpack.c.l.b16 %v761
    %v2804 = vunpack.c.h.b16 %v761
    %v2805 = vunpack.c.l.b16 %v762
    %v2806 = vunpack.c.h.b16 %v762
    %v2807 = vunpack.c.l.b16 %v763
    %v2808 = vunpack.c.h.b16 %v763
    %v2809 = vunpack.c.l.b16 %v764
    %v2810 = vunpack.c.h.b16 %v764
    %v2811 = vunpack.c.l.b16 %v765
    %v2812 = vunpack.c.h.b16 %v765
    %v2813 = vunpack.c.l.b16 %v766
    %v2814 = vunpack.c.h.b16 %v766
    %v2815 = vunpack.c.l.b16 %v767
    %v2816 = vunpack.c.h.b16 %v767
    %v2817 = vunpack.c.l.b16 %v768
    %v2818 = vunpack.c.h.b16 %v768
    %v2819 = vunpack.c.l.b16 %v769
    %v2820 = vunpack.c.h.b16 %v769
    %v2821 = vunpack.c.l.b16 %v770
    %v2822 = vunpack.c.h.b16 %v770
    %v2823 = vunpack.c.l.b16 %v771
    %v2824 = vunpack.c.h.b16 %v771
    %v2825 = vunpack.c.l.b16 %v772
    %v2826 = vunpack.c.h.b16 %v772
    %v2827 = vunpack.c.l.b16 %v773
    %v2828 = vunpack.c.h.b16 %v773
    %v2829 = vunpack.c.l.b16 %v774
    %v2830 = vunpack.c.h.b16 %v774
    %v2831 = vunpack.c.l.b16 %v775
    %v2832 = vunpack.c.h.b16 %v775
    %v2833 = vunpack.c.l.b16 %v776
    %v2834 = vunpack.c.h.b16 %v776
    %v2835 = vunpack.c.l.b16 %v777
    %v2836 = vunpack.c.h.b16 %v777
    %v2837 = vunpack.c.l.b16 %v778
    %v2838 = vunpack.c.h.b16 %v778
    %v2839 = vunpack.c.l.b16 %v779
    %v2840 = vunpack.c.h.b16 %v779
    %v2841 = vunpack.c.l.b16 %v780
    %v2842 = vunpack.c.h.b16 %v780
    %v2843 = vunpack.c.l.b16 %v781
    %v2844 = vunpack.c.h.b16 %v781
    %v2845 = vunpack.c.l.b16 %v782
    %v2846 = vunpack.c.h.b16 %v782
    %v2847 = vunpack.c.l.b16 %v783
    %v2848 = vunpack.c.h.b16 %v783
    %v2849 = vunpack.c.l.b16 %v784
    %v2850 = vunpack.c.h.b16 %v784
    %v2851 = vunpack.c.l.b16 %v785
    %v2852 = vunpack.c.h.b16 %v785
    %v2853 = vunpack.c.l.b16 %v786
    %v2854 = vunpack.c.h.b16 %v786
    %v2855 = vunpack.c.l.b16 %v787
    %v2856 = vunpack.c.h.b16 %v787
    %v2857 = vunpack.c.l.b16 %v788
    %v2858 = vunpack.c.h.b16 %v788
    %v2859 = vunpack.c.l.b16 %v789
    %v2860 = vunpack.c.h.b16 %v789
    %v2861 = vunpack.c.l.b16 %v790
    %v2862 = vunpack.c.h.b16 %v790
    %v2863 = vunpack.c.l.b16 %v791
    %v2864 = vunpack.c.h.b16 %v791
    %v2865 = vunpack.c.l.b16 %v792
    %v2866 = vunpack.c.h.b16 %v792
    %v2867 = vunpack.c.l.b16 %v793
    %v2868 = vunpack.c.h.b16 %v793
    %v2869 = vunpack.c.l.b16 %v794
    %v2870 = vunpack.c.h.b16 %v794
    %v2871 = vunpack.c.l.b16 %v795
    %v2872 = vunpack.c.h.b16 %v795
    %v2873 = vunpack.c.l.b16 %v796
    %v2874 = vunpack.c.h.b16 %v796
    %v2875 = vunpack.c.l.b16 %v797
    %v2876 = vunpack.c.h.b16 %v797
    %v2877 = vunpack.c.l.b16 %v798
    %v2878 = vunpack.c.h.b16 %v798
    %v2879 = vunpack.c.l.b16 %v799
    %v2880 = vunpack.c.h.b16 %v799
    %v2881 = vunpack.c.l.b16 %v800
    %v2882 = vunpack.c.h.b16 %v800
    %v2883 = vunpack.c.l.b16 %v801
    %v2884 = vunpack.c.h.b16 %v801
    %v2885 = vunpack.c.l.b16 %v802
    %v2886 = vunpack.c.h.b16 %v802
    %v2887 = vunpack.c.l.b16 %v803
    %v2888 = vunpack.c.h.b16 %v803
    %v2889 = vunpack.c.l.b16 %v804
    %v2890 = vunpack.c.h.b16 %v804
    %v2891 = vunpack.c.l.b16 %v805
    %v2892 = vunpack.c.h.b16 %v805
    %v2893 = vunpack.c.l.b16 %v806
    %v2894 = vunpack.c.h.b16 %v806
    %v2895 = vunpack.c.l.b16 %v807
    %v2896 = vunpack.c.h.b16 %v807
    %v2897 = vunpack.c.l.b16 %v808
    %v2898 = vunpack.c.h.b16 %v808
    %v2899 = vunpack.c.l.b16 %v809
    %v2900 = vunpack.c.h.b16 %v809
    %v2901 = vunpack.c.l.b16 %v810
    %v2902 = vunpack.c.h.b16 %v810
    %v2903 = vunpack.c.l.b16 %v811
    %v2904 = vunpack.c.h.b16 %v811
    %v2905 = vunpack.c.l.b16 %v812
    %v2906 = vunpack.c.h.b16 %v812
    %v2907 = vunpack.c.l.b16 %v813
    %v2908 = vunpack.c.h.b16 %v813
    %v2909 = vunpack.c.l.b16 %v814
    %v2910 = vunpack.c.h.b16 %v814
    %v2911 = vunpack.c.l.b16 %v815
    %v2912 = vunpack.c.h.b16 %v815
    %v2913 = vunpack.c.l.b16 %v816
    %v2914 = vunpack.c.h.b16 %v816
    %v2915 = vunpack.c.l.b16 %v817
    %v2916 = vunpack.c.h.b16 %v817
    %v2917 = vunpack.c.l.b16 %v818
    %v2918 = vunpack.c.h.b16 %v818
    %v2919 = vunpack.c.l.b16 %v819
    %v2920 = vunpack.c.h.b16 %v819
    %v2921 = vunpack.c.l.b16 %v820
    %v2922 = vunpack.c.h.b16 %v820
    %v2923 = vunpack.c.l.b16 %v821
    %v2924 = vunpack.c.h.b16 %v821
    %v2925 = vunpack.c.l.b16 %v822
    %v2926 = vunpack.c.h.b16 %v822
    %v2927 = vunpack.c.l.b16 %v823
    %v2928 = vunpack.c.h.b16 %v823
    %v2929 = vunpack.c.l.b16 %v824
    %v2930 = vunpack.c.h.b16 %v824
    %v2931 = vunpack.c.l.b16 %v825
    %v2932 = vunpack.c.h.b16 %v825
    %v2933 = vunpack.c.l.b16 %v826
    %v2934 = vunpack.c.h.b16 %v826
    %v2935 = vunpack.c.l.b16 %v827
    %v2936 = vunpack.c.h.b16 %v827
    %v2937 = vunpack.c.l.b16 %v828
    %v2938 = vunpack.c.h.b16 %v828
    %v2939 = vunpack.c.l.b16 %v829
    %v2940 = vunpack.c.h.b16 %v829
    %v2941 = vunpack.c.l.b16 %v830
    %v2942 = vunpack.c.h.b16 %v830
    %v2943 = vunpack.c.l.b16 %v831
    %v2944 = vunpack.c.h.b16 %v831
    %v2945 = vunpack.c.l.b16 %v832
    %v2946 = vunpack.c.h.b16 %v832
    %v2947 = vunpack.c.l.b16 %v833
    %v2948 = vunpack.c.h.b16 %v833
    %v2949 = vunpack.c.l.b16 %v834
    %v2950 = vunpack.c.h.b16 %v834
    %v2951 = vunpack.c.l.b16 %v835
    %v2952 = vunpack.c.h.b16 %v835
    %v2953 = vunpack.c.l.b16 %v836
    %v2954 = vunpack.c.h.b16 %v836
    %v2955 = vunpack.c.l.b16 %v837
    %v2956 = vunpack.c.h.b16 %v837
    %v2957 = vunpack.c.l.b16 %v838
    %v2958 = vunpack.c.h.b16 %v838
    %v2959 = vunpack.c.l.b16 %v839
    %v2960 = vunpack.c.h.b16 %v839
    %v2961 = vunpack.c.l.b16 %v840
    %v2962 = vunpack.c.h.b16 %v840
    %v2963 = vunpack.c.l.b16 %v841
    %v2964 = vunpack.c.h.b16 %v841
    %v2965 = vunpack.c.l.b16 %v842
    %v2966 = vunpack.c.h.b16 %v842
    %v2967 = vunpack.c.l.b16 %v843
    %v2968 = vunpack.c.h.b16 %v843
    %v2969 = vunpack.c.l.b16 %v844
    %v2970 = vunpack.c.h.b16 %v844
    %v2971 = vunpack.c.l.b16 %v845
    %v2972 = vunpack.c.h.b16 %v845
    %v2973 = vunpack.c.l.b16 %v846
    %v2974 = vunpack.c.h.b16 %v846
    %v2975 = vunpack.c.l.b16 %v847
    %v2976 = vunpack.c.h.b16 %v847
    %v2977 = vunpack.c.l.b16 %v848
    %v2978 = vunpack.c.h.b16 %v848
    %v2979 = vunpack.c.l.b16 %v849
    %v2980 = vunpack.c.h.b16 %v849
    %v2981 = vunpack.c.l.b16 %v850
    %v2982 = vunpack.c.h.b16 %v850
    %v2983 = vunpack.c.l.b16 %v851
    %v2984 = vunpack.c.h.b16 %v851
    %v2985 = vunpack.c.l.b16 %v852
    %v2986 = vunpack.c.h.b16 %v852
    %v2987 = vunpack.c.l.b16 %v853
    %v2988 = vunpack.c.h.b16 %v853
    %v2989 = vunpack.c.l.b16 %v854
    %v2990 = vunpack.c.h.b16 %v854
    %v2991 = vunpack.c.l.b16 %v855
    %v2992 = vunpack.c.h.b16 %v855
    %v2993 = vunpack.c.l.b16 %v856
    %v2994 = vunpack.c.h.b16 %v856
    %v2995 = vunpack.c.l.b16 %v857
    %v2996 = vunpack.c.h.b16 %v857
    %v2997 = vunpack.c.l.b16 %v858
    %v2998 = vunpack.c.h.b16 %v858
    %v2999 = vunpack.c.l.b16 %v859
    %v3000 = vunpack.c.h.b16 %v859
    %v3001 = vunpack.c.l.b16 %v860
    %v3002 = vunpack.c.h.b16 %v860
    %v3003 = vunpack.c.l.b16 %v861
    %v3004 = vunpack.c.h.b16 %v861
    %v3005 = vunpack.c.l.b16 %v862
    %v3006 = vunpack.c.h.b16 %v862
    %v3007 = vunpack.c.l.b16 %v863
    %v3008 = vunpack.c.h.b16 %v863
    %v3009 = vunpack.c.l.b16 %v864
    %v3010 = vunpack.c.h.b16 %v864
    %v3011 = vunpack.c.l.b16 %v865
    %v3012 = vunpack.c.h.b16 %v865
    %v3013 = vunpack.c.l.b16 %v866
    %v3014 = vunpack.c.h.b16 %v866
    %v3015 = vunpack.c.l.b16 %v867
    %v3016 = vunpack.c.h.b16 %v867
    %v3017 = vunpack.c.l.b16 %v868
    %v3018 = vunpack.c.h.b16 %v868
    %v3019 = vunpack.c.l.b16 %v869
    %v3020 = vunpack.c.h.b16 %v869
    %v3021 = vunpack.c.l.b16 %v870
    %v3022 = vunpack.c.h.b16 %v870
    %v3023 = vunpack.c.l.b16 %v871
    %v3024 = vunpack.c.h.b16 %v871
    %v3025 = vunpack.c.l.b16 %v872
    %v3026 = vunpack.c.h.b16 %v872
    %v3027 = vunpack.c.l.b16 %v873
    %v3028 = vunpack.c.h.b16 %v873
    %v3029 = vunpack.c.l.b16 %v874
    %v3030 = vunpack.c.h.b16 %v874
    %v3031 = vunpack.c.l.b16 %v875
    %v3032 = vunpack.c.h.b16 %v875
    %v3033 = vunpack.c.l.b16 %v876
    %v3034 = vunpack.c.h.b16 %v876
    %v3035 = vunpack.c.l.b16 %v877
    %v3036 = vunpack.c.h.b16 %v877
    %v3037 = vunpack.c.l.b16 %v878
    %v3038 = vunpack.c.h.b16 %v878
    %v3039 = vunpack.c.l.b16 %v879
    %v3040 = vunpack.c.h.b16 %v879
    %v3041 = vunpack.c.l.b16 %v880
    %v3042 = vunpack.c.h.b16 %v880
    %v3043 = vunpack.c.l.b16 %v881
    %v3044 = vunpack.c.h.b16 %v881
    %v3045 = vunpack.c.l.b16 %v882
    %v3046 = vunpack.c.h.b16 %v882
    %v3047 = vunpack.c.l.b16 %v883
    %v3048 = vunpack.c.h.b16 %v883
    %v3049 = vunpack.c.l.b16 %v884
    %v3050 = vunpack.c.h.b16 %v884
    %v3051 = vunpack.c.l.b16 %v885
    %v3052 = vunpack.c.h.b16 %v885
    %v3053 = vunpack.c.l.b16 %v886
    %v3054 = vunpack.c.h.b16 %v886
    %v3055 = vunpack.c.l.b16 %v887
    %v3056 = vunpack.c.h.b16 %v887
    %v3057 = vunpack.c.l.b16 %v888
    %v3058 = vunpack.c.h.b16 %v888
    %v3059 = vunpack.c.l.b16 %v889
    %v3060 = vunpack.c.h.b16 %v889
    %v3061 = vunpack.c.l.b16 %v890
    %v3062 = vunpack.c.h.b16 %v890
    %v3063 = vunpack.c.l.b16 %v891
    %v3064 = vunpack.c.h.b16 %v891
    %v3065 = vunpack.c.l.b16 %v892
    %v3066 = vunpack.c.h.b16 %v892
    %v3067 = vunpack.c.l.b16 %v893
    %v3068 = vunpack.c.h.b16 %v893
    %v3069 = vunpack.c.l.b16 %v894
    %v3070 = vunpack.c.h.b16 %v894
    %v3071 = vunpack.c.l.b16 %v895
    %v3072 = vunpack.c.h.b16 %v895
    %v3073 = vunpack.c.l.b16 %v896
    %v3074 = vunpack.c.h.b16 %v896
    %v3075 = vunpack.c.l.b16 %v897
    %v3076 = vunpack.c.h.b16 %v897
    %v3077 = vunpack.c.l.b16 %v898
    %v3078 = vunpack.c.h.b16 %v898
    %v3079 = vunpack.c.l.b16 %v899
    %v3080 = vunpack.c.h.b16 %v899
    %v3081 = vunpack.c.l.b16 %v900
    %v3082 = vunpack.c.h.b16 %v900
    %v3083 = vunpack.c.l.b16 %v901
    %v3084 = vunpack.c.h.b16 %v901
    %v3085 = vunpack.c.l.b16 %v902
    %v3086 = vunpack.c.h.b16 %v902
    %v3087 = vunpack.c.l.b16 %v903
    %v3088 = vunpack.c.h.b16 %v903
    %v3089 = vunpack.c.l.b16 %v904
    %v3090 = vunpack.c.h.b16 %v904
    %v3091 = vunpack.c.l.b16 %v905
    %v3092 = vunpack.c.h.b16 %v905
    %v3093 = vunpack.c.l.b16 %v906
    %v3094 = vunpack.c.h.b16 %v906
    %v3095 = vunpack.c.l.b16 %v907
    %v3096 = vunpack.c.h.b16 %v907
    %v3097 = vunpack.c.l.b16 %v908
    %v3098 = vunpack.c.h.b16 %v908
    %v3099 = vunpack.c.l.b16 %v909
    %v3100 = vunpack.c.h.b16 %v909
    %v3101 = vunpack.c.l.b16 %v910
    %v3102 = vunpack.c.h.b16 %v910
    %v3103 = vunpack.c.l.b16 %v911
    %v3104 = vunpack.c.h.b16 %v911
    %v3105 = vunpack.c.l.b16 %v912
    %v3106 = vunpack.c.h.b16 %v912
    %v3107 = vunpack.c.l.b16 %v913
    %v3108 = vunpack.c.h.b16 %v913
    %v3109 = vunpack.c.l.b16 %v914
    %v3110 = vunpack.c.h.b16 %v914
    %v3111 = vunpack.c.l.b16 %v915
    %v3112 = vunpack.c.h.b16 %v915
    %v3113 = vunpack.c.l.b16 %v916
    %v3114 = vunpack.c.h.b16 %v916
    %v3115 = vunpack.c.l.b16 %v917
    %v3116 = vunpack.c.h.b16 %v917
    %v3117 = vunpack.c.l.b16 %v918
    %v3118 = vunpack.c.h.b16 %v918
    %v3119 = vunpack.c.l.b16 %v919
    %v3120 = vunpack.c.h.b16 %v919
    %v3121 = vunpack.c.l.b16 %v920
    %v3122 = vunpack.c.h.b16 %v920
    %v3123 = vunpack.c.l.b16 %v921
    %v3124 = vunpack.c.h.b16 %v921
    %v3125 = vunpack.c.l.b16 %v922
    %v3126 = vunpack.c.h.b16 %v922
    %v3127 = vunpack.c.l.b16 %v923
    %v3128 = vunpack.c.h.b16 %v923
    %v3129 = vunpack.c.l.b16 %v924
    %v3130 = vunpack.c.h.b16 %v924
    %v3131 = vunpack.c.l.b16 %v925
    %v3132 = vunpack.c.h.b16 %v925
    %v3133 = vunpack.c.l.b16 %v926
    %v3134 = vunpack.c.h.b16 %v926
    %v3135 = vunpack.c.l.b16 %v927
    %v3136 = vunpack.c.h.b16 %v927
    %v3137 = vunpack.c.l.b16 %v928
    %v3138 = vunpack.c.h.b16 %v928
    %v3139 = vunpack.c.l.b16 %v929
    %v3140 = vunpack.c.h.b16 %v929
    %v3141 = vunpack.c.l.b16 %v930
    %v3142 = vunpack.c.h.b16 %v930
    %v3143 = vunpack.c.l.b16 %v931
    %v3144 = vunpack.c.h.b16 %v931
    %v3145 = vunpack.c.l.b16 %v932
    %v3146 = vunpack.c.h.b16 %v932
    %v3147 = vunpack.c.l.b16 %v933
    %v3148 = vunpack.c.h.b16 %v933
    %v3149 = vunpack.c.l.b16 %v934
    %v3150 = vunpack.c.h.b16 %v934
    %v3151 = vunpack.c.l.b16 %v935
    %v3152 = vunpack.c.h.b16 %v935
    %v3153 = vunpack.c.l.b16 %v936
    %v3154 = vunpack.c.h.b16 %v936
    %v3155 = vunpack.c.l.b16 %v937
    %v3156 = vunpack.c.h.b16 %v937
    %v3157 = vunpack.c.l.b16 %v938
    %v3158 = vunpack.c.h.b16 %v938
    %v3159 = vunpack.c.l.b16 %v939
    %v3160 = vunpack.c.h.b16 %v939
    %v3161 = vunpack.c.l.b16 %v940
    %v3162 = vunpack.c.h.b16 %v940
    %v3163 = vunpack.c.l.b16 %v941
    %v3164 = vunpack.c.h.b16 %v941
    %v3165 = vunpack.c.l.b16 %v942
    %v3166 = vunpack.c.h.b16 %v942
    %v3167 = vunpack.c.l.b16 %v943
    %v3168 = vunpack.c.h.b16 %v943
    %v3169 = vunpack.c.l.b16 %v944
    %v3170 = vunpack.c.h.b16 %v944
    %v3171 = vunpack.c.l.b16 %v945
    %v3172 = vunpack.c.h.b16 %v945
    %v3173 = vunpack.c.l.b16 %v946
    %v3174 = vunpack.c.h.b16 %v946
    %v3175 = vunpack.c.l.b16 %v947
    %v3176 = vunpack.c.h.b16 %v947
    %v3177 = vunpack.c.l.b16 %v948
    %v3178 = vunpack.c.h.b16 %v948
    %v3179 = vunpack.c.l.b16 %v949
    %v3180 = vunpack.c.h.b16 %v949
    %v3181 = vunpack.c.l.b16 %v950
    %v3182 = vunpack.c.h.b16 %v950
    %v3183 = vunpack.c.l.b16 %v951
    %v3184 = vunpack.c.h.b16 %v951
    %v3185 = vunpack.c.l.b16 %v952
    %v3186 = vunpack.c.h.b16 %v952
    %v3187 = vunpack.c.l.b16 %v953
    %v3188 = vunpack.c.h.b16 %v953
    %v3189 = vunpack.c.l.b16 %v954
    %v3190 = vunpack.c.h.b16 %v954
    %v3191 = vunpack.c.l.b16 %v955
    %v3192 = vunpack.c.h.b16 %v955
    %v3193 = vunpack.c.l.b16 %v956
    %v3194 = vunpack.c.h.b16 %v956
    %v3195 = vunpack.c.l.b16 %v957
    %v3196 = vunpack.c.h.b16 %v957
    %v3197 = vunpack.c.l.b16 %v958
    %v3198 = vunpack.c.h.b16 %v958
    %v3199 = vunpack.c.l.b16 %v959
    %v3200 = vunpack.c.h.b16 %v959
    %v3201 = vunpack.c.l.b16 %v960
    %v3202 = vunpack.c.h.b16 %v960
    %v3203 = vunpack.c.l.b16 %v961
    %v3204 = vunpack.c.h.b16 %v961
    %v3205 = vunpack.c.l.b16 %v962
    %v3206 = vunpack.c.h.b16 %v962
    %v3207 = vunpack.c.l.b16 %v963
    %v3208 = vunpack.c.h.b16 %v963
    %v3209 = vunpack.c.l.b16 %v964
    %v3210 = vunpack.c.h.b16 %v964
    %v3211 = vunpack.c.l.b16 %v965
    %v3212 = vunpack.c.h.b16 %v965
    %v3213 = vunpack.c.l.b16 %v966
    %v3214 = vunpack.c.h.b16 %v966
    %v3215 = vunpack.c.l.b16 %v967
    %v3216 = vunpack.c.h.b16 %v967
    %v3217 = vunpack.c.l.b16 %v968
    %v3218 = vunpack.c.h.b16 %v968
    %v3219 = vunpack.c.l.b16 %v969
    %v3220 = vunpack.c.h.b16 %v969
    %v3221 = vunpack.c.l.b16 %v970
    %v3222 = vunpack.c.h.b16 %v970
    %v3223 = vunpack.c.l.b16 %v971
    %v3224 = vunpack.c.h.b16 %v971
    %v3225 = vunpack.c.l.b16 %v972
    %v3226 = vunpack.c.h.b16 %v972
    %v3227 = vunpack.c.l.b16 %v973
    %v3228 = vunpack.c.h.b16 %v973
    %v3229 = vunpack.c.l.b16 %v974
    %v3230 = vunpack.c.h.b16 %v974
    %v3231 = vunpack.c.l.b16 %v975
    %v3232 = vunpack.c.h.b16 %v975
    %v3233 = vunpack.c.l.b16 %v976
    %v3234 = vunpack.c.h.b16 %v976
    %v3235 = vunpack.c.l.b16 %v977
    %v3236 = vunpack.c.h.b16 %v977
    %v3237 = vunpack.c.l.b16 %v978
    %v3238 = vunpack.c.h.b16 %v978
    %v3239 = vunpack.c.l.b16 %v979
    %v3240 = vunpack.c.h.b16 %v979
    %v3241 = vunpack.c.l.b16 %v980
    %v3242 = vunpack.c.h.b16 %v980
    %v3243 = vunpack.c.l.b16 %v981
    %v3244 = vunpack.c.h.b16 %v981
    %v3245 = vunpack.c.l.b16 %v982
    %v3246 = vunpack.c.h.b16 %v982
    %v3247 = vunpack.c.l.b16 %v983
    %v3248 = vunpack.c.h.b16 %v983
    %v3249 = vunpack.c.l.b16 %v984
    %v3250 = vunpack.c.h.b16 %v984
    %v3251 = vunpack.c.l.b16 %v985
    %v3252 = vunpack.c.h.b16 %v985
    %v3253 = vunpack.c.l.b16 %v986
    %v3254 = vunpack.c.h.b16 %v986
    %v3255 = vunpack.c.l.b16 %v987
    %v3256 = vunpack.c.h.b16 %v987
    %v3257 = vunpack.c.l.b16 %v988
    %v3258 = vunpack.c.h.b16 %v988
    %v3259 = vunpack.c.l.b16 %v989
    %v3260 = vunpack.c.h.b16 %v989
    %v3261 = vunpack.c.l.b16 %v990
    %v3262 = vunpack.c.h.b16 %v990
    %v3263 = vunpack.c.l.b16 %v991
    %v3264 = vunpack.c.h.b16 %v991
    %v3265 = vunpack.c.l.b16 %v992
    %v3266 = vunpack.c.h.b16 %v992
    %v3267 = vunpack.c.l.b16 %v993
    %v3268 = vunpack.c.h.b16 %v993
    %v3269 = vunpack.c.l.b16 %v994
    %v3270 = vunpack.c.h.b16 %v994
    %v3271 = vunpack.c.l.b16 %v995
    %v3272 = vunpack.c.h.b16 %v995
    %v3273 = vunpack.c.l.b16 %v996
    %v3274 = vunpack.c.h.b16 %v996
    %v3275 = vunpack.c.l.b16 %v997
    %v3276 = vunpack.c.h.b16 %v997
    %v3277 = vunpack.c.l.b16 %v998
    %v3278 = vunpack.c.h.b16 %v998
    %v3279 = vunpack.c.l.b16 %v999
    %v3280 = vunpack.c.h.b16 %v999
    %v3281 = vunpack.c.l.b16 %v1000
    %v3282 = vunpack.c.h.b16 %v1000
    %v3283 = vunpack.c.l.b16 %v1001
    %v3284 = vunpack.c.h.b16 %v1001
    %v3285 = vunpack.c.l.b16 %v1002
    %v3286 = vunpack.c.h.b16 %v1002
    %v3287 = vunpack.c.l.b16 %v1003
    %v3288 = vunpack.c.h.b16 %v1003
    %v3289 = vunpack.c.l.b16 %v1004
    %v3290 = vunpack.c.h.b16 %v1004
    %v3291 = vunpack.c.l.b16 %v1005
    %v3292 = vunpack.c.h.b16 %v1005
    %v3293 = vunpack.c.l.b16 %v1006
    %v3294 = vunpack.c.h.b16 %v1006
    %v3295 = vunpack.c.l.b16 %v1007
    %v3296 = vunpack.c.h.b16 %v1007
    %v3297 = vunpack.c.l.b16 %v1008
    %v3298 = vunpack.c.h.b16 %v1008
    %v3299 = vunpack.c.l.b16 %v1009
    %v3300 = vunpack.c.h.b16 %v1009
    %v3301 = vunpack.c.l.b16 %v1010
    %v3302 = vunpack.c.h.b16 %v1010
    %v3303 = vunpack.c.l.b16 %v1011
    %v3304 = vunpack.c.h.b16 %v1011
    %v3305 = vunpack.c.l.b16 %v1012
    %v3306 = vunpack.c.h.b16 %v1012
    %v3307 = vunpack.c.l.b16 %v1013
    %v3308 = vunpack.c.h.b16 %v1013
    %v3309 = vunpack.c.l.b16 %v1014
    %v3310 = vunpack.c.h.b16 %v1014
    %v3311 = vunpack.c.l.b16 %v1015
    %v3312 = vunpack.c.h.b16 %v1015
    %v3313 = vunpack.c.l.b16 %v1016
    %v3314 = vunpack.c.h.b16 %v1016
    %v3315 = vunpack.c.l.b16 %v1017
    %v3316 = vunpack.c.h.b16 %v1017
    %v3317 = vunpack.c.l.b16 %v1018
    %v3318 = vunpack.c.h.b16 %v1018
    %v3319 = vunpack.c.l.b16 %v1019
    %v3320 = vunpack.c.h.b16 %v1019
    %v3321 = vunpack.c.l.b16 %v1020
    %v3322 = vunpack.c.h.b16 %v1020
    %v3323 = vunpack.c.l.b16 %v1021
    %v3324 = vunpack.c.h.b16 %v1021
    %v3325 = vunpack.c.l.b16 %v1022
    %v3326 = vunpack.c.h.b16 %v1022
    %v3327 = vunpack.c.l.b16 %v1023
    %v3328 = vunpack.c.h.b16 %v1023
    %v3329 = vunpack.c.l.b16 %v1024
    %v3330 = vunpack.c.h.b16 %v1024
    %v3331 = vunpack.c.l.b16 %v1025
    %v3332 = vunpack.c.h.b16 %v1025
    %v3333 = vunpack.c.l.b16 %v1026
    %v3334 = vunpack.c.h.b16 %v1026
    %v3335 = vunpack.c.l.b16 %v1027
    %v3336 = vunpack.c.h.b16 %v1027
    %v3337 = vunpack.c.l.b16 %v1028
    %v3338 = vunpack.c.h.b16 %v1028
    %v3339 = vunpack.c.l.b16 %v1029
    %v3340 = vunpack.c.h.b16 %v1029
    %v3341 = vunpack.c.l.b16 %v1030
    %v3342 = vunpack.c.h.b16 %v1030
    %v3343 = vunpack.c.l.b16 %v1031
    %v3344 = vunpack.c.h.b16 %v1031
    %v3345 = vunpack.c.l.b16 %v1032
    %v3346 = vunpack.c.h.b16 %v1032
    %v3347 = vunpack.c.l.b16 %v1033
    %v3348 = vunpack.c.h.b16 %v1033
    %v3349 = vunpack.c.l.b16 %v1034
    %v3350 = vunpack.c.h.b16 %v1034
    %v3351 = vunpack.c.l.b16 %v1035
    %v3352 = vunpack.c.h.b16 %v1035
    %v3353 = vunpack.c.l.b16 %v1036
    %v3354 = vunpack.c.h.b16 %v1036
    %v3355 = vunpack.c.l.b16 %v1037
    %v3356 = vunpack.c.h.b16 %v1037
    %v3357 = vunpack.c.l.b16 %v1038
    %v3358 = vunpack.c.h.b16 %v1038
    %v3359 = vunpack.c.l.b16 %v1039
    %v3360 = vunpack.c.h.b16 %v1039
    %v3361 = vunpack.c.l.b16 %v1040
    %v3362 = vunpack.c.h.b16 %v1040
    %v3363 = vunpack.c.l.b16 %v1041
    %v3364 = vunpack.c.h.b16 %v1041
    %v3365 = vunpack.c.l.b16 %v1042
    %v3366 = vunpack.c.h.b16 %v1042
    %v3367 = vunpack.c.l.b16 %v1043
    %v3368 = vunpack.c.h.b16 %v1043
    %v3369 = vunpack.c.l.b16 %v1044
    %v3370 = vunpack.c.h.b16 %v1044
    %v3371 = vpack.c.b16 %v1839, %v1835
    %v3372 = vpack.c.b16 %v1840, %v1836
    %v3373 = vpack.c.b16 %v1841, %v1837
    %v3374 = vpack.c.b16 %v1842, %v1838
    %v3375 = vpack.c.b16 %v1847, %v1843
    %v3376 = vpack.c.b16 %v1848, %v1844
    %v3377 = vpack.c.b16 %v1849, %v1845
    %v3378 = vpack.c.b16 %v1850, %v1846
    %v3379 = vpack.c.b16 %v1855, %v1851
    %v3380 = vpack.c.b16 %v1856, %v1852
    %v3381 = vpack.c.b16 %v1857, %v1853
    %v3382 = vpack.c.b16 %v1858, %v1854
    %v3383 = vpack.c.b16 %v1863, %v1859
    %v3384 = vpack.c.b16 %v1864, %v1860
    %v3385 = vpack.c.b16 %v1865, %v1861
    %v3386 = vpack.c.b16 %v1866, %v1862
    %v3387 = vpack.c.b16 %v1871, %v1867
    %v3388 = vpack.c.b16 %v1872, %v1868
    %v3389 = vpack.c.b16 %v1873, %v1869
    %v3390 = vpack.c.b16 %v1874, %v1870
    %v3391 = vpack.c.b16 %v1879, %v1875
    %v3392 = vpack.c.b16 %v1880, %v1876
    %v3393 = vpack.c.b16 %v1881, %v1877
    %v3394 = vpack.c.b16 %v1882, %v1878
    %v3395 = vpack.c.b16 %v1887, %v1883
    %v3396 = vpack.c.b16 %v1888, %v1884
    %v3397 = vpack.c.b16 %v1889, %v1885
    %v3398 = vpack.c.b16 %v1890, %v1886
    %v3399 = vpack.c.b16 %v1895, %v1891
    %v3400 = vpack.c.b16 %v1896, %v1892
    %v3401 = vpack.c.b16 %v1897, %v1893
    %v3402 = vpack.c.b16 %v1898, %v1894
    %v3403 = vpack.c.b16 %v1903, %v1899
    %v3404 = vpack.c.b16 %v1904, %v1900
    %v3405 = vpack.c.b16 %v1905, %v1901
    %v3406 = vpack.c.b16 %v1906, %v1902
    %v3407 = vpack.c.b16 %v1911, %v1907
    %v3408 = vpack.c.b16 %v1912, %v1908
    %v3409 = vpack.c.b16 %v1913, %v1909
    %v3410 = vpack.c.b16 %v1914, %v1910
    %v3411 = vpack.c.b16 %v1919, %v1915
    %v3412 = vpack.c.b16 %v1920, %v1916
    %v3413 = vpack.c.b16 %v1921, %v1917
    %v3414 = vpack.c.b16 %v1922, %v1918
    %v3415 = vpack.c.b16 %v1927, %v1923
    %v3416 = vpack.c.b16 %v1928, %v1924
    %v3417 = vpack.c.b16 %v1929, %v1925
    %v3418 = vpack.c.b16 %v1930, %v1926
    %v3419 = vpack.c.b16 %v1935, %v1931
    %v3420 = vpack.c.b16 %v1936, %v1932
    %v3421 = vpack.c.b16 %v1937, %v1933
    %v3422 = vpack.c.b16 %v1938, %v1934
    %v3423 = vpack.c.b16 %v1943, %v1939
    %v3424 = vpack.c.b16 %v1944, %v1940
    %v3425 = vpack.c.b16 %v1945, %v1941
    %v3426 = vpack.c.b16 %v1946, %v1942
    %v3427 = vpack.c.b16 %v1951, %v1947
    %v3428 = vpack.c.b16 %v1952, %v1948
    %v3429 = vpack.c.b16 %v1953, %v1949
    %v3430 = vpack.c.b16 %v1954, %v1950
    %v3431 = vpack.c.b16 %v1959, %v1955
    %v3432 = vpack.c.b16 %v1960, %v1956
    %v3433 = vpack.c.b16 %v1961, %v1957
    %v3434 = vpack.c.b16 %v1962, %v1958
    %v3435 = vpack.c.b16 %v1967, %v1963
    %v3436 = vpack.c.b16 %v1968, %v1964
    %v3437 = vpack.c.b16 %v1969, %v1965
    %v3438 = vpack.c.b16 %v1970, %v1966
    %v3439 = vpack.c.b16 %v1975, %v1971
    %v3440 = vpack.c.b16 %v1976, %v1972
    %v3441 = vpack.c.b16 %v1977, %v1973
    %v3442 = vpack.c.b16 %v1978, %v1974
    %v3443 = vpack.c.b16 %v1983, %v1979
    %v3444 = vpack.c.b16 %v1984, %v1980
    %v3445 = vpack.c.b16 %v1985, %v1981
    %v3446 = vpack.c.b16 %v1986, %v1982
    %v3447 = vpack.c.b16 %v1991, %v1987
    %v3448 = vpack.c.b16 %v1992, %v1988
    %v3449 = vpack.c.b16 %v1993, %v1989
    %v3450 = vpack.c.b16 %v1994, %v1990
    %v3451 = vpack.c.b16 %v1999, %v1995
    %v3452 = vpack.c.b16 %v2000, %v1996
    %v3453 = vpack.c.b16 %v2001, %v1997
    %v3454 = vpack.c.b16 %v2002, %v1998
    %v3455 = vpack.c.b16 %v2007, %v2003
    %v3456 = vpack.c.b16 %v2008, %v2004
    %v3457 = vpack.c.b16 %v2009, %v2005
    %v3458 = vpack.c.b16 %v2010, %v2006
    %v3459 = vpack.c.b16 %v2015, %v2011
    %v3460 = vpack.c.b16 %v2016, %v2012
    %v3461 = vpack.c.b16 %v2017, %v2013
    %v3462 = vpack.c.b16 %v2018, %v2014
    %v3463 = vpack.c.b16 %v2023, %v2019
    %v3464 = vpack.c.b16 %v2024, %v2020
    %v3465 = vpack.c.b16 %v2025, %v2021
    %v3466 = vpack.c.b16 %v2026, %v2022
    %v3467 = vpack.c.b16 %v2031, %v2027
    %v3468 = vpack.c.b16 %v2032, %v2028
    %v3469 = vpack.c.b16 %v2033, %v2029
    %v3470 = vpack.c.b16 %v2034, %v2030
    %v3471 = vpack.c.b16 %v2039, %v2035
    %v3472 = vpack.c.b16 %v2040, %v2036
    %v3473 = vpack.c.b16 %v2041, %v2037
    %v3474 = vpack.c.b16 %v2042, %v2038
    %v3475 = vpack.c.b16 %v2047, %v2043
    %v3476 = vpack.c.b16 %v2048, %v2044
    %v3477 = vpack.c.b16 %v2049, %v2045
    %v3478 = vpack.c.b16 %v2050, %v2046
    %v3479 = vpack.c.b16 %v2055, %v2051
    %v3480 = vpack.c.b16 %v2056, %v2052
    %v3481 = vpack.c.b16 %v2057, %v2053
    %v3482 = vpack.c.b16 %v2058, %v2054
    %v3483 = vpack.c.b16 %v2063, %v2059
    %v3484 = vpack.c.b16 %v2064, %v2060
    %v3485 = vpack.c.b16 %v2065, %v2061
    %v3486 = vpack.c.b16 %v2066, %v2062
    %v3487 = vpack.c.b16 %v2071, %v2067
    %v3488 = vpack.c.b16 %v2072, %v2068
    %v3489 = vpack.c.b16 %v2073, %v2069
    %v3490 = vpack.c.b16 %v2074, %v2070
    %v3491 = vpack.c.b16 %v2079, %v2075
    %v3492 = vpack.c.b16 %v2080, %v2076
    %v3493 = vpack.c.b16 %v2081, %v2077
    %v3494 = vpack.c.b16 %v2082, %v2078
    %v3495 = vpack.c.b16 %v2087, %v2083
    %v3496 = vpack.c.b16 %v2088, %v2084
    %v3497 = vpack.c.b16 %v2089, %v2085
    %v3498 = vpack.c.b16 %v2090, %v2086
    %v3499 = vpack.c.b16 %v2095, %v2091
    %v3500 = vpack.c.b16 %v2096, %v2092
    %v3501 = vpack.c.b16 %v2097, %v2093
    %v3502 = vpack.c.b16 %v2098, %v2094
    %v3503 = vpack.c.b16 %v2103, %v2099
    %v3504 = vpack.c.b16 %v2104, %v2100
    %v3505 = vpack.c.b16 %v2105, %v2101
    %v3506 = vpack.c.b16 %v2106, %v2102
    %v3507 = vpack.c.b16 %v2111, %v2107
    %v3508 = vpack.c.b16 %v2112, %v2108
    %v3509 = vpack.c.b16 %v2113, %v2109
    %v3510 = vpack.c.b16 %v2114, %v2110
    %v3511 = vpack.c.b16 %v2119, %v2115
    %v3512 = vpack.c.b16 %v2120, %v2116
    %v3513 = vpack.c.b16 %v2121, %v2117
    %v3514 = vpack.c.b16 %v2122, %v2118
    %v3515 = vpack.c.b16 %v2127, %v2123
    %v3516 = vpack.c.b16 %v2128, %v2124
    %v3517 = vpack.c.b16 %v2129, %v2125
    %v3518 = vpack.c.b16 %v2130, %v2126
    %v3519 = vpack.c.b16 %v2135, %v2131
    %v3520 = vpack.c.b16 %v2136, %v2132
    %v3521 = vpack.c.b16 %v2137, %v2133
    %v3522 = vpack.c.b16 %v2138, %v2134
    %v3523 = vpack.c.b16 %v2143, %v2139
    %v3524 = vpack.c.b16 %v2144, %v2140
    %v3525 = vpack.c.b16 %v2145, %v2141
    %v3526 = vpack.c.b16 %v2146, %v2142
    %v3527 = vpack.c.b16 %v2151, %v2147
    %v3528 = vpack.c.b16 %v2152, %v2148
    %v3529 = vpack.c.b16 %v2153, %v2149
    %v3530 = vpack.c.b16 %v2154, %v2150
    %v3531 = vpack.c.b16 %v2159, %v2155
    %v3532 = vpack.c.b16 %v2160, %v2156
    %v3533 = vpack.c.b16 %v2161, %v2157
    %v3534 = vpack.c.b16 %v2162, %v2158
    %v3535 = vpack.c.b16 %v2167, %v2163
    %v3536 = vpack.c.b16 %v2168, %v2164
    %v3537 = vpack.c.b16 %v2169, %v2165
    %v3538 = vpack.c.b16 %v2170, %v2166
    %v3539 = vpack.c.b16 %v2175, %v2171
    %v3540 = vpack.c.b16 %v2176, %v2172
    %v3541 = vpack.c.b16 %v2177, %v2173
    %v3542 = vpack.c.b16 %v2178, %v2174
    %v3543 = vpack.c.b16 %v2183, %v2179
    %v3544 = vpack.c.b16 %v2184, %v2180
    %v3545 = vpack.c.b16 %v2185, %v2181
    %v3546 = vpack.c.b16 %v2186, %v2182
    %v3547 = vpack.c.b16 %v2191, %v2187
    %v3548 = vpack.c.b16 %v2192, %v2188
    %v3549 = vpack.c.b16 %v2193, %v2189
    %v3550 = vpack.c.b16 %v2194, %v2190
    %v3551 = vpack.c.b16 %v2199, %v2195
    %v3552 = vpack.c.b16 %v2200, %v2196
    %v3553 = vpack.c.b16 %v2201, %v2197
    %v3554 = vpack.c.b16 %v2202, %v2198
    %v3555 = vpack.c.b16 %v2207, %v2203
    %v3556 = vpack.c.b16 %v2208, %v2204
    %v3557 = vpack.c.b16 %v2209, %v2205
    %v3558 = vpack.c.b16 %v2210, %v2206
    %v3559 = vpack.c.b16 %v2215, %v2211
    %v3560 = vpack.c.b16 %v2216, %v2212
    %v3561 = vpack.c.b16 %v2217, %v2213
    %v3562 = vpack.c.b16 %v2218, %v2214
    %v3563 = vpack.c.b16 %v2223, %v2219
    %v3564 = vpack.c.b16 %v2224, %v2220
    %v3565 = vpack.c.b16 %v2225, %v2221
    %v3566 = vpack.c.b16 %v2226, %v2222
    %v3567 = vpack.c.b16 %v2231, %v2227
    %v3568 = vpack.c.b16 %v2232, %v2228
    %v3569 = vpack.c.b16 %v2233, %v2229
    %v3570 = vpack.c.b16 %v2234, %v2230
    %v3571 = vpack.c.b16 %v2239, %v2235
    %v3572 = vpack.c.b16 %v2240, %v2236
    %v3573 = vpack.c.b16 %v2241, %v2237
    %v3574 = vpack.c.b16 %v2242, %v2238
    %v3575 = vpack.c.b16 %v2247, %v2243
    %v3576 = vpack.c.b16 %v2248, %v2244
    %v3577 = vpack.c.b16 %v2249, %v2245
    %v3578 = vpack.c.b16 %v2250, %v2246
    %v3579 = vpack.c.b16 %v2255, %v2251
    %v3580 = vpack.c.b16 %v2256, %v2252
    %v3581 = vpack.c.b16 %v2257, %v2253
    %v3582 = vpack.c.b16 %v2258, %v2254
    %v3583 = vpack.c.b16 %v2263, %v2259
    %v3584 = vpack.c.b16 %v2264, %v2260
    %v3585 = vpack.c.b16 %v2265, %v2261
    %v3586 = vpack.c.b16 %v2266, %v2262
    %v3587 = vpack.c.b16 %v2271, %v2267
    %v3588 = vpack.c.b16 %v2272, %v2268
    %v3589 = vpack.c.b16 %v2273, %v2269
    %v3590 = vpack.c.b16 %v2274, %v2270
    %v3591 = vpack.c.b16 %v2279, %v2275
    %v3592 = vpack.c.b16 %v2280, %v2276
    %v3593 = vpack.c.b16 %v2281, %v2277
    %v3594 = vpack.c.b16 %v2282, %v2278
    %v3595 = vpack.c.b16 %v2287, %v2283
    %v3596 = vpack.c.b16 %v2288, %v2284
    %v3597 = vpack.c.b16 %v2289, %v2285
    %v3598 = vpack.c.b16 %v2290, %v2286
    %v3599 = vpack.c.b16 %v2295, %v2291
    %v3600 = vpack.c.b16 %v2296, %v2292
    %v3601 = vpack.c.b16 %v2297, %v2293
    %v3602 = vpack.c.b16 %v2298, %v2294
    %v3603 = vpack.c.b16 %v2303, %v2299
    %v3604 = vpack.c.b16 %v2304, %v2300
    %v3605 = vpack.c.b16 %v2305, %v2301
    %v3606 = vpack.c.b16 %v2306, %v2302
    %v3607 = vpack.c.b16 %v2311, %v2307
    %v3608 = vpack.c.b16 %v2312, %v2308
    %v3609 = vpack.c.b16 %v2313, %v2309
    %v3610 = vpack.c.b16 %v2314, %v2310
    %v3611 = vpack.c.b16 %v2319, %v2315
    %v3612 = vpack.c.b16 %v2320, %v2316
    %v3613 = vpack.c.b16 %v2321, %v2317
    %v3614 = vpack.c.b16 %v2322, %v2318
    %v3615 = vpack.c.b16 %v2327, %v2323
    %v3616 = vpack.c.b16 %v2328, %v2324
    %v3617 = vpack.c.b16 %v2329, %v2325
    %v3618 = vpack.c.b16 %v2330, %v2326
    %v3619 = vpack.c.b16 %v2335, %v2331
    %v3620 = vpack.c.b16 %v2336, %v2332
    %v3621 = vpack.c.b16 %v2337, %v2333
    %v3622 = vpack.c.b16 %v2338, %v2334
    %v3623 = vpack.c.b16 %v2343, %v2339
    %v3624 = vpack.c.b16 %v2344, %v2340
    %v3625 = vpack.c.b16 %v2345, %v2341
    %v3626 = vpack.c.b16 %v2346, %v2342
    %v3627 = vpack.c.b16 %v2351, %v2347
    %v3628 = vpack.c.b16 %v2352, %v2348
    %v3629 = vpack.c.b16 %v2353, %v2349
    %v3630 = vpack.c.b16 %v2354, %v2350
    %v3631 = vpack.c.b16 %v2359, %v2355
    %v3632 = vpack.c.b16 %v2360, %v2356
    %v3633 = vpack.c.b16 %v2361, %v2357
    %v3634 = vpack.c.b16 %v2362, %v2358
    %v3635 = vpack.c.b16 %v2367, %v2363
    %v3636 = vpack.c.b16 %v2368, %v2364
    %v3637 = vpack.c.b16 %v2369, %v2365
    %v3638 = vpack.c.b16 %v2370, %v2366
    %v3639 = vpack.c.b16 %v2375, %v2371
    %v3640 = vpack.c.b16 %v2376, %v2372
    %v3641 = vpack.c.b16 %v2377, %v2373
    %v3642 = vpack.c.b16 %v2378, %v2374
    %v3643 = vpack.c.b16 %v2383, %v2379
    %v3644 = vpack.c.b16 %v2384, %v2380
    %v3645 = vpack.c.b16 %v2385, %v2381
    %v3646 = vpack.c.b16 %v2386, %v2382
    %v3647 = vpack.c.b16 %v2391, %v2387
    %v3648 = vpack.c.b16 %v2392, %v2388
    %v3649 = vpack.c.b16 %v2393, %v2389
    %v3650 = vpack.c.b16 %v2394, %v2390
    %v3651 = vpack.c.b16 %v2399, %v2395
    %v3652 = vpack.c.b16 %v2400, %v2396
    %v3653 = vpack.c.b16 %v2401, %v2397
    %v3654 = vpack.c.b16 %v2402, %v2398
    %v3655 = vpack.c.b16 %v2407, %v2403
    %v3656 = vpack.c.b16 %v2408, %v2404
    %v3657 = vpack.c.b16 %v2409, %v2405
    %v3658 = vpack.c.b16 %v2410, %v2406
    %v3659 = vpack.c.b16 %v2415, %v2411
    %v3660 = vpack.c.b16 %v2416, %v2412
    %v3661 = vpack.c.b16 %v2417, %v2413
    %v3662 = vpack.c.b16 %v2418, %v2414
    %v3663 = vpack.c.b16 %v2423, %v2419
    %v3664 = vpack.c.b16 %v2424, %v2420
    %v3665 = vpack.c.b16 %v2425, %v2421
    %v3666 = vpack.c.b16 %v2426, %v2422
    %v3667 = vpack.c.b16 %v2431, %v2427
    %v3668 = vpack.c.b16 %v2432, %v2428
    %v3669 = vpack.c.b16 %v2433, %v2429
    %v3670 = vpack.c.b16 %v2434, %v2430
    %v3671 = vpack.c.b16 %v2439, %v2435
    %v3672 = vpack.c.b16 %v2440, %v2436
    %v3673 = vpack.c.b16 %v2441, %v2437
    %v3674 = vpack.c.b16 %v2442, %v2438
    %v3675 = vpack.c.b16 %v2447, %v2443
    %v3676 = vpack.c.b16 %v2448, %v2444
    %v3677 = vpack.c.b16 %v2449, %v2445
    %v3678 = vpack.c.b16 %v2450, %v2446
    %v3679 = vpack.c.b16 %v2455, %v2451
    %v3680 = vpack.c.b16 %v2456, %v2452
    %v3681 = vpack.c.b16 %v2457, %v2453
    %v3682 = vpack.c.b16 %v2458, %v2454
    %v3683 = vpack.c.b16 %v2463, %v2459
    %v3684 = vpack.c.b16 %v2464, %v2460
    %v3685 = vpack.c.b16 %v2465, %v2461
    %v3686 = vpack.c.b16 %v2466, %v2462
    %v3687 = vpack.c.b16 %v2471, %v2467
    %v3688 = vpack.c.b16 %v2472, %v2468
    %v3689 = vpack.c.b16 %v2473, %v2469
    %v3690 = vpack.c.b16 %v2474, %v2470
    %v3691 = vpack.c.b16 %v2479, %v2475
    %v3692 = vpack.c.b16 %v2480, %v2476
    %v3693 = vpack.c.b16 %v2481, %v2477
    %v3694 = vpack.c.b16 %v2482, %v2478
    %v3695 = vpack.c.b16 %v2487, %v2483
    %v3696 = vpack.c.b16 %v2488, %v2484
    %v3697 = vpack.c.b16 %v2489, %v2485
    %v3698 = vpack.c.b16 %v2490, %v2486
    %v3699 = vpack.c.b16 %v2495, %v2491
    %v3700 = vpack.c.b16 %v2496, %v2492
    %v3701 = vpack.c.b16 %v2497, %v2493
    %v3702 = vpack.c.b16 %v2498, %v2494
    %v3703 = vpack.c.b16 %v2503, %v2499
    %v3704 = vpack.c.b16 %v2504, %v2500
    %v3705 = vpack.c.b16 %v2505, %v2501
    %v3706 = vpack.c.b16 %v2506, %v2502
    %v3707 = vpack.c.b16 %v2511, %v2507
    %v3708 = vpack.c.b16 %v2512, %v2508
    %v3709 = vpack.c.b16 %v2513, %v2509
    %v3710 = vpack.c.b16 %v2514, %v2510
    %v3711 = vpack.c.b16 %v2519, %v2515
    %v3712 = vpack.c.b16 %v2520, %v2516
    %v3713 = vpack.c.b16 %v2521, %v2517
    %v3714 = vpack.c.b16 %v2522, %v2518
    %v3715 = vpack.c.b16 %v2527, %v2523
    %v3716 = vpack.c.b16 %v2528, %v2524
    %v3717 = vpack.c.b16 %v2529, %v2525
    %v3718 = vpack.c.b16 %v2530, %v2526
    %v3719 = vpack.c.b16 %v2535, %v2531
    %v3720 = vpack.c.b16 %v2536, %v2532
    %v3721 = vpack.c.b16 %v2537, %v2533
    %v3722 = vpack.c.b16 %v2538, %v2534
    %v3723 = vpack.c.b16 %v2543, %v2539
    %v3724 = vpack.c.b16 %v2544, %v2540
    %v3725 = vpack.c.b16 %v2545, %v2541
    %v3726 = vpack.c.b16 %v2546, %v2542
    %v3727 = vpack.c.b16 %v2551, %v2547
    %v3728 = vpack.c.b16 %v2552, %v2548
    %v3729 = vpack.c.b16 %v2553, %v2549
    %v3730 = vpack.c.b16 %v2554, %v2550
    %v3731 = vpack.c.b16 %v2559, %v2555
    %v3732 = vpack.c.b16 %v2560, %v2556
    %v3733 = vpack.c.b16 %v2561, %v2557
    %v3734 = vpack.c.b16 %v2562, %v2558
    %v3735 = vpack.c.b16 %v2567, %v2563
    %v3736 = vpack.c.b16 %v2568, %v2564
    %v3737 = vpack.c.b16 %v2569, %v2565
    %v3738 = vpack.c.b16 %v2570, %v2566
    %v3739 = vpack.c.b16 %v2575, %v2571
    %v3740 = vpack.c.b16 %v2576, %v2572
    %v3741 = vpack.c.b16 %v2577, %v2573
    %v3742 = vpack.c.b16 %v2578, %v2574
    %v3743 = vpack.c.b16 %v2583, %v2579
    %v3744 = vpack.c.b16 %v2584, %v2580
    %v3745 = vpack.c.b16 %v2585, %v2581
    %v3746 = vpack.c.b16 %v2586, %v2582
    %v3747 = vpack.c.b16 %v2591, %v2587
    %v3748 = vpack.c.b16 %v2592, %v2588
    %v3749 = vpack.c.b16 %v2593, %v2589
    %v3750 = vpack.c.b16 %v2594, %v2590
    %v3751 = vpack.c.b16 %v2599, %v2595
    %v3752 = vpack.c.b16 %v2600, %v2596
    %v3753 = vpack.c.b16 %v2601, %v2597
    %v3754 = vpack.c.b16 %v2602, %v2598
    %v3755 = vpack.c.b16 %v2607, %v2603
    %v3756 = vpack.c.b16 %v2608, %v2604
    %v3757 = vpack.c.b16 %v2609, %v2605
    %v3758 = vpack.c.b16 %v2610, %v2606
    %v3759 = vpack.c.b16 %v2615, %v2611
    %v3760 = vpack.c.b16 %v2616, %v2612
    %v3761 = vpack.c.b16 %v2617, %v2613
    %v3762 = vpack.c.b16 %v2618, %v2614
    %v3763 = vpack.c.b16 %v2623, %v2619
    %v3764 = vpack.c.b16 %v2624, %v2620
    %v3765 = vpack.c.b16 %v2625, %v2621
    %v3766 = vpack.c.b16 %v2626, %v2622
    %v3767 = vpack.c.b16 %v2631, %v2627
    %v3768 = vpack.c.b16 %v2632, %v2628
    %v3769 = vpack.c.b16 %v2633, %v2629
    %v3770 = vpack.c.b16 %v2634, %v2630
    %v3771 = vpack.c.b16 %v2639, %v2635
    %v3772 = vpack.c.b16 %v2640, %v2636
    %v3773 = vpack.c.b16 %v2641, %v2637
    %v3774 = vpack.c.b16 %v2642, %v2638
    %v3775 = vpack.c.b16 %v2647, %v2643
    %v3776 = vpack.c.b16 %v2648, %v2644
    %v3777 = vpack.c.b16 %v2649, %v2645
    %v3778 = vpack.c.b16 %v2650, %v2646
    %v3779 = vpack.c.b16 %v2655, %v2651
    %v3780 = vpack.c.b16 %v2656, %v2652
    %v3781 = vpack.c.b16 %v2657, %v2653
    %v3782 = vpack.c.b16 %v2658, %v2654
    %v3783 = vpack.c.b16 %v2663, %v2659
    %v3784 = vpack.c.b16 %v2664, %v2660
    %v3785 = vpack.c.b16 %v2665, %v2661
    %v3786 = vpack.c.b16 %v2666, %v2662
    %v3787 = vpack.c.b16 %v2671, %v2667
    %v3788 = vpack.c.b16 %v2672, %v2668
    %v3789 = vpack.c.b16 %v2673, %v2669
    %v3790 = vpack.c.b16 %v2674, %v2670
    %v3791 = vpack.c.b16 %v2679, %v2675
    %v3792 = vpack.c.b16 %v2680, %v2676
    %v3793 = vpack.c.b16 %v2681, %v2677
    %v3794 = vpack.c.b16 %v2682, %v2678
    %v3795 = vpack.c.b16 %v2687, %v2683
    %v3796 = vpack.c.b16 %v2688, %v2684
    %v3797 = vpack.c.b16 %v2689, %v2685
    %v3798 = vpack.c.b16 %v2690, %v2686
    %v3799 = vpack.c.b16 %v2695, %v2691
    %v3800 = vpack.c.b16 %v2696, %v2692
    %v3801 = vpack.c.b16 %v2697, %v2693
    %v3802 = vpack.c.b16 %v2698, %v2694
    %v3803 = vpack.c.b16 %v2703, %v2699
    %v3804 = vpack.c.b16 %v2704, %v2700
    %v3805 = vpack.c.b16 %v2705, %v2701
    %v3806 = vpack.c.b16 %v2706, %v2702
    %v3807 = vpack.c.b16 %v2711, %v2707
    %v3808 = vpack.c.b16 %v2712, %v2708
    %v3809 = vpack.c.b16 %v2713, %v2709
    %v3810 = vpack.c.b16 %v2714, %v2710
    %v3811 = vpack.c.b16 %v2719, %v2715
    %v3812 = vpack.c.b16 %v2720, %v2716
    %v3813 = vpack.c.b16 %v2721, %v2717
    %v3814 = vpack.c.b16 %v2722, %v2718
    %v3815 = vpack.c.b16 %v2727, %v2723
    %v3816 = vpack.c.b16 %v2728, %v2724
    %v3817 = vpack.c.b16 %v2729, %v2725
    %v3818 = vpack.c.b16 %v2730, %v2726
    %v3819 = vpack.c.b16 %v2735, %v2731
    %v3820 = vpack.c.b16 %v2736, %v2732
    %v3821 = vpack.c.b16 %v2737, %v2733
    %v3822 = vpack.c.b16 %v2738, %v2734
    %v3823 = vpack.c.b16 %v2743, %v2739
    %v3824 = vpack.c.b16 %v2744, %v2740
    %v3825 = vpack.c.b16 %v2745, %v2741
    %v3826 = vpack.c.b16 %v2746, %v2742
    %v3827 = vpack.c.b16 %v2751, %v2747
    %v3828 = vpack.c.b16 %v2752, %v2748
    %v3829 = vpack.c.b16 %v2753, %v2749
    %v3830 = vpack.c.b16 %v2754, %v2750
    %v3831 = vpack.c.b16 %v2759, %v2755
    %v3832 = vpack.c.b16 %v2760, %v2756
    %v3833 = vpack.c.b16 %v2761, %v2757
    %v3834 = vpack.c.b16 %v2762, %v2758
    %v3835 = vpack.c.b16 %v2767, %v2763
    %v3836 = vpack.c.b16 %v2768, %v2764
    %v3837 = vpack.c.b16 %v2769, %v2765
    %v3838 = vpack.c.b16 %v2770, %v2766
    %v3839 = vpack.c.b16 %v2775, %v2771
    %v3840 = vpack.c.b16 %v2776, %v2772
    %v3841 = vpack.c.b16 %v2777, %v2773
    %v3842 = vpack.c.b16 %v2778, %v2774
    %v3843 = vpack.c.b16 %v2783, %v2779
    %v3844 = vpack.c.b16 %v2784, %v2780
    %v3845 = vpack.c.b16 %v2785, %v2781
    %v3846 = vpack.c.b16 %v2786, %v2782
    %v3847 = vpack.c.b16 %v2791, %v2787
    %v3848 = vpack.c.b16 %v2792, %v2788
    %v3849 = vpack.c.b16 %v2793, %v2789
    %v3850 = vpack.c.b16 %v2794, %v2790
    %v3851 = vpack.c.b16 %v2799, %v2795
    %v3852 = vpack.c.b16 %v2800, %v2796
    %v3853 = vpack.c.b16 %v2801, %v2797
    %v3854 = vpack.c.b16 %v2802, %v2798
    %v3855 = vpack.c.b16 %v2807, %v2803
    %v3856 = vpack.c.b16 %v2808, %v2804
    %v3857 = vpack.c.b16 %v2809, %v2805
    %v3858 = vpack.c.b16 %v2810, %v2806
    %v3859 = vpack.c.b16 %v2815, %v2811
    %v3860 = vpack.c.b16 %v2816, %v2812
    %v3861 = vpack.c.b16 %v2817, %v2813
    %v3862 = vpack.c.b16 %v2818, %v2814
    %v3863 = vpack.c.b16 %v2823, %v2819
    %v3864 = vpack.c.b16 %v2824, %v2820
    %v3865 = vpack.c.b16 %v2825, %v2821
    %v3866 = vpack.c.b16 %v2826, %v2822
    %v3867 = vpack.c.b16 %v2831, %v2827
    %v3868 = vpack.c.b16 %v2832, %v2828
    %v3869 = vpack.c.b16 %v2833, %v2829
    %v3870 = vpack.c.b16 %v2834, %v2830
    %v3871 = vpack.c.b16 %v2839, %v2835
    %v3872 = vpack.c.b16 %v2840, %v2836
    %v3873 = vpack.c.b16 %v2841, %v2837
    %v3874 = vpack.c.b16 %v2842, %v2838
    %v3875 = vpack.c.b16 %v2847, %v2843
    %v3876 = vpack.c.b16 %v2848, %v2844
    %v3877 = vpack.c.b16 %v2849, %v2845
    %v3878 = vpack.c.b16 %v2850, %v2846
    %v3879 = vpack.c.b16 %v2855, %v2851
    %v3880 = vpack.c.b16 %v2856, %v2852
    %v3881 = vpack.c.b16 %v2857, %v2853
    %v3882 = vpack.c.b16 %v2858, %v2854
    %v3883 = vpack.c.b16 %v2863, %v2859
    %v3884 = vpack.c.b16 %v2864, %v2860
    %v3885 = vpack.c.b16 %v2865, %v2861
    %v3886 = vpack.c.b16 %v2866, %v2862
    %v3887 = vpack.c.b16 %v2871, %v2867
    %v3888 = vpack.c.b16 %v2872, %v2868
    %v3889 = vpack.c.b16 %v2873, %v2869
    %v3890 = vpack.c.b16 %v2874, %v2870
    %v3891 = vpack.c.b16 %v2879, %v2875
    %v3892 = vpack.c.b16 %v2880, %v2876
    %v3893 = vpack.c.b16 %v2881, %v2877
    %v3894 = vpack.c.b16 %v2882, %v2878
    %v3895 = vpack.c.b16 %v2887, %v2883
    %v3896 = vpack.c.b16 %v2888, %v2884
    %v3897 = vpack.c.b16 %v2889, %v2885
    %v3898 = vpack.c.b16 %v2890, %v2886
    %v3899 = vpack.c.b16 %v2895, %v2891
    %v3900 = vpack.c.b16 %v2896, %v2892
    %v3901 = vpack.c.b16 %v2897, %v2893
    %v3902 = vpack.c.b16 %v2898, %v2894
    %v3903 = vpack.c.b16 %v2903, %v2899
    %v3904 = vpack.c.b16 %v2904, %v2900
    %v3905 = vpack.c.b16 %v2905, %v2901
    %v3906 = vpack.c.b16 %v2906, %v2902
    %v3907 = vpack.c.b16 %v2911, %v2907
    %v3908 = vpack.c.b16 %v2912, %v2908
    %v3909 = vpack.c.b16 %v2913, %v2909
    %v3910 = vpack.c.b16 %v2914, %v2910
    %v3911 = vpack.c.b16 %v2919, %v2915
    %v3912 = vpack.c.b16 %v2920, %v2916
    %v3913 = vpack.c.b16 %v2921, %v2917
    %v3914 = vpack.c.b16 %v2922, %v2918
    %v3915 = vpack.c.b16 %v2927, %v2923
    %v3916 = vpack.c.b16 %v2928, %v2924
    %v3917 = vpack.c.b16 %v2929, %v2925
    %v3918 = vpack.c.b16 %v2930, %v2926
    %v3919 = vpack.c.b16 %v2935, %v2931
    %v3920 = vpack.c.b16 %v2936, %v2932
    %v3921 = vpack.c.b16 %v2937, %v2933
    %v3922 = vpack.c.b16 %v2938, %v2934
    %v3923 = vpack.c.b16 %v2943, %v2939
    %v3924 = vpack.c.b16 %v2944, %v2940
    %v3925 = vpack.c.b16 %v2945, %v2941
    %v3926 = vpack.c.b16 %v2946, %v2942
    %v3927 = vpack.c.b16 %v2951, %v2947
    %v3928 = vpack.c.b16 %v2952, %v2948
    %v3929 = vpack.c.b16 %v2953, %v2949
    %v3930 = vpack.c.b16 %v2954, %v2950
    %v3931 = vpack.c.b16 %v2959, %v2955
    %v3932 = vpack.c.b16 %v2960, %v2956
    %v3933 = vpack.c.b16 %v2961, %v2957
    %v3934 = vpack.c.b16 %v2962, %v2958
    %v3935 = vpack.c.b16 %v2967, %v2963
    %v3936 = vpack.c.b16 %v2968, %v2964
    %v3937 = vpack.c.b16 %v2969, %v2965
    %v3938 = vpack.c.b16 %v2970, %v2966
    %v3939 = vpack.c.b16 %v2975, %v2971
    %v3940 = vpack.c.b16 %v2976, %v2972
    %v3941 = vpack.c.b16 %v2977, %v2973
    %v3942 = vpack.c.b16 %v2978, %v2974
    %v3943 = vpack.c.b16 %v2983, %v2979
    %v3944 = vpack.c.b16 %v2984, %v2980
    %v3945 = vpack.c.b16 %v2985, %v2981
    %v3946 = vpack.c.b16 %v2986, %v2982
    %v3947 = vpack.c.b16 %v2991, %v2987
    %v3948 = vpack.c.b16 %v2992, %v2988
    %v3949 = vpack.c.b16 %v2993, %v2989
    %v3950 = vpack.c.b16 %v2994, %v2990
    %v3951 = vpack.c.b16 %v2999, %v2995
    %v3952 = vpack.c.b16 %v3000, %v2996
    %v3953 = vpack.c.b16 %v3001, %v2997
    %v3954 = vpack.c.b16 %v3002, %v2998
    %v3955 = vpack.c.b16 %v3007, %v3003
    %v3956 = vpack.c.b16 %v3008, %v3004
    %v3957 = vpack.c.b16 %v3009, %v3005
    %v3958 = vpack.c.b16 %v3010, %v3006
    %v3959 = vpack.c.b16 %v3015, %v3011
    %v3960 = vpack.c.b16 %v3016, %v3012
    %v3961 = vpack.c.b16 %v3017, %v3013
    %v3962 = vpack.c.b16 %v3018, %v3014
    %v3963 = vpack.c.b16 %v3023, %v3019
    %v3964 = vpack.c.b16 %v3024, %v3020
    %v3965 = vpack.c.b16 %v3025, %v3021
    %v3966 = vpack.c.b16 %v3026, %v3022
    %v3967 = vpack.c.b16 %v3031, %v3027
    %v3968 = vpack.c.b16 %v3032, %v3028
    %v3969 = vpack.c.b16 %v3033, %v3029
    %v3970 = vpack.c.b16 %v3034, %v3030
    %v3971 = vpack.c.b16 %v3039, %v3035
    %v3972 = vpack.c.b16 %v3040, %v3036
    %v3973 = vpack.c.b16 %v3041, %v3037
    %v3974 = vpack.c.b16 %v3042, %v3038
    %v3975 = vpack.c.b16 %v3047, %v3043
    %v3976 = vpack.c.b16 %v3048, %v3044
    %v3977 = vpack.c.b16 %v3049, %v3045
    %v3978 = vpack.c.b16 %v3050, %v3046
    %v3979 = vpack.c.b16 %v3055, %v3051
    %v3980 = vpack.c.b16 %v3056, %v3052
    %v3981 = vpack.c.b16 %v3057, %v3053
    %v3982 = vpack.c.b16 %v3058, %v3054
    %v3983 = vpack.c.b16 %v3063, %v3059
    %v3984 = vpack.c.b16 %v3064, %v3060
    %v3985 = vpack.c.b16 %v3065, %v3061
    %v3986 = vpack.c.b16 %v3066, %v3062
    %v3987 = vpack.c.b16 %v3071, %v3067
    %v3988 = vpack.c.b16 %v3072, %v3068
    %v3989 = vpack.c.b16 %v3073, %v3069
    %v3990 = vpack.c.b16 %v3074, %v3070
    %v3991 = vpack.c.b16 %v3079, %v3075
    %v3992 = vpack.c.b16 %v3080, %v3076
    %v3993 = vpack.c.b16 %v3081, %v3077
    %v3994 = vpack.c.b16 %v3082, %v3078
    %v3995 = vpack.c.b16 %v3087, %v3083
    %v3996 = vpack.c.b16 %v3088, %v3084
    %v3997 = vpack.c.b16 %v3089, %v3085
    %v3998 = vpack.c.b16 %v3090, %v3086
    %v3999 = vpack.c.b16 %v3095, %v3091
    %v4000 = vpack.c.b16 %v3096, %v3092
    %v4001 = vpack.c.b16 %v3097, %v3093
    %v4002 = vpack.c.b16 %v3098, %v3094
    %v4003 = vpack.c.b16 %v3103, %v3099
    %v4004 = vpack.c.b16 %v3104, %v3100
    %v4005 = vpack.c.b16 %v3105, %v3101
    %v4006 = vpack.c.b16 %v3106, %v3102
    %v4007 = vpack.c.b16 %v3111, %v3107
    %v4008 = vpack.c.b16 %v3112, %v3108
    %v4009 = vpack.c.b16 %v3113, %v3109
    %v4010 = vpack.c.b16 %v3114, %v3110
    %v4011 = vpack.c.b16 %v3119, %v3115
    %v4012 = vpack.c.b16 %v3120, %v3116
    %v4013 = vpack.c.b16 %v3121, %v3117
    %v4014 = vpack.c.b16 %v3122, %v3118
    %v4015 = vpack.c.b16 %v3127, %v3123
    %v4016 = vpack.c.b16 %v3128, %v3124
    %v4017 = vpack.c.b16 %v3129, %v3125
    %v4018 = vpack.c.b16 %v3130, %v3126
    %v4019 = vpack.c.b16 %v3135, %v3131
    %v4020 = vpack.c.b16 %v3136, %v3132
    %v4021 = vpack.c.b16 %v3137, %v3133
    %v4022 = vpack.c.b16 %v3138, %v3134
    %v4023 = vpack.c.b16 %v3143, %v3139
    %v4024 = vpack.c.b16 %v3144, %v3140
    %v4025 = vpack.c.b16 %v3145, %v3141
    %v4026 = vpack.c.b16 %v3146, %v3142
    %v4027 = vpack.c.b16 %v3151, %v3147
    %v4028 = vpack.c.b16 %v3152, %v3148
    %v4029 = vpack.c.b16 %v3153, %v3149
    %v4030 = vpack.c.b16 %v3154, %v3150
    %v4031 = vpack.c.b16 %v3159, %v3155
    %v4032 = vpack.c.b16 %v3160, %v3156
    %v4033 = vpack.c.b16 %v3161, %v3157
    %v4034 = vpack.c.b16 %v3162, %v3158
    %v4035 = vpack.c.b16 %v3167, %v3163
    %v4036 = vpack.c.b16 %v3168, %v3164
    %v4037 = vpack.c.b16 %v3169, %v3165
    %v4038 = vpack.c.b16 %v3170, %v3166
    %v4039 = vpack.c.b16 %v3175, %v3171
    %v4040 = vpack.c.b16 %v3176, %v3172
    %v4041 = vpack.c.b16 %v3177, %v3173
    %v4042 = vpack.c.b16 %v3178, %v3174
    %v4043 = vpack.c.b16 %v3183, %v3179
    %v4044 = vpack.c.b16 %v3184, %v3180
    %v4045 = vpack.c.b16 %v3185, %v3181
    %v4046 = vpack.c.b16 %v3186, %v3182
    %v4047 = vpack.c.b16 %v3191, %v3187
    %v4048 = vpack.c.b16 %v3192, %v3188
    %v4049 = vpack.c.b16 %v3193, %v3189
    %v4050 = vpack.c.b16 %v3194, %v3190
    %v4051 = vpack.c.b16 %v3199, %v3195
    %v4052 = vpack.c.b16 %v3200, %v3196
    %v4053 = vpack.c.b16 %v3201, %v3197
    %v4054 = vpack.c.b16 %v3202, %v3198
    %v4055 = vpack.c.b16 %v3207, %v3203
    %v4056 = vpack.c.b16 %v3208, %v3204
    %v4057 = vpack.c.b16 %v3209, %v3205
    %v4058 = vpack.c.b16 %v3210, %v3206
    %v4059 = vpack.c.b16 %v3215, %v3211
    %v4060 = vpack.c.b16 %v3216, %v3212
    %v4061 = vpack.c.b16 %v3217, %v3213
    %v4062 = vpack.c.b16 %v3218, %v3214
    %v4063 = vpack.c.b16 %v3223, %v3219
    %v4064 = vpack.c.b16 %v3224, %v3220
    %v4065 = vpack.c.b16 %v3225, %v3221
    %v4066 = vpack.c.b16 %v3226, %v3222
    %v4067 = vpack.c.b16 %v3231, %v3227
    %v4068 = vpack.c.b16 %v3232, %v3228
    %v4069 = vpack.c.b16 %v3233, %v3229
    %v4070 = vpack.c.b16 %v3234, %v3230
    %v4071 = vpack.c.b16 %v3239, %v3235
    %v4072 = vpack.c.b16 %v3240, %v3236
    %v4073 = vpack.c.b16 %v3241, %v3237
    %v4074 = vpack.c.b16 %v3242, %v3238
    %v4075 = vpack.c.b16 %v3247, %v3243
    %v4076 = vpack.c.b16 %v3248, %v3244
    %v4077 = vpack.c.b16 %v3249, %v3245
    %v4078 = vpack.c.b16 %v3250, %v3246
    %v4079 = vpack.c.b16 %v3255, %v3251
    %v4080 = vpack.c.b16 %v3256, %v3252
    %v4081 = vpack.c.b16 %v3257, %v3253
    %v4082 = vpack.c.b16 %v3258, %v3254
    %v4083 = vpack.c.b16 %v3263, %v3259
    %v4084 = vpack.c.b16 %v3264, %v3260
    %v4085 = vpack.c.b16 %v3265, %v3261
    %v4086 = vpack.c.b16 %v3266, %v3262
    %v4087 = vpack.c.b16 %v3271, %v3267
    %v4088 = vpack.c.b16 %v3272, %v3268
    %v4089 = vpack.c.b16 %v3273, %v3269
    %v4090 = vpack.c.b16 %v3274, %v3270
    %v4091 = vpack.c.b16 %v3279, %v3275
    %v4092 = vpack.c.b16 %v3280, %v3276
    %v4093 = vpack.c.b16 %v3281, %v3277
    %v4094 = vpack.c.b16 %v3282, %v3278
    %v4095 = vpack.c.b16 %v3287, %v3283
    %v4096 = vpack.c.b16 %v3288, %v3284
    %v4097 = vpack.c.b16 %v3289, %v3285
    %v4098 = vpack.c.b16 %v3290, %v3286
    %v4099 = vpack.c.b16 %v3295, %v3291
    %v4100 = vpack.c.b16 %v3296, %v3292
    %v4101 = vpack.c.b16 %v3297, %v3293
    %v4102 = vpack.c.b16 %v3298, %v3294
    %v4103 = vpack.c.b16 %v3303, %v3299
    %v4104 = vpack.c.b16 %v3304, %v3300
    %v4105 = vpack.c.b16 %v3305, %v3301
    %v4106 = vpack.c.b16 %v3306, %v3302
    %v4107 = vpack.c.b16 %v3311, %v3307
    %v4108 = vpack.c.b16 %v3312, %v3308
    %v4109 = vpack.c.b16 %v3313, %v3309
    %v4110 = vpack.c.b16 %v3314, %v3310
    %v4111 = vpack.c.b16 %v3319, %v3315
    %v4112 = vpack.c.b16 %v3320, %v3316
    %v4113 = vpack.c.b16 %v3321, %v3317
    %v4114 = vpack.c.b16 %v3322, %v3318
    %v4115 = vpack.c.b16 %v3327, %v3323
    %v4116 = vpack.c.b16 %v3328, %v3324
    %v4117 = vpack.c.b16 %v3329, %v3325
    %v4118 = vpack.c.b16 %v3330, %v3326
    %v4119 = vpack.c.b16 %v3335, %v3331
    %v4120 = vpack.c.b16 %v3336, %v3332
    %v4121 = vpack.c.b16 %v3337, %v3333
    %v4122 = vpack.c.b16 %v3338, %v3334
    %v4123 = vpack.c.b16 %v3343, %v3339
    %v4124 = vpack.c.b16 %v3344, %v3340
    %v4125 = vpack.c.b16 %v3345, %v3341
    %v4126 = vpack.c.b16 %v3346, %v3342
    %v4127 = vpack.c.b16 %v3351, %v3347
    %v4128 = vpack.c.b16 %v3352, %v3348
    %v4129 = vpack.c.b16 %v3353, %v3349
    %v4130 = vpack.c.b16 %v3354, %v3350
    %v4131 = vpack.c.b16 %v3359, %v3355
    %v4132 = vpack.c.b16 %v3360, %v3356
    %v4133 = vpack.c.b16 %v3361, %v3357
    %v4134 = vpack.c.b16 %v3362, %v3358
    %v4135 = vpack.c.b16 %v3367, %v3363
    %v4136 = vpack.c.b16 %v3368, %v3364
    %v4137 = vpack.c.b16 %v3369, %v3365
    %v4138 = vpack.c.b16 %v3370, %v3366
    %4907 = vmatprep.subr.bf16.mxu0 %v3400
    %4908 = vmatpush1.bf16.msra.mxu0 %v3399
    %4909 = vmatprep.subr.bf16.mxu0 %v3396
    %4910 = vmatpush1.bf16.msra.mxu0 %v3395
    %4911 = vmatprep.subr.bf16.mxu0 %v3392
    %4912 = vmatpush1.bf16.msra.mxu0 %v3391
    %4913 = vmatprep.subr.bf16.mxu0 %v3388
    %4914 = vmatpush1.bf16.msra.mxu0 %v3387
    %4915 = vmatprep.subr.bf16.mxu0 %v3384
    %4916 = vmatpush1.bf16.msra.mxu0 %v3383
    %4917 = vmatprep.subr.bf16.mxu0 %v3380
    %4918 = vmatpush1.bf16.msra.mxu0 %v3379
    %4919 = vmatprep.subr.bf16.mxu0 %v3376
    %4920 = vmatpush1.bf16.msra.mxu0 %v3375
    %4921 = vmatprep.subr.bf16.mxu0 %v3372
    %4922 = vmatpush1.bf16.msra.mxu0 %v3371
    %4923 = vmatprep.subr.bf16.mxu0 %v3432
    %4924 = vmatpush2.bf16.msra.mxu0 %v3431
    %4925 = vmatprep.subr.bf16.mxu0 %v3428
    %4926 = vmatpush2.bf16.msra.mxu0 %v3427
    %4927 = vmatprep.subr.bf16.mxu0 %v3424
    %4928 = vmatpush2.bf16.msra.mxu0 %v3423
    %4929 = vmatprep.subr.bf16.mxu0 %v3420
    %4930 = vmatpush2.bf16.msra.mxu0 %v3419
    %4931 = vmatprep.subr.bf16.mxu0 %v3416
    %4932 = vmatpush2.bf16.msra.mxu0 %v3415
    %4933 = vmatprep.subr.bf16.mxu0 %v3412
    %4934 = vmatpush2.bf16.msra.mxu0 %v3411
    %4935 = vmatprep.subr.bf16.mxu0 %v3408
    %4936 = vmatpush2.bf16.msra.mxu0 %v3407
    %4937 = vmatprep.subr.bf16.mxu0 %v3404
    %4938 = vmatpush2.bf16.msra.mxu0 %v3403
    %4939 = vmatprep.mubr.bf16.mxu0 %v254
    %4940 = vmatmul.mubr.bf16.gmra.mxu0 %v253
    %v4941 = vpop.f32.mrf.mxu0
    %v4942 = vadd.f32 %v1050, %v4941
    %v4943 = vpop.f32.mrf.mxu0
    %v4944 = vadd.f32 %v1054, %v4943
    %v4945 = vpop.f32.mrf.mxu0
    %v4946 = vpop.f32.mrf.mxu0
    %4947 = vdwg.mxu0
    %4948 = vmatprep.subr.bf16.mxu0 %v3464
    %4949 = vmatpush1.bf16.msra.mxu0 %v3463
    %4950 = vmatprep.subr.bf16.mxu0 %v3460
    %4951 = vmatpush1.bf16.msra.mxu0 %v3459
    %4952 = vmatprep.subr.bf16.mxu0 %v3456
    %4953 = vmatpush1.bf16.msra.mxu0 %v3455
    %4954 = vmatprep.subr.bf16.mxu0 %v3452
    %4955 = vmatpush1.bf16.msra.mxu0 %v3451
    %4956 = vmatprep.subr.bf16.mxu0 %v3448
    %4957 = vmatpush1.bf16.msra.mxu0 %v3447
    %4958 = vmatprep.subr.bf16.mxu0 %v3444
    %4959 = vmatpush1.bf16.msra.mxu0 %v3443
    %4960 = vmatprep.subr.bf16.mxu0 %v3440
    %4961 = vmatpush1.bf16.msra.mxu0 %v3439
    %4962 = vmatprep.subr.bf16.mxu0 %v3436
    %4963 = vmatpush1.bf16.msra.mxu0 %v3435
    %4964 = vmatprep.subr.bf16.mxu0 %v3496
    %4965 = vmatpush2.bf16.msra.mxu0 %v3495
    %4966 = vmatprep.subr.bf16.mxu0 %v3492
    %4967 = vmatpush2.bf16.msra.mxu0 %v3491
    %4968 = vmatprep.subr.bf16.mxu0 %v3488
    %4969 = vmatpush2.bf16.msra.mxu0 %v3487
    %4970 = vmatprep.subr.bf16.mxu0 %v3484
    %4971 = vmatpush2.bf16.msra.mxu0 %v3483
    %4972 = vmatprep.subr.bf16.mxu0 %v3480
    %4973 = vmatpush2.bf16.msra.mxu0 %v3479
    %4974 = vmatprep.subr.bf16.mxu0 %v3476
    %4975 = vmatpush2.bf16.msra.mxu0 %v3475
    %4976 = vmatprep.subr.bf16.mxu0 %v3472
    %4977 = vmatpush2.bf16.msra.mxu0 %v3471
    %4978 = vmatprep.subr.bf16.mxu0 %v3468
    %4979 = vmatpush2.bf16.msra.mxu0 %v3467
    %4980 = vmatprep.mubr.bf16.mxu0 %v256
    %4981 = vmatmul.mubr.bf16.gmra.mxu0 %v255
    %v4982 = vpop.f32.mrf.mxu0
    %v4983 = vadd.f32 %v4942, %v4982
    %v4984 = vpop.f32.mrf.mxu0
    %v4985 = vadd.f32 %v4944, %v4984
    %v4986 = vpop.f32.mrf.mxu0
    %v4987 = vpop.f32.mrf.mxu0
    %4988 = vdwg.mxu0
    %4989 = vmatprep.subr.bf16.mxu0 %v3528
    %4990 = vmatpush1.bf16.msra.mxu0 %v3527
    %4991 = vmatprep.subr.bf16.mxu0 %v3524
    %4992 = vmatpush1.bf16.msra.mxu0 %v3523
    %4993 = vmatprep.subr.bf16.mxu0 %v3520
    %4994 = vmatpush1.bf16.msra.mxu0 %v3519
    %4995 = vmatprep.subr.bf16.mxu0 %v3516
    %4996 = vmatpush1.bf16.msra.mxu0 %v3515
    %4997 = vmatprep.subr.bf16.mxu0 %v3512
    %4998 = vmatpush1.bf16.msra.mxu0 %v3511
    %4999 = vmatprep.subr.bf16.mxu0 %v3508
    %5000 = vmatpush1.bf16.msra.mxu0 %v3507
    %5001 = vmatprep.subr.bf16.mxu0 %v3504
    %5002 = vmatpush1.bf16.msra.mxu0 %v3503
    %5003 = vmatprep.subr.bf16.mxu0 %v3500
    %5004 = vmatpush1.bf16.msra.mxu0 %v3499
    %5005 = vmatprep.subr.bf16.mxu0 %v3560
    %5006 = vmatpush2.bf16.msra.mxu0 %v3559
    %5007 = vmatprep.subr.bf16.mxu0 %v3556
    %5008 = vmatpush2.bf16.msra.mxu0 %v3555
    %5009 = vmatprep.subr.bf16.mxu0 %v3552
    %5010 = vmatpush2.bf16.msra.mxu0 %v3551
    %5011 = vmatprep.subr.bf16.mxu0 %v3548
    %5012 = vmatpush2.bf16.msra.mxu0 %v3547
    %5013 = vmatprep.subr.bf16.mxu0 %v3544
    %5014 = vmatpush2.bf16.msra.mxu0 %v3543
    %5015 = vmatprep.subr.bf16.mxu0 %v3540
    %5016 = vmatpush2.bf16.msra.mxu0 %v3539
    %5017 = vmatprep.subr.bf16.mxu0 %v3536
    %5018 = vmatpush2.bf16.msra.mxu0 %v3535
    %5019 = vmatprep.subr.bf16.mxu0 %v3532
    %5020 = vmatpush2.bf16.msra.mxu0 %v3531
    %5021 = vmatprep.mubr.bf16.mxu0 %v258
    %5022 = vmatmul.mubr.bf16.gmra.mxu0 %v257
    %v5023 = vpop.f32.mrf.mxu0
    %v5024 = vadd.f32 %v4983, %v5023
    %v5025 = vpop.f32.mrf.mxu0
    %v5026 = vadd.f32 %v4985, %v5025
    %v5027 = vpop.f32.mrf.mxu0
    %v5028 = vpop.f32.mrf.mxu0
    %5029 = vdwg.mxu0
    %5030 = vmatprep.subr.bf16.mxu0 %v3592
    %5031 = vmatpush1.bf16.msra.mxu0 %v3591
    %5032 = vmatprep.subr.bf16.mxu0 %v3588
    %5033 = vmatpush1.bf16.msra.mxu0 %v3587
    %5034 = vmatprep.subr.bf16.mxu0 %v3584
    %5035 = vmatpush1.bf16.msra.mxu0 %v3583
    %5036 = vmatprep.subr.bf16.mxu0 %v3580
    %5037 = vmatpush1.bf16.msra.mxu0 %v3579
    %5038 = vmatprep.subr.bf16.mxu0 %v3576
    %5039 = vmatpush1.bf16.msra.mxu0 %v3575
    %5040 = vmatprep.subr.bf16.mxu0 %v3572
    %5041 = vmatpush1.bf16.msra.mxu0 %v3571
    %5042 = vmatprep.subr.bf16.mxu0 %v3568
    %5043 = vmatpush1.bf16.msra.mxu0 %v3567
    %5044 = vmatprep.subr.bf16.mxu0 %v3564
    %5045 = vmatpush1.bf16.msra.mxu0 %v3563
    %5046 = vmatprep.subr.bf16.mxu0 %v3624
    %5047 = vmatpush2.bf16.msra.mxu0 %v3623
    %5048 = vmatprep.subr.bf16.mxu0 %v3620
    %5049 = vmatpush2.bf16.msra.mxu0 %v3619
    %5050 = vmatprep.subr.bf16.mxu0 %v3616
    %5051 = vmatpush2.bf16.msra.mxu0 %v3615
    %5052 = vmatprep.subr.bf16.mxu0 %v3612
    %5053 = vmatpush2.bf16.msra.mxu0 %v3611
    %5054 = vmatprep.subr.bf16.mxu0 %v3608
    %5055 = vmatpush2.bf16.msra.mxu0 %v3607
    %5056 = vmatprep.subr.bf16.mxu0 %v3604
    %5057 = vmatpush2.bf16.msra.mxu0 %v3603
    %5058 = vmatprep.subr.bf16.mxu0 %v3600
    %5059 = vmatpush2.bf16.msra.mxu0 %v3599
    %5060 = vmatprep.subr.bf16.mxu0 %v3596
    %5061 = vmatpush2.bf16.msra.mxu0 %v3595
    %5062 = vmatprep.mubr.bf16.mxu0 %v260
    %5063 = vmatmul.mubr.bf16.gmra.mxu0 %v259
    %v5064 = vpop.f32.mrf.mxu0
    %v5065 = vadd.f32 %v5024, %v5064
    %v5066 = vpop.f32.mrf.mxu0
    %v5067 = vadd.f32 %v5026, %v5066
    %v5068 = vpop.f32.mrf.mxu0
    %v5069 = vpop.f32.mrf.mxu0
    %5070 = vdwg.mxu0
    %5071 = vmatprep.subr.bf16.mxu0 %v3656
    %5072 = vmatpush1.bf16.msra.mxu0 %v3655
    %5073 = vmatprep.subr.bf16.mxu0 %v3652
    %5074 = vmatpush1.bf16.msra.mxu0 %v3651
    %5075 = vmatprep.subr.bf16.mxu0 %v3648
    %5076 = vmatpush1.bf16.msra.mxu0 %v3647
    %5077 = vmatprep.subr.bf16.mxu0 %v3644
    %5078 = vmatpush1.bf16.msra.mxu0 %v3643
    %5079 = vmatprep.subr.bf16.mxu0 %v3640
    %5080 = vmatpush1.bf16.msra.mxu0 %v3639
    %5081 = vmatprep.subr.bf16.mxu0 %v3636
    %5082 = vmatpush1.bf16.msra.mxu0 %v3635
    %5083 = vmatprep.subr.bf16.mxu0 %v3632
    %5084 = vmatpush1.bf16.msra.mxu0 %v3631
    %5085 = vmatprep.subr.bf16.mxu0 %v3628
    %5086 = vmatpush1.bf16.msra.mxu0 %v3627
    %5087 = vmatprep.subr.bf16.mxu0 %v3688
    %5088 = vmatpush2.bf16.msra.mxu0 %v3687
    %5089 = vmatprep.subr.bf16.mxu0 %v3684
    %5090 = vmatpush2.bf16.msra.mxu0 %v3683
    %5091 = vmatprep.subr.bf16.mxu0 %v3680
    %5092 = vmatpush2.bf16.msra.mxu0 %v3679
    %5093 = vmatprep.subr.bf16.mxu0 %v3676
    %5094 = vmatpush2.bf16.msra.mxu0 %v3675
    %5095 = vmatprep.subr.bf16.mxu0 %v3672
    %5096 = vmatpush2.bf16.msra.mxu0 %v3671
    %5097 = vmatprep.subr.bf16.mxu0 %v3668
    %5098 = vmatpush2.bf16.msra.mxu0 %v3667
    %5099 = vmatprep.subr.bf16.mxu0 %v3664
    %5100 = vmatpush2.bf16.msra.mxu0 %v3663
    %5101 = vmatprep.subr.bf16.mxu0 %v3660
    %5102 = vmatpush2.bf16.msra.mxu0 %v3659
    %5103 = vmatprep.mubr.bf16.mxu0 %v262
    %5104 = vmatmul.mubr.bf16.gmra.mxu0 %v261
    %v5105 = vpop.f32.mrf.mxu0
    %v5106 = vadd.f32 %v5065, %v5105
    %v5107 = vpop.f32.mrf.mxu0
    %v5108 = vadd.f32 %v5067, %v5107
    %v5109 = vpop.f32.mrf.mxu0
    %v5110 = vpop.f32.mrf.mxu0
    %5111 = vdwg.mxu0
    %5112 = vmatprep.subr.bf16.mxu0 %v3720
    %5113 = vmatpush1.bf16.msra.mxu0 %v3719
    %5114 = vmatprep.subr.bf16.mxu0 %v3716
    %5115 = vmatpush1.bf16.msra.mxu0 %v3715
    %5116 = vmatprep.subr.bf16.mxu0 %v3712
    %5117 = vmatpush1.bf16.msra.mxu0 %v3711
    %5118 = vmatprep.subr.bf16.mxu0 %v3708
    %5119 = vmatpush1.bf16.msra.mxu0 %v3707
    %5120 = vmatprep.subr.bf16.mxu0 %v3704
    %5121 = vmatpush1.bf16.msra.mxu0 %v3703
    %5122 = vmatprep.subr.bf16.mxu0 %v3700
    %5123 = vmatpush1.bf16.msra.mxu0 %v3699
    %5124 = vmatprep.subr.bf16.mxu0 %v3696
    %5125 = vmatpush1.bf16.msra.mxu0 %v3695
    %5126 = vmatprep.subr.bf16.mxu0 %v3692
    %5127 = vmatpush1.bf16.msra.mxu0 %v3691
    %5128 = vmatprep.subr.bf16.mxu0 %v3752
    %5129 = vmatpush2.bf16.msra.mxu0 %v3751
    %5130 = vmatprep.subr.bf16.mxu0 %v3748
    %5131 = vmatpush2.bf16.msra.mxu0 %v3747
    %5132 = vmatprep.subr.bf16.mxu0 %v3744
    %5133 = vmatpush2.bf16.msra.mxu0 %v3743
    %5134 = vmatprep.subr.bf16.mxu0 %v3740
    %5135 = vmatpush2.bf16.msra.mxu0 %v3739
    %5136 = vmatprep.subr.bf16.mxu0 %v3736
    %5137 = vmatpush2.bf16.msra.mxu0 %v3735
    %5138 = vmatprep.subr.bf16.mxu0 %v3732
    %5139 = vmatpush2.bf16.msra.mxu0 %v3731
    %5140 = vmatprep.subr.bf16.mxu0 %v3728
    %5141 = vmatpush2.bf16.msra.mxu0 %v3727
    %5142 = vmatprep.subr.bf16.mxu0 %v3724
    %5143 = vmatpush2.bf16.msra.mxu0 %v3723
    %5144 = vmatprep.mubr.bf16.mxu0 %v264
    %5145 = vmatmul.mubr.bf16.gmra.mxu0 %v263
    %v5146 = vpop.f32.mrf.mxu0
    %v5147 = vadd.f32 %v5106, %v5146
    %v5148 = vpop.f32.mrf.mxu0
    %v5149 = vadd.f32 %v5108, %v5148
    %v5150 = vpop.f32.mrf.mxu0
    %v5151 = vpop.f32.mrf.mxu0
    %5152 = vdwg.mxu0
    %5153 = vmatprep.subr.bf16.mxu0 %v3784
    %5154 = vmatpush1.bf16.msra.mxu0 %v3783
    %5155 = vmatprep.subr.bf16.mxu0 %v3780
    %5156 = vmatpush1.bf16.msra.mxu0 %v3779
    %5157 = vmatprep.subr.bf16.mxu0 %v3776
    %5158 = vmatpush1.bf16.msra.mxu0 %v3775
    %5159 = vmatprep.subr.bf16.mxu0 %v3772
    %5160 = vmatpush1.bf16.msra.mxu0 %v3771
    %5161 = vmatprep.subr.bf16.mxu0 %v3768
    %5162 = vmatpush1.bf16.msra.mxu0 %v3767
    %5163 = vmatprep.subr.bf16.mxu0 %v3764
    %5164 = vmatpush1.bf16.msra.mxu0 %v3763
    %5165 = vmatprep.subr.bf16.mxu0 %v3760
    %5166 = vmatpush1.bf16.msra.mxu0 %v3759
    %5167 = vmatprep.subr.bf16.mxu0 %v3756
    %5168 = vmatpush1.bf16.msra.mxu0 %v3755
    %5169 = vmatprep.subr.bf16.mxu0 %v3816
    %5170 = vmatpush2.bf16.msra.mxu0 %v3815
    %5171 = vmatprep.subr.bf16.mxu0 %v3812
    %5172 = vmatpush2.bf16.msra.mxu0 %v3811
    %5173 = vmatprep.subr.bf16.mxu0 %v3808
    %5174 = vmatpush2.bf16.msra.mxu0 %v3807
    %5175 = vmatprep.subr.bf16.mxu0 %v3804
    %5176 = vmatpush2.bf16.msra.mxu0 %v3803
    %5177 = vmatprep.subr.bf16.mxu0 %v3800
    %5178 = vmatpush2.bf16.msra.mxu0 %v3799
    %5179 = vmatprep.subr.bf16.mxu0 %v3796
    %5180 = vmatpush2.bf16.msra.mxu0 %v3795
    %5181 = vmatprep.subr.bf16.mxu0 %v3792
    %5182 = vmatpush2.bf16.msra.mxu0 %v3791
    %5183 = vmatprep.subr.bf16.mxu0 %v3788
    %5184 = vmatpush2.bf16.msra.mxu0 %v3787
    %5185 = vmatprep.mubr.bf16.mxu0 %v266
    %5186 = vmatmul.mubr.bf16.gmra.mxu0 %v265
    %v5187 = vpop.f32.mrf.mxu0
    %v5188 = vadd.f32 %v5147, %v5187
    %v5189 = vpop.f32.mrf.mxu0
    %v5190 = vadd.f32 %v5149, %v5189
    %v5191 = vpop.f32.mrf.mxu0
    %v5192 = vpop.f32.mrf.mxu0
    %5193 = vdwg.mxu0
    %5194 = vmatprep.subr.bf16.mxu0 %v3848
    %5195 = vmatpush1.bf16.msra.mxu0 %v3847
    %5196 = vmatprep.subr.bf16.mxu0 %v3844
    %5197 = vmatpush1.bf16.msra.mxu0 %v3843
    %5198 = vmatprep.subr.bf16.mxu0 %v3840
    %5199 = vmatpush1.bf16.msra.mxu0 %v3839
    %5200 = vmatprep.subr.bf16.mxu0 %v3836
    %5201 = vmatpush1.bf16.msra.mxu0 %v3835
    %5202 = vmatprep.subr.bf16.mxu0 %v3832
    %5203 = vmatpush1.bf16.msra.mxu0 %v3831
    %5204 = vmatprep.subr.bf16.mxu0 %v3828
    %5205 = vmatpush1.bf16.msra.mxu0 %v3827
    %5206 = vmatprep.subr.bf16.mxu0 %v3824
    %5207 = vmatpush1.bf16.msra.mxu0 %v3823
    %5208 = vmatprep.subr.bf16.mxu0 %v3820
    %5209 = vmatpush1.bf16.msra.mxu0 %v3819
    %5210 = vmatprep.subr.bf16.mxu0 %v3880
    %5211 = vmatpush2.bf16.msra.mxu0 %v3879
    %5212 = vmatprep.subr.bf16.mxu0 %v3876
    %5213 = vmatpush2.bf16.msra.mxu0 %v3875
    %5214 = vmatprep.subr.bf16.mxu0 %v3872
    %5215 = vmatpush2.bf16.msra.mxu0 %v3871
    %5216 = vmatprep.subr.bf16.mxu0 %v3868
    %5217 = vmatpush2.bf16.msra.mxu0 %v3867
    %5218 = vmatprep.subr.bf16.mxu0 %v3864
    %5219 = vmatpush2.bf16.msra.mxu0 %v3863
    %5220 = vmatprep.subr.bf16.mxu0 %v3860
    %5221 = vmatpush2.bf16.msra.mxu0 %v3859
    %5222 = vmatprep.subr.bf16.mxu0 %v3856
    %5223 = vmatpush2.bf16.msra.mxu0 %v3855
    %5224 = vmatprep.subr.bf16.mxu0 %v3852
    %5225 = vmatpush2.bf16.msra.mxu0 %v3851
    %5226 = vmatprep.mubr.bf16.mxu0 %v268
    %5227 = vmatmul.mubr.bf16.gmra.mxu0 %v267
    %v5228 = vpop.f32.mrf.mxu0
    %v5229 = vadd.f32 %v5188, %v5228
    %v5230 = vpop.f32.mrf.mxu0
    %v5231 = vadd.f32 %v5190, %v5230
    %v5232 = vpop.f32.mrf.mxu0
    %v5233 = vpop.f32.mrf.mxu0
    %5234 = vdwg.mxu0
    %5235 = vmatprep.subr.bf16.mxu0 %v3912
    %5236 = vmatpush1.bf16.msra.mxu0 %v3911
    %5237 = vmatprep.subr.bf16.mxu0 %v3908
    %5238 = vmatpush1.bf16.msra.mxu0 %v3907
    %5239 = vmatprep.subr.bf16.mxu0 %v3904
    %5240 = vmatpush1.bf16.msra.mxu0 %v3903
    %5241 = vmatprep.subr.bf16.mxu0 %v3900
    %5242 = vmatpush1.bf16.msra.mxu0 %v3899
    %5243 = vmatprep.subr.bf16.mxu0 %v3896
    %5244 = vmatpush1.bf16.msra.mxu0 %v3895
    %5245 = vmatprep.subr.bf16.mxu0 %v3892
    %5246 = vmatpush1.bf16.msra.mxu0 %v3891
    %5247 = vmatprep.subr.bf16.mxu0 %v3888
    %5248 = vmatpush1.bf16.msra.mxu0 %v3887
    %5249 = vmatprep.subr.bf16.mxu0 %v3884
    %5250 = vmatpush1.bf16.msra.mxu0 %v3883
    %5251 = vmatprep.subr.bf16.mxu0 %v3944
    %5252 = vmatpush2.bf16.msra.mxu0 %v3943
    %5253 = vmatprep.subr.bf16.mxu0 %v3940
    %5254 = vmatpush2.bf16.msra.mxu0 %v3939
    %5255 = vmatprep.subr.bf16.mxu0 %v3936
    %5256 = vmatpush2.bf16.msra.mxu0 %v3935
    %5257 = vmatprep.subr.bf16.mxu0 %v3932
    %5258 = vmatpush2.bf16.msra.mxu0 %v3931
    %5259 = vmatprep.subr.bf16.mxu0 %v3928
    %5260 = vmatpush2.bf16.msra.mxu0 %v3927
    %5261 = vmatprep.subr.bf16.mxu0 %v3924
    %5262 = vmatpush2.bf16.msra.mxu0 %v3923
    %5263 = vmatprep.subr.bf16.mxu0 %v3920
    %5264 = vmatpush2.bf16.msra.mxu0 %v3919
    %5265 = vmatprep.subr.bf16.mxu0 %v3916
    %5266 = vmatpush2.bf16.msra.mxu0 %v3915
    %5267 = vmatprep.mubr.bf16.mxu0 %v270
    %5268 = vmatmul.mubr.bf16.gmra.mxu0 %v269
    %v5269 = vpop.f32.mrf.mxu0
    %v5270 = vadd.f32 %v5229, %v5269
    %v5271 = vpop.f32.mrf.mxu0
    %v5272 = vadd.f32 %v5231, %v5271
    %v5273 = vpop.f32.mrf.mxu0
    %v5274 = vpop.f32.mrf.mxu0
    %5275 = vdwg.mxu0
    %5276 = vmatprep.subr.bf16.mxu0 %v3976
    %5277 = vmatpush1.bf16.msra.mxu0 %v3975
    %5278 = vmatprep.subr.bf16.mxu0 %v3972
    %5279 = vmatpush1.bf16.msra.mxu0 %v3971
    %5280 = vmatprep.subr.bf16.mxu0 %v3968
    %5281 = vmatpush1.bf16.msra.mxu0 %v3967
    %5282 = vmatprep.subr.bf16.mxu0 %v3964
    %5283 = vmatpush1.bf16.msra.mxu0 %v3963
    %5284 = vmatprep.subr.bf16.mxu0 %v3960
    %5285 = vmatpush1.bf16.msra.mxu0 %v3959
    %5286 = vmatprep.subr.bf16.mxu0 %v3956
    %5287 = vmatpush1.bf16.msra.mxu0 %v3955
    %5288 = vmatprep.subr.bf16.mxu0 %v3952
    %5289 = vmatpush1.bf16.msra.mxu0 %v3951
    %5290 = vmatprep.subr.bf16.mxu0 %v3948
    %5291 = vmatpush1.bf16.msra.mxu0 %v3947
    %5292 = vmatprep.subr.bf16.mxu0 %v4008
    %5293 = vmatpush2.bf16.msra.mxu0 %v4007
    %5294 = vmatprep.subr.bf16.mxu0 %v4004
    %5295 = vmatpush2.bf16.msra.mxu0 %v4003
    %5296 = vmatprep.subr.bf16.mxu0 %v4000
    %5297 = vmatpush2.bf16.msra.mxu0 %v3999
    %5298 = vmatprep.subr.bf16.mxu0 %v3996
    %5299 = vmatpush2.bf16.msra.mxu0 %v3995
    %5300 = vmatprep.subr.bf16.mxu0 %v3992
    %5301 = vmatpush2.bf16.msra.mxu0 %v3991
    %5302 = vmatprep.subr.bf16.mxu0 %v3988
    %5303 = vmatpush2.bf16.msra.mxu0 %v3987
    %5304 = vmatprep.subr.bf16.mxu0 %v3984
    %5305 = vmatpush2.bf16.msra.mxu0 %v3983
    %5306 = vmatprep.subr.bf16.mxu0 %v3980
    %5307 = vmatpush2.bf16.msra.mxu0 %v3979
    %5308 = vmatprep.mubr.bf16.mxu0 %v272
    %5309 = vmatmul.mubr.bf16.gmra.mxu0 %v271
    %v5310 = vpop.f32.mrf.mxu0
    %v5311 = vadd.f32 %v5270, %v5310
    %v5312 = vpop.f32.mrf.mxu0
    %v5313 = vadd.f32 %v5272, %v5312
    %v5314 = vpop.f32.mrf.mxu0
    %v5315 = vpop.f32.mrf.mxu0
    %5316 = vdwg.mxu0
    %5317 = vmatprep.subr.bf16.mxu0 %v4040
    %5318 = vmatpush1.bf16.msra.mxu0 %v4039
    %5319 = vmatprep.subr.bf16.mxu0 %v4036
    %5320 = vmatpush1.bf16.msra.mxu0 %v4035
    %5321 = vmatprep.subr.bf16.mxu0 %v4032
    %5322 = vmatpush1.bf16.msra.mxu0 %v4031
    %5323 = vmatprep.subr.bf16.mxu0 %v4028
    %5324 = vmatpush1.bf16.msra.mxu0 %v4027
    %5325 = vmatprep.subr.bf16.mxu0 %v4024
    %5326 = vmatpush1.bf16.msra.mxu0 %v4023
    %5327 = vmatprep.subr.bf16.mxu0 %v4020
    %5328 = vmatpush1.bf16.msra.mxu0 %v4019
    %5329 = vmatprep.subr.bf16.mxu0 %v4016
    %5330 = vmatpush1.bf16.msra.mxu0 %v4015
    %5331 = vmatprep.subr.bf16.mxu0 %v4012
    %5332 = vmatpush1.bf16.msra.mxu0 %v4011
    %5333 = vmatprep.subr.bf16.mxu0 %v4072
    %5334 = vmatpush2.bf16.msra.mxu0 %v4071
    %5335 = vmatprep.subr.bf16.mxu0 %v4068
    %5336 = vmatpush2.bf16.msra.mxu0 %v4067
    %5337 = vmatprep.subr.bf16.mxu0 %v4064
    %5338 = vmatpush2.bf16.msra.mxu0 %v4063
    %5339 = vmatprep.subr.bf16.mxu0 %v4060
    %5340 = vmatpush2.bf16.msra.mxu0 %v4059
    %5341 = vmatprep.subr.bf16.mxu0 %v4056
    %5342 = vmatpush2.bf16.msra.mxu0 %v4055
    %5343 = vmatprep.subr.bf16.mxu0 %v4052
    %5344 = vmatpush2.bf16.msra.mxu0 %v4051
    %5345 = vmatprep.subr.bf16.mxu0 %v4048
    %5346 = vmatpush2.bf16.msra.mxu0 %v4047
    %5347 = vmatprep.subr.bf16.mxu0 %v4044
    %5348 = vmatpush2.bf16.msra.mxu0 %v4043
    %5349 = vmatprep.mubr.bf16.mxu0 %v274
    %5350 = vmatmul.mubr.bf16.gmra.mxu0 %v273
    %v5351 = vpop.f32.mrf.mxu0
    %v5352 = vadd.f32 %v5311, %v5351
    %v5353 = vpop.f32.mrf.mxu0
    %v5354 = vadd.f32 %v5313, %v5353
    %v5355 = vpop.f32.mrf.mxu0
    %v5356 = vpop.f32.mrf.mxu0
    %5357 = vdwg.mxu0
    %5358 = vmatprep.subr.bf16.mxu0 %v4104
    %5359 = vmatpush1.bf16.msra.mxu0 %v4103
    %5360 = vmatprep.subr.bf16.mxu0 %v4100
    %5361 = vmatpush1.bf16.msra.mxu0 %v4099
    %5362 = vmatprep.subr.bf16.mxu0 %v4096
    %5363 = vmatpush1.bf16.msra.mxu0 %v4095
    %5364 = vmatprep.subr.bf16.mxu0 %v4092
    %5365 = vmatpush1.bf16.msra.mxu0 %v4091
    %5366 = vmatprep.subr.bf16.mxu0 %v4088
    %5367 = vmatpush1.bf16.msra.mxu0 %v4087
    %5368 = vmatprep.subr.bf16.mxu0 %v4084
    %5369 = vmatpush1.bf16.msra.mxu0 %v4083
    %5370 = vmatprep.subr.bf16.mxu0 %v4080
    %5371 = vmatpush1.bf16.msra.mxu0 %v4079
    %5372 = vmatprep.subr.bf16.mxu0 %v4076
    %5373 = vmatpush1.bf16.msra.mxu0 %v4075
    %5374 = vmatprep.subr.bf16.mxu0 %v4136
    %5375 = vmatpush2.bf16.msra.mxu0 %v4135
    %5376 = vmatprep.subr.bf16.mxu0 %v4132
    %5377 = vmatpush2.bf16.msra.mxu0 %v4131
    %5378 = vmatprep.subr.bf16.mxu0 %v4128
    %5379 = vmatpush2.bf16.msra.mxu0 %v4127
    %5380 = vmatprep.subr.bf16.mxu0 %v4124
    %5381 = vmatpush2.bf16.msra.mxu0 %v4123
    %5382 = vmatprep.subr.bf16.mxu0 %v4120
    %5383 = vmatpush2.bf16.msra.mxu0 %v4119
    %5384 = vmatprep.subr.bf16.mxu0 %v4116
    %5385 = vmatpush2.bf16.msra.mxu0 %v4115
    %5386 = vmatprep.subr.bf16.mxu0 %v4112
    %5387 = vmatpush2.bf16.msra.mxu0 %v4111
    %5388 = vmatprep.subr.bf16.mxu0 %v4108
    %5389 = vmatpush2.bf16.msra.mxu0 %v4107
    %5390 = vmatprep.mubr.bf16.mxu0 %v276
    %5391 = vmatmul.mubr.bf16.gmra.mxu0 %v275
    %v5392 = vpop.f32.mrf.mxu0
    %v5393 = vadd.f32 %v5352, %v5392
    %v5394 = vpop.f32.mrf.mxu0
    %v5395 = vadd.f32 %v5354, %v5394
    %v5396 = vpop.f32.mrf.mxu0
    %v5397 = vpop.f32.mrf.mxu0
    %5398 = vdwg.mxu0
    %5399 = vmatprep.subr.bf16.mxu0 %v3402
    %5400 = vmatpush1.bf16.msra.mxu0 %v3401
    %5401 = vmatprep.subr.bf16.mxu0 %v3398
    %5402 = vmatpush1.bf16.msra.mxu0 %v3397
    %5403 = vmatprep.subr.bf16.mxu0 %v3394
    %5404 = vmatpush1.bf16.msra.mxu0 %v3393
    %5405 = vmatprep.subr.bf16.mxu0 %v3390
    %5406 = vmatpush1.bf16.msra.mxu0 %v3389
    %5407 = vmatprep.subr.bf16.mxu0 %v3386
    %5408 = vmatpush1.bf16.msra.mxu0 %v3385
    %5409 = vmatprep.subr.bf16.mxu0 %v3382
    %5410 = vmatpush1.bf16.msra.mxu0 %v3381
    %5411 = vmatprep.subr.bf16.mxu0 %v3378
    %5412 = vmatpush1.bf16.msra.mxu0 %v3377
    %5413 = vmatprep.subr.bf16.mxu0 %v3374
    %5414 = vmatpush1.bf16.msra.mxu0 %v3373
    %5415 = vmatprep.subr.bf16.mxu0 %v3434
    %5416 = vmatpush2.bf16.msra.mxu0 %v3433
    %5417 = vmatprep.subr.bf16.mxu0 %v3430
    %5418 = vmatpush2.bf16.msra.mxu0 %v3429
    %5419 = vmatprep.subr.bf16.mxu0 %v3426
    %5420 = vmatpush2.bf16.msra.mxu0 %v3425
    %5421 = vmatprep.subr.bf16.mxu0 %v3422
    %5422 = vmatpush2.bf16.msra.mxu0 %v3421
    %5423 = vmatprep.subr.bf16.mxu0 %v3418
    %5424 = vmatpush2.bf16.msra.mxu0 %v3417
    %5425 = vmatprep.subr.bf16.mxu0 %v3414
    %5426 = vmatpush2.bf16.msra.mxu0 %v3413
    %5427 = vmatprep.subr.bf16.mxu0 %v3410
    %5428 = vmatpush2.bf16.msra.mxu0 %v3409
    %5429 = vmatprep.subr.bf16.mxu0 %v3406
    %5430 = vmatpush2.bf16.msra.mxu0 %v3405
    %5431 = vmatprep.mubr.bf16.mxu0 %v254
    %5432 = vmatmul.mubr.bf16.gmra.mxu0 %v253
    %v5433 = vpop.f32.mrf.mxu0
    %v5434 = vadd.f32 %v1058, %v5433
    %v5435 = vpop.f32.mrf.mxu0
    %v5436 = vadd.f32 %v1062, %v5435
    %v5437 = vpop.f32.mrf.mxu0
    %v5438 = vpop.f32.mrf.mxu0
    %5439 = vdwg.mxu0
    %5440 = vmatprep.subr.bf16.mxu0 %v3466
    %5441 = vmatpush1.bf16.msra.mxu0 %v3465
    %5442 = vmatprep.subr.bf16.mxu0 %v3462
    %5443 = vmatpush1.bf16.msra.mxu0 %v3461
    %5444 = vmatprep.subr.bf16.mxu0 %v3458
    %5445 = vmatpush1.bf16.msra.mxu0 %v3457
    %5446 = vmatprep.subr.bf16.mxu0 %v3454
    %5447 = vmatpush1.bf16.msra.mxu0 %v3453
    %5448 = vmatprep.subr.bf16.mxu0 %v3450
    %5449 = vmatpush1.bf16.msra.mxu0 %v3449
    %5450 = vmatprep.subr.bf16.mxu0 %v3446
    %5451 = vmatpush1.bf16.msra.mxu0 %v3445
    %5452 = vmatprep.subr.bf16.mxu0 %v3442
    %5453 = vmatpush1.bf16.msra.mxu0 %v3441
    %5454 = vmatprep.subr.bf16.mxu0 %v3438
    %5455 = vmatpush1.bf16.msra.mxu0 %v3437
    %5456 = vmatprep.subr.bf16.mxu0 %v3498
    %5457 = vmatpush2.bf16.msra.mxu0 %v3497
    %5458 = vmatprep.subr.bf16.mxu0 %v3494
    %5459 = vmatpush2.bf16.msra.mxu0 %v3493
    %5460 = vmatprep.subr.bf16.mxu0 %v3490
    %5461 = vmatpush2.bf16.msra.mxu0 %v3489
    %5462 = vmatprep.subr.bf16.mxu0 %v3486
    %5463 = vmatpush2.bf16.msra.mxu0 %v3485
    %5464 = vmatprep.subr.bf16.mxu0 %v3482
    %5465 = vmatpush2.bf16.msra.mxu0 %v3481
    %5466 = vmatprep.subr.bf16.mxu0 %v3478
    %5467 = vmatpush2.bf16.msra.mxu0 %v3477
    %5468 = vmatprep.subr.bf16.mxu0 %v3474
    %5469 = vmatpush2.bf16.msra.mxu0 %v3473
    %5470 = vmatprep.subr.bf16.mxu0 %v3470
    %5471 = vmatpush2.bf16.msra.mxu0 %v3469
    %5472 = vmatprep.mubr.bf16.mxu0 %v256
    %5473 = vmatmul.mubr.bf16.gmra.mxu0 %v255
    %v5474 = vpop.f32.mrf.mxu0
    %v5475 = vadd.f32 %v5434, %v5474
    %v5476 = vpop.f32.mrf.mxu0
    %v5477 = vadd.f32 %v5436, %v5476
    %v5478 = vpop.f32.mrf.mxu0
    %v5479 = vpop.f32.mrf.mxu0
    %5480 = vdwg.mxu0
    %5481 = vmatprep.subr.bf16.mxu0 %v3530
    %5482 = vmatpush1.bf16.msra.mxu0 %v3529
    %5483 = vmatprep.subr.bf16.mxu0 %v3526
    %5484 = vmatpush1.bf16.msra.mxu0 %v3525
    %5485 = vmatprep.subr.bf16.mxu0 %v3522
    %5486 = vmatpush1.bf16.msra.mxu0 %v3521
    %5487 = vmatprep.subr.bf16.mxu0 %v3518
    %5488 = vmatpush1.bf16.msra.mxu0 %v3517
    %5489 = vmatprep.subr.bf16.mxu0 %v3514
    %5490 = vmatpush1.bf16.msra.mxu0 %v3513
    %5491 = vmatprep.subr.bf16.mxu0 %v3510
    %5492 = vmatpush1.bf16.msra.mxu0 %v3509
    %5493 = vmatprep.subr.bf16.mxu0 %v3506
    %5494 = vmatpush1.bf16.msra.mxu0 %v3505
    %5495 = vmatprep.subr.bf16.mxu0 %v3502
    %5496 = vmatpush1.bf16.msra.mxu0 %v3501
    %5497 = vmatprep.subr.bf16.mxu0 %v3562
    %5498 = vmatpush2.bf16.msra.mxu0 %v3561
    %5499 = vmatprep.subr.bf16.mxu0 %v3558
    %5500 = vmatpush2.bf16.msra.mxu0 %v3557
    %5501 = vmatprep.subr.bf16.mxu0 %v3554
    %5502 = vmatpush2.bf16.msra.mxu0 %v3553
    %5503 = vmatprep.subr.bf16.mxu0 %v3550
    %5504 = vmatpush2.bf16.msra.mxu0 %v3549
    %5505 = vmatprep.subr.bf16.mxu0 %v3546
    %5506 = vmatpush2.bf16.msra.mxu0 %v3545
    %5507 = vmatprep.subr.bf16.mxu0 %v3542
    %5508 = vmatpush2.bf16.msra.mxu0 %v3541
    %5509 = vmatprep.subr.bf16.mxu0 %v3538
    %5510 = vmatpush2.bf16.msra.mxu0 %v3537
    %5511 = vmatprep.subr.bf16.mxu0 %v3534
    %5512 = vmatpush2.bf16.msra.mxu0 %v3533
    %5513 = vmatprep.mubr.bf16.mxu0 %v258
    %5514 = vmatmul.mubr.bf16.gmra.mxu0 %v257
    %v5515 = vpop.f32.mrf.mxu0
    %v5516 = vadd.f32 %v5475, %v5515
    %v5517 = vpop.f32.mrf.mxu0
    %v5518 = vadd.f32 %v5477, %v5517
    %v5519 = vpop.f32.mrf.mxu0
    %v5520 = vpop.f32.mrf.mxu0
    %5521 = vdwg.mxu0
    %5522 = vmatprep.subr.bf16.mxu0 %v3594
    %5523 = vmatpush1.bf16.msra.mxu0 %v3593
    %5524 = vmatprep.subr.bf16.mxu0 %v3590
    %5525 = vmatpush1.bf16.msra.mxu0 %v3589
    %5526 = vmatprep.subr.bf16.mxu0 %v3586
    %5527 = vmatpush1.bf16.msra.mxu0 %v3585
    %5528 = vmatprep.subr.bf16.mxu0 %v3582
    %5529 = vmatpush1.bf16.msra.mxu0 %v3581
    %5530 = vmatprep.subr.bf16.mxu0 %v3578
    %5531 = vmatpush1.bf16.msra.mxu0 %v3577
    %5532 = vmatprep.subr.bf16.mxu0 %v3574
    %5533 = vmatpush1.bf16.msra.mxu0 %v3573
    %5534 = vmatprep.subr.bf16.mxu0 %v3570
    %5535 = vmatpush1.bf16.msra.mxu0 %v3569
    %5536 = vmatprep.subr.bf16.mxu0 %v3566
    %5537 = vmatpush1.bf16.msra.mxu0 %v3565
    %5538 = vmatprep.subr.bf16.mxu0 %v3626
    %5539 = vmatpush2.bf16.msra.mxu0 %v3625
    %5540 = vmatprep.subr.bf16.mxu0 %v3622
    %5541 = vmatpush2.bf16.msra.mxu0 %v3621
    %5542 = vmatprep.subr.bf16.mxu0 %v3618
    %5543 = vmatpush2.bf16.msra.mxu0 %v3617
    %5544 = vmatprep.subr.bf16.mxu0 %v3614
    %5545 = vmatpush2.bf16.msra.mxu0 %v3613
    %5546 = vmatprep.subr.bf16.mxu0 %v3610
    %5547 = vmatpush2.bf16.msra.mxu0 %v3609
    %5548 = vmatprep.subr.bf16.mxu0 %v3606
    %5549 = vmatpush2.bf16.msra.mxu0 %v3605
    %5550 = vmatprep.subr.bf16.mxu0 %v3602
    %5551 = vmatpush2.bf16.msra.mxu0 %v3601
    %5552 = vmatprep.subr.bf16.mxu0 %v3598
    %5553 = vmatpush2.bf16.msra.mxu0 %v3597
    %5554 = vmatprep.mubr.bf16.mxu0 %v260
    %5555 = vmatmul.mubr.bf16.gmra.mxu0 %v259
    %v5556 = vpop.f32.mrf.mxu0
    %v5557 = vadd.f32 %v5516, %v5556
    %v5558 = vpop.f32.mrf.mxu0
    %v5559 = vadd.f32 %v5518, %v5558
    %v5560 = vpop.f32.mrf.mxu0
    %v5561 = vpop.f32.mrf.mxu0
    %5562 = vdwg.mxu0
    %5563 = vmatprep.subr.bf16.mxu0 %v3658
    %5564 = vmatpush1.bf16.msra.mxu0 %v3657
    %5565 = vmatprep.subr.bf16.mxu0 %v3654
    %5566 = vmatpush1.bf16.msra.mxu0 %v3653
    %5567 = vmatprep.subr.bf16.mxu0 %v3650
    %5568 = vmatpush1.bf16.msra.mxu0 %v3649
    %5569 = vmatprep.subr.bf16.mxu0 %v3646
    %5570 = vmatpush1.bf16.msra.mxu0 %v3645
    %5571 = vmatprep.subr.bf16.mxu0 %v3642
    %5572 = vmatpush1.bf16.msra.mxu0 %v3641
    %5573 = vmatprep.subr.bf16.mxu0 %v3638
    %5574 = vmatpush1.bf16.msra.mxu0 %v3637
    %5575 = vmatprep.subr.bf16.mxu0 %v3634
    %5576 = vmatpush1.bf16.msra.mxu0 %v3633
    %5577 = vmatprep.subr.bf16.mxu0 %v3630
    %5578 = vmatpush1.bf16.msra.mxu0 %v3629
    %5579 = vmatprep.subr.bf16.mxu0 %v3690
    %5580 = vmatpush2.bf16.msra.mxu0 %v3689
    %5581 = vmatprep.subr.bf16.mxu0 %v3686
    %5582 = vmatpush2.bf16.msra.mxu0 %v3685
    %5583 = vmatprep.subr.bf16.mxu0 %v3682
    %5584 = vmatpush2.bf16.msra.mxu0 %v3681
    %5585 = vmatprep.subr.bf16.mxu0 %v3678
    %5586 = vmatpush2.bf16.msra.mxu0 %v3677
    %5587 = vmatprep.subr.bf16.mxu0 %v3674
    %5588 = vmatpush2.bf16.msra.mxu0 %v3673
    %5589 = vmatprep.subr.bf16.mxu0 %v3670
    %5590 = vmatpush2.bf16.msra.mxu0 %v3669
    %5591 = vmatprep.subr.bf16.mxu0 %v3666
    %5592 = vmatpush2.bf16.msra.mxu0 %v3665
    %5593 = vmatprep.subr.bf16.mxu0 %v3662
    %5594 = vmatpush2.bf16.msra.mxu0 %v3661
    %5595 = vmatprep.mubr.bf16.mxu0 %v262
    %5596 = vmatmul.mubr.bf16.gmra.mxu0 %v261
    %v5597 = vpop.f32.mrf.mxu0
    %v5598 = vadd.f32 %v5557, %v5597
    %v5599 = vpop.f32.mrf.mxu0
    %v5600 = vadd.f32 %v5559, %v5599
    %v5601 = vpop.f32.mrf.mxu0
    %v5602 = vpop.f32.mrf.mxu0
    %5603 = vdwg.mxu0
    %5604 = vmatprep.subr.bf16.mxu0 %v3722
    %5605 = vmatpush1.bf16.msra.mxu0 %v3721
    %5606 = vmatprep.subr.bf16.mxu0 %v3718
    %5607 = vmatpush1.bf16.msra.mxu0 %v3717
    %5608 = vmatprep.subr.bf16.mxu0 %v3714
    %5609 = vmatpush1.bf16.msra.mxu0 %v3713
    %5610 = vmatprep.subr.bf16.mxu0 %v3710
    %5611 = vmatpush1.bf16.msra.mxu0 %v3709
    %5612 = vmatprep.subr.bf16.mxu0 %v3706
    %5613 = vmatpush1.bf16.msra.mxu0 %v3705
    %5614 = vmatprep.subr.bf16.mxu0 %v3702
    %5615 = vmatpush1.bf16.msra.mxu0 %v3701
    %5616 = vmatprep.subr.bf16.mxu0 %v3698
    %5617 = vmatpush1.bf16.msra.mxu0 %v3697
    %5618 = vmatprep.subr.bf16.mxu0 %v3694
    %5619 = vmatpush1.bf16.msra.mxu0 %v3693
    %5620 = vmatprep.subr.bf16.mxu0 %v3754
    %5621 = vmatpush2.bf16.msra.mxu0 %v3753
    %5622 = vmatprep.subr.bf16.mxu0 %v3750
    %5623 = vmatpush2.bf16.msra.mxu0 %v3749
    %5624 = vmatprep.subr.bf16.mxu0 %v3746
    %5625 = vmatpush2.bf16.msra.mxu0 %v3745
    %5626 = vmatprep.subr.bf16.mxu0 %v3742
    %5627 = vmatpush2.bf16.msra.mxu0 %v3741
    %5628 = vmatprep.subr.bf16.mxu0 %v3738
    %5629 = vmatpush2.bf16.msra.mxu0 %v3737
    %5630 = vmatprep.subr.bf16.mxu0 %v3734
    %5631 = vmatpush2.bf16.msra.mxu0 %v3733
    %5632 = vmatprep.subr.bf16.mxu0 %v3730
    %5633 = vmatpush2.bf16.msra.mxu0 %v3729
    %5634 = vmatprep.subr.bf16.mxu0 %v3726
    %5635 = vmatpush2.bf16.msra.mxu0 %v3725
    %5636 = vmatprep.mubr.bf16.mxu0 %v264
    %5637 = vmatmul.mubr.bf16.gmra.mxu0 %v263
    %v5638 = vpop.f32.mrf.mxu0
    %v5639 = vadd.f32 %v5598, %v5638
    %v5640 = vpop.f32.mrf.mxu0
    %v5641 = vadd.f32 %v5600, %v5640
    %v5642 = vpop.f32.mrf.mxu0
    %v5643 = vpop.f32.mrf.mxu0
    %5644 = vdwg.mxu0
    %5645 = vmatprep.subr.bf16.mxu0 %v3786
    %5646 = vmatpush1.bf16.msra.mxu0 %v3785
    %5647 = vmatprep.subr.bf16.mxu0 %v3782
    %5648 = vmatpush1.bf16.msra.mxu0 %v3781
    %5649 = vmatprep.subr.bf16.mxu0 %v3778
    %5650 = vmatpush1.bf16.msra.mxu0 %v3777
    %5651 = vmatprep.subr.bf16.mxu0 %v3774
    %5652 = vmatpush1.bf16.msra.mxu0 %v3773
    %5653 = vmatprep.subr.bf16.mxu0 %v3770
    %5654 = vmatpush1.bf16.msra.mxu0 %v3769
    %5655 = vmatprep.subr.bf16.mxu0 %v3766
    %5656 = vmatpush1.bf16.msra.mxu0 %v3765
    %5657 = vmatprep.subr.bf16.mxu0 %v3762
    %5658 = vmatpush1.bf16.msra.mxu0 %v3761
    %5659 = vmatprep.subr.bf16.mxu0 %v3758
    %5660 = vmatpush1.bf16.msra.mxu0 %v3757
    %5661 = vmatprep.subr.bf16.mxu0 %v3818
    %5662 = vmatpush2.bf16.msra.mxu0 %v3817
    %5663 = vmatprep.subr.bf16.mxu0 %v3814
    %5664 = vmatpush2.bf16.msra.mxu0 %v3813
    %5665 = vmatprep.subr.bf16.mxu0 %v3810
    %5666 = vmatpush2.bf16.msra.mxu0 %v3809
    %5667 = vmatprep.subr.bf16.mxu0 %v3806
    %5668 = vmatpush2.bf16.msra.mxu0 %v3805
    %5669 = vmatprep.subr.bf16.mxu0 %v3802
    %5670 = vmatpush2.bf16.msra.mxu0 %v3801
    %5671 = vmatprep.subr.bf16.mxu0 %v3798
    %5672 = vmatpush2.bf16.msra.mxu0 %v3797
    %5673 = vmatprep.subr.bf16.mxu0 %v3794
    %5674 = vmatpush2.bf16.msra.mxu0 %v3793
    %5675 = vmatprep.subr.bf16.mxu0 %v3790
    %5676 = vmatpush2.bf16.msra.mxu0 %v3789
    %5677 = vmatprep.mubr.bf16.mxu0 %v266
    %5678 = vmatmul.mubr.bf16.gmra.mxu0 %v265
    %v5679 = vpop.f32.mrf.mxu0
    %v5680 = vadd.f32 %v5639, %v5679
    %v5681 = vpop.f32.mrf.mxu0
    %v5682 = vadd.f32 %v5641, %v5681
    %v5683 = vpop.f32.mrf.mxu0
    %v5684 = vpop.f32.mrf.mxu0
    %5685 = vdwg.mxu0
    %5686 = vmatprep.subr.bf16.mxu0 %v3850
    %5687 = vmatpush1.bf16.msra.mxu0 %v3849
    %5688 = vmatprep.subr.bf16.mxu0 %v3846
    %5689 = vmatpush1.bf16.msra.mxu0 %v3845
    %5690 = vmatprep.subr.bf16.mxu0 %v3842
    %5691 = vmatpush1.bf16.msra.mxu0 %v3841
    %5692 = vmatprep.subr.bf16.mxu0 %v3838
    %5693 = vmatpush1.bf16.msra.mxu0 %v3837
    %5694 = vmatprep.subr.bf16.mxu0 %v3834
    %5695 = vmatpush1.bf16.msra.mxu0 %v3833
    %5696 = vmatprep.subr.bf16.mxu0 %v3830
    %5697 = vmatpush1.bf16.msra.mxu0 %v3829
    %5698 = vmatprep.subr.bf16.mxu0 %v3826
    %5699 = vmatpush1.bf16.msra.mxu0 %v3825
    %5700 = vmatprep.subr.bf16.mxu0 %v3822
    %5701 = vmatpush1.bf16.msra.mxu0 %v3821
    %5702 = vmatprep.subr.bf16.mxu0 %v3882
    %5703 = vmatpush2.bf16.msra.mxu0 %v3881
    %5704 = vmatprep.subr.bf16.mxu0 %v3878
    %5705 = vmatpush2.bf16.msra.mxu0 %v3877
    %5706 = vmatprep.subr.bf16.mxu0 %v3874
    %5707 = vmatpush2.bf16.msra.mxu0 %v3873
    %5708 = vmatprep.subr.bf16.mxu0 %v3870
    %5709 = vmatpush2.bf16.msra.mxu0 %v3869
    %5710 = vmatprep.subr.bf16.mxu0 %v3866
    %5711 = vmatpush2.bf16.msra.mxu0 %v3865
    %5712 = vmatprep.subr.bf16.mxu0 %v3862
    %5713 = vmatpush2.bf16.msra.mxu0 %v3861
    %5714 = vmatprep.subr.bf16.mxu0 %v3858
    %5715 = vmatpush2.bf16.msra.mxu0 %v3857
    %5716 = vmatprep.subr.bf16.mxu0 %v3854
    %5717 = vmatpush2.bf16.msra.mxu0 %v3853
    %5718 = vmatprep.mubr.bf16.mxu0 %v268
    %5719 = vmatmul.mubr.bf16.gmra.mxu0 %v267
    %v5720 = vpop.f32.mrf.mxu0
    %v5721 = vadd.f32 %v5680, %v5720
    %v5722 = vpop.f32.mrf.mxu0
    %v5723 = vadd.f32 %v5682, %v5722
    %v5724 = vpop.f32.mrf.mxu0
    %v5725 = vpop.f32.mrf.mxu0
    %5726 = vdwg.mxu0
    %5727 = vmatprep.subr.bf16.mxu0 %v3914
    %5728 = vmatpush1.bf16.msra.mxu0 %v3913
    %5729 = vmatprep.subr.bf16.mxu0 %v3910
    %5730 = vmatpush1.bf16.msra.mxu0 %v3909
    %5731 = vmatprep.subr.bf16.mxu0 %v3906
    %5732 = vmatpush1.bf16.msra.mxu0 %v3905
    %5733 = vmatprep.subr.bf16.mxu0 %v3902
    %5734 = vmatpush1.bf16.msra.mxu0 %v3901
    %5735 = vmatprep.subr.bf16.mxu0 %v3898
    %5736 = vmatpush1.bf16.msra.mxu0 %v3897
    %5737 = vmatprep.subr.bf16.mxu0 %v3894
    %5738 = vmatpush1.bf16.msra.mxu0 %v3893
    %5739 = vmatprep.subr.bf16.mxu0 %v3890
    %5740 = vmatpush1.bf16.msra.mxu0 %v3889
    %5741 = vmatprep.subr.bf16.mxu0 %v3886
    %5742 = vmatpush1.bf16.msra.mxu0 %v3885
    %5743 = vmatprep.subr.bf16.mxu0 %v3946
    %5744 = vmatpush2.bf16.msra.mxu0 %v3945
    %5745 = vmatprep.subr.bf16.mxu0 %v3942
    %5746 = vmatpush2.bf16.msra.mxu0 %v3941
    %5747 = vmatprep.subr.bf16.mxu0 %v3938
    %5748 = vmatpush2.bf16.msra.mxu0 %v3937
    %5749 = vmatprep.subr.bf16.mxu0 %v3934
    %5750 = vmatpush2.bf16.msra.mxu0 %v3933
    %5751 = vmatprep.subr.bf16.mxu0 %v3930
    %5752 = vmatpush2.bf16.msra.mxu0 %v3929
    %5753 = vmatprep.subr.bf16.mxu0 %v3926
    %5754 = vmatpush2.bf16.msra.mxu0 %v3925
    %5755 = vmatprep.subr.bf16.mxu0 %v3922
    %5756 = vmatpush2.bf16.msra.mxu0 %v3921
    %5757 = vmatprep.subr.bf16.mxu0 %v3918
    %5758 = vmatpush2.bf16.msra.mxu0 %v3917
    %5759 = vmatprep.mubr.bf16.mxu0 %v270
    %5760 = vmatmul.mubr.bf16.gmra.mxu0 %v269
    %v5761 = vpop.f32.mrf.mxu0
    %v5762 = vadd.f32 %v5721, %v5761
    %v5763 = vpop.f32.mrf.mxu0
    %v5764 = vadd.f32 %v5723, %v5763
    %v5765 = vpop.f32.mrf.mxu0
    %v5766 = vpop.f32.mrf.mxu0
    %5767 = vdwg.mxu0
    %5768 = vmatprep.subr.bf16.mxu0 %v3978
    %5769 = vmatpush1.bf16.msra.mxu0 %v3977
    %5770 = vmatprep.subr.bf16.mxu0 %v3974
    %5771 = vmatpush1.bf16.msra.mxu0 %v3973
    %5772 = vmatprep.subr.bf16.mxu0 %v3970
    %5773 = vmatpush1.bf16.msra.mxu0 %v3969
    %5774 = vmatprep.subr.bf16.mxu0 %v3966
    %5775 = vmatpush1.bf16.msra.mxu0 %v3965
    %5776 = vmatprep.subr.bf16.mxu0 %v3962
    %5777 = vmatpush1.bf16.msra.mxu0 %v3961
    %5778 = vmatprep.subr.bf16.mxu0 %v3958
    %5779 = vmatpush1.bf16.msra.mxu0 %v3957
    %5780 = vmatprep.subr.bf16.mxu0 %v3954
    %5781 = vmatpush1.bf16.msra.mxu0 %v3953
    %5782 = vmatprep.subr.bf16.mxu0 %v3950
    %5783 = vmatpush1.bf16.msra.mxu0 %v3949
    %5784 = vmatprep.subr.bf16.mxu0 %v4010
    %5785 = vmatpush2.bf16.msra.mxu0 %v4009
    %5786 = vmatprep.subr.bf16.mxu0 %v4006
    %5787 = vmatpush2.bf16.msra.mxu0 %v4005
    %5788 = vmatprep.subr.bf16.mxu0 %v4002
    %5789 = vmatpush2.bf16.msra.mxu0 %v4001
    %5790 = vmatprep.subr.bf16.mxu0 %v3998
    %5791 = vmatpush2.bf16.msra.mxu0 %v3997
    %5792 = vmatprep.subr.bf16.mxu0 %v3994
    %5793 = vmatpush2.bf16.msra.mxu0 %v3993
    %5794 = vmatprep.subr.bf16.mxu0 %v3990
    %5795 = vmatpush2.bf16.msra.mxu0 %v3989
    %5796 = vmatprep.subr.bf16.mxu0 %v3986
    %5797 = vmatpush2.bf16.msra.mxu0 %v3985
    %5798 = vmatprep.subr.bf16.mxu0 %v3982
    %5799 = vmatpush2.bf16.msra.mxu0 %v3981
    %5800 = vmatprep.mubr.bf16.mxu0 %v272
    %5801 = vmatmul.mubr.bf16.gmra.mxu0 %v271
    %v5802 = vpop.f32.mrf.mxu0
    %v5803 = vadd.f32 %v5762, %v5802
    %v5804 = vpop.f32.mrf.mxu0
    %v5805 = vadd.f32 %v5764, %v5804
    %v5806 = vpop.f32.mrf.mxu0
    %v5807 = vpop.f32.mrf.mxu0
    %5808 = vdwg.mxu0
    %5809 = vmatprep.subr.bf16.mxu0 %v4042
    %5810 = vmatpush1.bf16.msra.mxu0 %v4041
    %5811 = vmatprep.subr.bf16.mxu0 %v4038
    %5812 = vmatpush1.bf16.msra.mxu0 %v4037
    %5813 = vmatprep.subr.bf16.mxu0 %v4034
    %5814 = vmatpush1.bf16.msra.mxu0 %v4033
    %5815 = vmatprep.subr.bf16.mxu0 %v4030
    %5816 = vmatpush1.bf16.msra.mxu0 %v4029
    %5817 = vmatprep.subr.bf16.mxu0 %v4026
    %5818 = vmatpush1.bf16.msra.mxu0 %v4025
    %5819 = vmatprep.subr.bf16.mxu0 %v4022
    %5820 = vmatpush1.bf16.msra.mxu0 %v4021
    %5821 = vmatprep.subr.bf16.mxu0 %v4018
    %5822 = vmatpush1.bf16.msra.mxu0 %v4017
    %5823 = vmatprep.subr.bf16.mxu0 %v4014
    %5824 = vmatpush1.bf16.msra.mxu0 %v4013
    %5825 = vmatprep.subr.bf16.mxu0 %v4074
    %5826 = vmatpush2.bf16.msra.mxu0 %v4073
    %5827 = vmatprep.subr.bf16.mxu0 %v4070
    %5828 = vmatpush2.bf16.msra.mxu0 %v4069
    %5829 = vmatprep.subr.bf16.mxu0 %v4066
    %5830 = vmatpush2.bf16.msra.mxu0 %v4065
    %5831 = vmatprep.subr.bf16.mxu0 %v4062
    %5832 = vmatpush2.bf16.msra.mxu0 %v4061
    %5833 = vmatprep.subr.bf16.mxu0 %v4058
    %5834 = vmatpush2.bf16.msra.mxu0 %v4057
    %5835 = vmatprep.subr.bf16.mxu0 %v4054
    %5836 = vmatpush2.bf16.msra.mxu0 %v4053
    %5837 = vmatprep.subr.bf16.mxu0 %v4050
    %5838 = vmatpush2.bf16.msra.mxu0 %v4049
    %5839 = vmatprep.subr.bf16.mxu0 %v4046
    %5840 = vmatpush2.bf16.msra.mxu0 %v4045
    %5841 = vmatprep.mubr.bf16.mxu0 %v274
    %5842 = vmatmul.mubr.bf16.gmra.mxu0 %v273
    %v5843 = vpop.f32.mrf.mxu0
    %v5844 = vadd.f32 %v5803, %v5843
    %v5845 = vpop.f32.mrf.mxu0
    %v5846 = vadd.f32 %v5805, %v5845
    %v5847 = vpop.f32.mrf.mxu0
    %v5848 = vpop.f32.mrf.mxu0
    %5849 = vdwg.mxu0
    %5850 = vmatprep.subr.bf16.mxu0 %v4106
    %5851 = vmatpush1.bf16.msra.mxu0 %v4105
    %5852 = vmatprep.subr.bf16.mxu0 %v4102
    %5853 = vmatpush1.bf16.msra.mxu0 %v4101
    %5854 = vmatprep.subr.bf16.mxu0 %v4098
    %5855 = vmatpush1.bf16.msra.mxu0 %v4097
    %5856 = vmatprep.subr.bf16.mxu0 %v4094
    %5857 = vmatpush1.bf16.msra.mxu0 %v4093
    %5858 = vmatprep.subr.bf16.mxu0 %v4090
    %5859 = vmatpush1.bf16.msra.mxu0 %v4089
    %5860 = vmatprep.subr.bf16.mxu0 %v4086
    %5861 = vmatpush1.bf16.msra.mxu0 %v4085
    %5862 = vmatprep.subr.bf16.mxu0 %v4082
    %5863 = vmatpush1.bf16.msra.mxu0 %v4081
    %5864 = vmatprep.subr.bf16.mxu0 %v4078
    %5865 = vmatpush1.bf16.msra.mxu0 %v4077
    %5866 = vmatprep.subr.bf16.mxu0 %v4138
    %5867 = vmatpush2.bf16.msra.mxu0 %v4137
    %5868 = vmatprep.subr.bf16.mxu0 %v4134
    %5869 = vmatpush2.bf16.msra.mxu0 %v4133
    %5870 = vmatprep.subr.bf16.mxu0 %v4130
    %5871 = vmatpush2.bf16.msra.mxu0 %v4129
    %5872 = vmatprep.subr.bf16.mxu0 %v4126
    %5873 = vmatpush2.bf16.msra.mxu0 %v4125
    %5874 = vmatprep.subr.bf16.mxu0 %v4122
    %5875 = vmatpush2.bf16.msra.mxu0 %v4121
    %5876 = vmatprep.subr.bf16.mxu0 %v4118
    %5877 = vmatpush2.bf16.msra.mxu0 %v4117
    %5878 = vmatprep.subr.bf16.mxu0 %v4114
    %5879 = vmatpush2.bf16.msra.mxu0 %v4113
    %5880 = vmatprep.subr.bf16.mxu0 %v4110
    %5881 = vmatpush2.bf16.msra.mxu0 %v4109
    %5882 = vmatprep.mubr.bf16.mxu0 %v276
    %5883 = vmatmul.mubr.bf16.gmra.mxu0 %v275
    %v5884 = vpop.f32.mrf.mxu0
    %v5885 = vadd.f32 %v5844, %v5884
    %v5886 = vpop.f32.mrf.mxu0
    %v5887 = vadd.f32 %v5846, %v5886
    %v5888 = vpop.f32.mrf.mxu0
    %v5889 = vpop.f32.mrf.mxu0
    %5890 = vdwg.mxu0
    %v5891 = vmax.f32 %v5393, 0.0
    %v5892 = vmax.f32 %v5395, 0.0
    %v5893 = vmax.f32 %v5885, 0.0
    %v5894 = vmax.f32 %v5887, 0.0
    %v5895 = vpack.c.bf16 %v5891, %v5891
    %v5896 = vpack.c.bf16 %v5892, %v5892
    %v5897 = vpack.c.bf16 %v5893, %v5893
    %v5898 = vpack.c.bf16 %v5894, %v5894
    %v5899 = vld [vmem:[#allocation8] sm:$0xff]
    %v5900 = vld [vmem:[#allocation8 + $0x8] sm:$0xff]
    %v5901 = vld [vmem:[#allocation8 + $0x10] sm:$0xff]
    %v5902 = vld [vmem:[#allocation8 + $0x18] sm:$0xff]
    %v5903 = vld [vmem:[#allocation8 + $0x20] sm:$0xff]
    %v5904 = vld [vmem:[#allocation8 + $0x28] sm:$0xff]
    %v5905 = vld [vmem:[#allocation8 + $0x30] sm:$0xff]
    %v5906 = vld [vmem:[#allocation8 + $0x38] sm:$0xff]
    %v5907 = vld [vmem:[#allocation8 + $0x40] sm:$0xff]
    %v5908 = vld [vmem:[#allocation8 + $0x48] sm:$0xff]
    %v5909 = vld [vmem:[#allocation8 + $0x50] sm:$0xff]
    %v5910 = vld [vmem:[#allocation8 + $0x58] sm:$0xff]
    %v5911 = vld [vmem:[#allocation8 + $0x60] sm:$0xff]
    %v5912 = vld [vmem:[#allocation8 + $0x68] sm:$0xff]
    %v5913 = vld [vmem:[#allocation8 + $0x70] sm:$0xff]
    %v5914 = vld [vmem:[#allocation8 + $0x78] sm:$0xff]
    %v5915 = vld [vmem:[#allocation8 + $0x80] sm:$0xff]
    %v5916 = vld [vmem:[#allocation8 + $0x88] sm:$0xff]
    %v5917 = vld [vmem:[#allocation8 + $0x90] sm:$0xff]
    %v5918 = vld [vmem:[#allocation8 + $0x98] sm:$0xff]
    %v5919 = vld [vmem:[#allocation8 + $0xa0] sm:$0xff]
    %v5920 = vld [vmem:[#allocation8 + $0xa8] sm:$0xff]
    %v5921 = vld [vmem:[#allocation8 + $0xb0] sm:$0xff]
    %v5922 = vld [vmem:[#allocation8 + $0xb8] sm:$0xff]
    %v5923 = vld [vmem:[#allocation8 + $0xc0] sm:$0xff]
    %v5924 = vld [vmem:[#allocation8 + $0xc8] sm:$0xff]
    %v5925 = vld [vmem:[#allocation8 + $0xd0] sm:$0xff]
    %v5926 = vld [vmem:[#allocation8 + $0xd8] sm:$0xff]
    %v5927 = vld [vmem:[#allocation8 + $0xe0] sm:$0xff]
    %v5928 = vld [vmem:[#allocation8 + $0xe8] sm:$0xff]
    %v5929 = vld [vmem:[#allocation8 + $0xf0] sm:$0xff]
    %v5930 = vld [vmem:[#allocation8 + $0xf8] sm:$0xff]
    %v5931 = vld [vmem:[#allocation8 + $0x100] sm:$0xff]
    %v5932 = vld [vmem:[#allocation8 + $0x108] sm:$0xff]
    %v5933 = vld [vmem:[#allocation8 + $0x110] sm:$0xff]
    %v5934 = vld [vmem:[#allocation8 + $0x118] sm:$0xff]
    %v5935 = vld [vmem:[#allocation8 + $0x120] sm:$0xff]
    %v5936 = vld [vmem:[#allocation8 + $0x128] sm:$0xff]
    %v5937 = vld [vmem:[#allocation8 + $0x130] sm:$0xff]
    %v5938 = vld [vmem:[#allocation8 + $0x138] sm:$0xff]
    %v5939 = vld [vmem:[#allocation8 + $0x140] sm:$0xff]
    %v5940 = vld [vmem:[#allocation8 + $0x148] sm:$0xff]
    %v5941 = vld [vmem:[#allocation8 + $0x150] sm:$0xff]
    %v5942 = vld [vmem:[#allocation8 + $0x158] sm:$0xff]
    %v5943 = vld [vmem:[#allocation8 + $0x160] sm:$0xff]
    %v5944 = vld [vmem:[#allocation8 + $0x168] sm:$0xff]
    %v5945 = vld [vmem:[#allocation8 + $0x170] sm:$0xff]
    %v5946 = vld [vmem:[#allocation8 + $0x178] sm:$0xff]
    %v5947 = vld [vmem:[#allocation8 + $0x180] sm:$0xff]
    %v5948 = vld [vmem:[#allocation8 + $0x188] sm:$0xff]
    %v5949 = vld [vmem:[#allocation8 + $0x190] sm:$0xff]
    %v5950 = vld [vmem:[#allocation8 + $0x198] sm:$0xff]
    %v5951 = vld [vmem:[#allocation8 + $0x1a0] sm:$0xff]
    %v5952 = vld [vmem:[#allocation8 + $0x1a8] sm:$0xff]
    %v5953 = vld [vmem:[#allocation8 + $0x1b0] sm:$0xff]
    %v5954 = vld [vmem:[#allocation8 + $0x1b8] sm:$0xff]
    %v5955 = vld [vmem:[#allocation8 + $0x1c0] sm:$0xff]
    %v5956 = vld [vmem:[#allocation8 + $0x1c8] sm:$0xff]
    %v5957 = vld [vmem:[#allocation8 + $0x1d0] sm:$0xff]
    %v5958 = vld [vmem:[#allocation8 + $0x1d8] sm:$0xff]
    %v5959 = vld [vmem:[#allocation8 + $0x1e0] sm:$0xff]
    %v5960 = vld [vmem:[#allocation8 + $0x1e8] sm:$0xff]
    %v5961 = vld [vmem:[#allocation8 + $0x1f0] sm:$0xff]
    %v5962 = vld [vmem:[#allocation8 + $0x1f8] sm:$0xff]
    %v5963 = vld [vmem:[#allocation8 + $0x200] sm:$0xff]
    %v5964 = vld [vmem:[#allocation8 + $0x208] sm:$0xff]
    %v5965 = vld [vmem:[#allocation8 + $0x210] sm:$0xff]
    %v5966 = vld [vmem:[#allocation8 + $0x218] sm:$0xff]
    %v5967 = vld [vmem:[#allocation8 + $0x220] sm:$0xff]
    %v5968 = vld [vmem:[#allocation8 + $0x228] sm:$0xff]
    %v5969 = vld [vmem:[#allocation8 + $0x230] sm:$0xff]
    %v5970 = vld [vmem:[#allocation8 + $0x238] sm:$0xff]
    %v5971 = vld [vmem:[#allocation8 + $0x240] sm:$0xff]
    %v5972 = vld [vmem:[#allocation8 + $0x248] sm:$0xff]
    %v5973 = vld [vmem:[#allocation8 + $0x250] sm:$0xff]
    %v5974 = vld [vmem:[#allocation8 + $0x258] sm:$0xff]
    %v5975 = vld [vmem:[#allocation8 + $0x260] sm:$0xff]
    %v5976 = vld [vmem:[#allocation8 + $0x268] sm:$0xff]
    %v5977 = vld [vmem:[#allocation8 + $0x270] sm:$0xff]
    %v5978 = vld [vmem:[#allocation8 + $0x278] sm:$0xff]
    %v5979 = vld [vmem:[#allocation8 + $0x280] sm:$0xff]
    %v5980 = vld [vmem:[#allocation8 + $0x288] sm:$0xff]
    %v5981 = vld [vmem:[#allocation8 + $0x290] sm:$0xff]
    %v5982 = vld [vmem:[#allocation8 + $0x298] sm:$0xff]
    %v5983 = vld [vmem:[#allocation8 + $0x2a0] sm:$0xff]
    %v5984 = vld [vmem:[#allocation8 + $0x2a8] sm:$0xff]
    %v5985 = vld [vmem:[#allocation8 + $0x2b0] sm:$0xff]
    %v5986 = vld [vmem:[#allocation8 + $0x2b8] sm:$0xff]
    %v5987 = vld [vmem:[#allocation8 + $0x2c0] sm:$0xff]
    %v5988 = vld [vmem:[#allocation8 + $0x2c8] sm:$0xff]
    %v5989 = vld [vmem:[#allocation8 + $0x2d0] sm:$0xff]
    %v5990 = vld [vmem:[#allocation8 + $0x2d8] sm:$0xff]
    %v5991 = vld [vmem:[#allocation8 + $0x2e0] sm:$0xff]
    %v5992 = vld [vmem:[#allocation8 + $0x2e8] sm:$0xff]
    %v5993 = vld [vmem:[#allocation8 + $0x2f0] sm:$0xff]
    %v5994 = vld [vmem:[#allocation8 + $0x2f8] sm:$0xff]
    %v5995 = vld [vmem:[#allocation8 + $0x300] sm:$0xff]
    %v5996 = vld [vmem:[#allocation8 + $0x308] sm:$0xff]
    %v5997 = vld [vmem:[#allocation8 + $0x310] sm:$0xff]
    %v5998 = vld [vmem:[#allocation8 + $0x318] sm:$0xff]
    %v5999 = vld [vmem:[#allocation8 + $0x320] sm:$0xff]
    %v6000 = vld [vmem:[#allocation8 + $0x328] sm:$0xff]
    %v6001 = vld [vmem:[#allocation8 + $0x330] sm:$0xff]
    %v6002 = vld [vmem:[#allocation8 + $0x338] sm:$0xff]
    %v6003 = vld [vmem:[#allocation8 + $0x340] sm:$0xff]
    %v6004 = vld [vmem:[#allocation8 + $0x348] sm:$0xff]
    %v6005 = vld [vmem:[#allocation8 + $0x350] sm:$0xff]
    %v6006 = vld [vmem:[#allocation8 + $0x358] sm:$0xff]
    %v6007 = vld [vmem:[#allocation8 + $0x360] sm:$0xff]
    %v6008 = vld [vmem:[#allocation8 + $0x368] sm:$0xff]
    %v6009 = vld [vmem:[#allocation8 + $0x370] sm:$0xff]
    %v6010 = vld [vmem:[#allocation8 + $0x378] sm:$0xff]
    %v6011 = vld [vmem:[#allocation8 + $0x380] sm:$0xff]
    %v6012 = vld [vmem:[#allocation8 + $0x388] sm:$0xff]
    %v6013 = vld [vmem:[#allocation8 + $0x390] sm:$0xff]
    %v6014 = vld [vmem:[#allocation8 + $0x398] sm:$0xff]
    %v6015 = vld [vmem:[#allocation8 + $0x3a0] sm:$0xff]
    %v6016 = vld [vmem:[#allocation8 + $0x3a8] sm:$0xff]
    %v6017 = vld [vmem:[#allocation8 + $0x3b0] sm:$0xff]
    %v6018 = vld [vmem:[#allocation8 + $0x3b8] sm:$0xff]
    %v6019 = vld [vmem:[#allocation8 + $0x3c0] sm:$0xff]
    %v6020 = vld [vmem:[#allocation8 + $0x3c8] sm:$0xff]
    %v6021 = vld [vmem:[#allocation8 + $0x3d0] sm:$0xff]
    %v6022 = vld [vmem:[#allocation8 + $0x3d8] sm:$0xff]
    %v6023 = vld [vmem:[#allocation8 + $0x3e0] sm:$0xff]
    %v6024 = vld [vmem:[#allocation8 + $0x3e8] sm:$0xff]
    %v6025 = vld [vmem:[#allocation8 + $0x3f0] sm:$0xff]
    %v6026 = vld [vmem:[#allocation8 + $0x3f8] sm:$0xff]
    %v6027 = vld [vmem:[#allocation10] sm:$0xf]
    %v6029 = vlaneseq
    %v6030 = vshrl.u32 %v6029, 7
    %v6031 = vsub.s32 0, %v6030
    %v6032 = vrot.slane %v6027, %v6031
    %v6033 = vlaneseq
    %v6034 = vshrl.u32 %v6033, 7
    %v6035 = vsub.s32 1, %v6034
    %v6036 = vrot.slane %v6027, %v6035
    %v6037 = vlaneseq
    %v6038 = vshrl.u32 %v6037, 7
    %v6039 = vsub.s32 2, %v6038
    %v6040 = vrot.slane %v6027, %v6039
    %v6041 = vlaneseq
    %v6042 = vshrl.u32 %v6041, 7
    %v6043 = vsub.s32 3, %v6042
    %v6044 = vrot.slane %v6027, %v6043
    %v6177 = vunpack.c.l.b16 %v5899
    %v6178 = vunpack.c.h.b16 %v5899
    %v6179 = vunpack.c.l.b16 %v5900
    %v6180 = vunpack.c.h.b16 %v5900
    %v6181 = vunpack.c.l.b16 %v5901
    %v6182 = vunpack.c.h.b16 %v5901
    %v6183 = vunpack.c.l.b16 %v5902
    %v6184 = vunpack.c.h.b16 %v5902
    %v6185 = vunpack.c.l.b16 %v5903
    %v6186 = vunpack.c.h.b16 %v5903
    %v6187 = vunpack.c.l.b16 %v5904
    %v6188 = vunpack.c.h.b16 %v5904
    %v6189 = vunpack.c.l.b16 %v5905
    %v6190 = vunpack.c.h.b16 %v5905
    %v6191 = vunpack.c.l.b16 %v5906
    %v6192 = vunpack.c.h.b16 %v5906
    %v6193 = vunpack.c.l.b16 %v5907
    %v6194 = vunpack.c.h.b16 %v5907
    %v6195 = vunpack.c.l.b16 %v5908
    %v6196 = vunpack.c.h.b16 %v5908
    %v6197 = vunpack.c.l.b16 %v5909
    %v6198 = vunpack.c.h.b16 %v5909
    %v6199 = vunpack.c.l.b16 %v5910
    %v6200 = vunpack.c.h.b16 %v5910
    %v6201 = vunpack.c.l.b16 %v5911
    %v6202 = vunpack.c.h.b16 %v5911
    %v6203 = vunpack.c.l.b16 %v5912
    %v6204 = vunpack.c.h.b16 %v5912
    %v6205 = vunpack.c.l.b16 %v5913
    %v6206 = vunpack.c.h.b16 %v5913
    %v6207 = vunpack.c.l.b16 %v5914
    %v6208 = vunpack.c.h.b16 %v5914
    %v6209 = vunpack.c.l.b16 %v5915
    %v6210 = vunpack.c.h.b16 %v5915
    %v6211 = vunpack.c.l.b16 %v5916
    %v6212 = vunpack.c.h.b16 %v5916
    %v6213 = vunpack.c.l.b16 %v5917
    %v6214 = vunpack.c.h.b16 %v5917
    %v6215 = vunpack.c.l.b16 %v5918
    %v6216 = vunpack.c.h.b16 %v5918
    %v6217 = vunpack.c.l.b16 %v5919
    %v6218 = vunpack.c.h.b16 %v5919
    %v6219 = vunpack.c.l.b16 %v5920
    %v6220 = vunpack.c.h.b16 %v5920
    %v6221 = vunpack.c.l.b16 %v5921
    %v6222 = vunpack.c.h.b16 %v5921
    %v6223 = vunpack.c.l.b16 %v5922
    %v6224 = vunpack.c.h.b16 %v5922
    %v6225 = vunpack.c.l.b16 %v5923
    %v6226 = vunpack.c.h.b16 %v5923
    %v6227 = vunpack.c.l.b16 %v5924
    %v6228 = vunpack.c.h.b16 %v5924
    %v6229 = vunpack.c.l.b16 %v5925
    %v6230 = vunpack.c.h.b16 %v5925
    %v6231 = vunpack.c.l.b16 %v5926
    %v6232 = vunpack.c.h.b16 %v5926
    %v6233 = vunpack.c.l.b16 %v5927
    %v6234 = vunpack.c.h.b16 %v5927
    %v6235 = vunpack.c.l.b16 %v5928
    %v6236 = vunpack.c.h.b16 %v5928
    %v6237 = vunpack.c.l.b16 %v5929
    %v6238 = vunpack.c.h.b16 %v5929
    %v6239 = vunpack.c.l.b16 %v5930
    %v6240 = vunpack.c.h.b16 %v5930
    %v6241 = vunpack.c.l.b16 %v5931
    %v6242 = vunpack.c.h.b16 %v5931
    %v6243 = vunpack.c.l.b16 %v5932
    %v6244 = vunpack.c.h.b16 %v5932
    %v6245 = vunpack.c.l.b16 %v5933
    %v6246 = vunpack.c.h.b16 %v5933
    %v6247 = vunpack.c.l.b16 %v5934
    %v6248 = vunpack.c.h.b16 %v5934
    %v6249 = vunpack.c.l.b16 %v5935
    %v6250 = vunpack.c.h.b16 %v5935
    %v6251 = vunpack.c.l.b16 %v5936
    %v6252 = vunpack.c.h.b16 %v5936
    %v6253 = vunpack.c.l.b16 %v5937
    %v6254 = vunpack.c.h.b16 %v5937
    %v6255 = vunpack.c.l.b16 %v5938
    %v6256 = vunpack.c.h.b16 %v5938
    %v6257 = vunpack.c.l.b16 %v5939
    %v6258 = vunpack.c.h.b16 %v5939
    %v6259 = vunpack.c.l.b16 %v5940
    %v6260 = vunpack.c.h.b16 %v5940
    %v6261 = vunpack.c.l.b16 %v5941
    %v6262 = vunpack.c.h.b16 %v5941
    %v6263 = vunpack.c.l.b16 %v5942
    %v6264 = vunpack.c.h.b16 %v5942
    %v6265 = vunpack.c.l.b16 %v5943
    %v6266 = vunpack.c.h.b16 %v5943
    %v6267 = vunpack.c.l.b16 %v5944
    %v6268 = vunpack.c.h.b16 %v5944
    %v6269 = vunpack.c.l.b16 %v5945
    %v6270 = vunpack.c.h.b16 %v5945
    %v6271 = vunpack.c.l.b16 %v5946
    %v6272 = vunpack.c.h.b16 %v5946
    %v6273 = vunpack.c.l.b16 %v5947
    %v6274 = vunpack.c.h.b16 %v5947
    %v6275 = vunpack.c.l.b16 %v5948
    %v6276 = vunpack.c.h.b16 %v5948
    %v6277 = vunpack.c.l.b16 %v5949
    %v6278 = vunpack.c.h.b16 %v5949
    %v6279 = vunpack.c.l.b16 %v5950
    %v6280 = vunpack.c.h.b16 %v5950
    %v6281 = vunpack.c.l.b16 %v5951
    %v6282 = vunpack.c.h.b16 %v5951
    %v6283 = vunpack.c.l.b16 %v5952
    %v6284 = vunpack.c.h.b16 %v5952
    %v6285 = vunpack.c.l.b16 %v5953
    %v6286 = vunpack.c.h.b16 %v5953
    %v6287 = vunpack.c.l.b16 %v5954
    %v6288 = vunpack.c.h.b16 %v5954
    %v6289 = vunpack.c.l.b16 %v5955
    %v6290 = vunpack.c.h.b16 %v5955
    %v6291 = vunpack.c.l.b16 %v5956
    %v6292 = vunpack.c.h.b16 %v5956
    %v6293 = vunpack.c.l.b16 %v5957
    %v6294 = vunpack.c.h.b16 %v5957
    %v6295 = vunpack.c.l.b16 %v5958
    %v6296 = vunpack.c.h.b16 %v5958
    %v6297 = vunpack.c.l.b16 %v5959
    %v6298 = vunpack.c.h.b16 %v5959
    %v6299 = vunpack.c.l.b16 %v5960
    %v6300 = vunpack.c.h.b16 %v5960
    %v6301 = vunpack.c.l.b16 %v5961
    %v6302 = vunpack.c.h.b16 %v5961
    %v6303 = vunpack.c.l.b16 %v5962
    %v6304 = vunpack.c.h.b16 %v5962
    %v6305 = vunpack.c.l.b16 %v5963
    %v6306 = vunpack.c.h.b16 %v5963
    %v6307 = vunpack.c.l.b16 %v5964
    %v6308 = vunpack.c.h.b16 %v5964
    %v6309 = vunpack.c.l.b16 %v5965
    %v6310 = vunpack.c.h.b16 %v5965
    %v6311 = vunpack.c.l.b16 %v5966
    %v6312 = vunpack.c.h.b16 %v5966
    %v6313 = vunpack.c.l.b16 %v5967
    %v6314 = vunpack.c.h.b16 %v5967
    %v6315 = vunpack.c.l.b16 %v5968
    %v6316 = vunpack.c.h.b16 %v5968
    %v6317 = vunpack.c.l.b16 %v5969
    %v6318 = vunpack.c.h.b16 %v5969
    %v6319 = vunpack.c.l.b16 %v5970
    %v6320 = vunpack.c.h.b16 %v5970
    %v6321 = vunpack.c.l.b16 %v5971
    %v6322 = vunpack.c.h.b16 %v5971
    %v6323 = vunpack.c.l.b16 %v5972
    %v6324 = vunpack.c.h.b16 %v5972
    %v6325 = vunpack.c.l.b16 %v5973
    %v6326 = vunpack.c.h.b16 %v5973
    %v6327 = vunpack.c.l.b16 %v5974
    %v6328 = vunpack.c.h.b16 %v5974
    %v6329 = vunpack.c.l.b16 %v5975
    %v6330 = vunpack.c.h.b16 %v5975
    %v6331 = vunpack.c.l.b16 %v5976
    %v6332 = vunpack.c.h.b16 %v5976
    %v6333 = vunpack.c.l.b16 %v5977
    %v6334 = vunpack.c.h.b16 %v5977
    %v6335 = vunpack.c.l.b16 %v5978
    %v6336 = vunpack.c.h.b16 %v5978
    %v6337 = vunpack.c.l.b16 %v5979
    %v6338 = vunpack.c.h.b16 %v5979
    %v6339 = vunpack.c.l.b16 %v5980
    %v6340 = vunpack.c.h.b16 %v5980
    %v6341 = vunpack.c.l.b16 %v5981
    %v6342 = vunpack.c.h.b16 %v5981
    %v6343 = vunpack.c.l.b16 %v5982
    %v6344 = vunpack.c.h.b16 %v5982
    %v6345 = vunpack.c.l.b16 %v5983
    %v6346 = vunpack.c.h.b16 %v5983
    %v6347 = vunpack.c.l.b16 %v5984
    %v6348 = vunpack.c.h.b16 %v5984
    %v6349 = vunpack.c.l.b16 %v5985
    %v6350 = vunpack.c.h.b16 %v5985
    %v6351 = vunpack.c.l.b16 %v5986
    %v6352 = vunpack.c.h.b16 %v5986
    %v6353 = vunpack.c.l.b16 %v5987
    %v6354 = vunpack.c.h.b16 %v5987
    %v6355 = vunpack.c.l.b16 %v5988
    %v6356 = vunpack.c.h.b16 %v5988
    %v6357 = vunpack.c.l.b16 %v5989
    %v6358 = vunpack.c.h.b16 %v5989
    %v6359 = vunpack.c.l.b16 %v5990
    %v6360 = vunpack.c.h.b16 %v5990
    %v6361 = vunpack.c.l.b16 %v5991
    %v6362 = vunpack.c.h.b16 %v5991
    %v6363 = vunpack.c.l.b16 %v5992
    %v6364 = vunpack.c.h.b16 %v5992
    %v6365 = vunpack.c.l.b16 %v5993
    %v6366 = vunpack.c.h.b16 %v5993
    %v6367 = vunpack.c.l.b16 %v5994
    %v6368 = vunpack.c.h.b16 %v5994
    %v6369 = vunpack.c.l.b16 %v5995
    %v6370 = vunpack.c.h.b16 %v5995
    %v6371 = vunpack.c.l.b16 %v5996
    %v6372 = vunpack.c.h.b16 %v5996
    %v6373 = vunpack.c.l.b16 %v5997
    %v6374 = vunpack.c.h.b16 %v5997
    %v6375 = vunpack.c.l.b16 %v5998
    %v6376 = vunpack.c.h.b16 %v5998
    %v6377 = vunpack.c.l.b16 %v5999
    %v6378 = vunpack.c.h.b16 %v5999
    %v6379 = vunpack.c.l.b16 %v6000
    %v6380 = vunpack.c.h.b16 %v6000
    %v6381 = vunpack.c.l.b16 %v6001
    %v6382 = vunpack.c.h.b16 %v6001
    %v6383 = vunpack.c.l.b16 %v6002
    %v6384 = vunpack.c.h.b16 %v6002
    %v6385 = vunpack.c.l.b16 %v6003
    %v6386 = vunpack.c.h.b16 %v6003
    %v6387 = vunpack.c.l.b16 %v6004
    %v6388 = vunpack.c.h.b16 %v6004
    %v6389 = vunpack.c.l.b16 %v6005
    %v6390 = vunpack.c.h.b16 %v6005
    %v6391 = vunpack.c.l.b16 %v6006
    %v6392 = vunpack.c.h.b16 %v6006
    %v6393 = vunpack.c.l.b16 %v6007
    %v6394 = vunpack.c.h.b16 %v6007
    %v6395 = vunpack.c.l.b16 %v6008
    %v6396 = vunpack.c.h.b16 %v6008
    %v6397 = vunpack.c.l.b16 %v6009
    %v6398 = vunpack.c.h.b16 %v6009
    %v6399 = vunpack.c.l.b16 %v6010
    %v6400 = vunpack.c.h.b16 %v6010
    %v6401 = vunpack.c.l.b16 %v6011
    %v6402 = vunpack.c.h.b16 %v6011
    %v6403 = vunpack.c.l.b16 %v6012
    %v6404 = vunpack.c.h.b16 %v6012
    %v6405 = vunpack.c.l.b16 %v6013
    %v6406 = vunpack.c.h.b16 %v6013
    %v6407 = vunpack.c.l.b16 %v6014
    %v6408 = vunpack.c.h.b16 %v6014
    %v6409 = vunpack.c.l.b16 %v6015
    %v6410 = vunpack.c.h.b16 %v6015
    %v6411 = vunpack.c.l.b16 %v6016
    %v6412 = vunpack.c.h.b16 %v6016
    %v6413 = vunpack.c.l.b16 %v6017
    %v6414 = vunpack.c.h.b16 %v6017
    %v6415 = vunpack.c.l.b16 %v6018
    %v6416 = vunpack.c.h.b16 %v6018
    %v6417 = vunpack.c.l.b16 %v6019
    %v6418 = vunpack.c.h.b16 %v6019
    %v6419 = vunpack.c.l.b16 %v6020
    %v6420 = vunpack.c.h.b16 %v6020
    %v6421 = vunpack.c.l.b16 %v6021
    %v6422 = vunpack.c.h.b16 %v6021
    %v6423 = vunpack.c.l.b16 %v6022
    %v6424 = vunpack.c.h.b16 %v6022
    %v6425 = vunpack.c.l.b16 %v6023
    %v6426 = vunpack.c.h.b16 %v6023
    %v6427 = vunpack.c.l.b16 %v6024
    %v6428 = vunpack.c.h.b16 %v6024
    %v6429 = vunpack.c.l.b16 %v6025
    %v6430 = vunpack.c.h.b16 %v6025
    %v6431 = vunpack.c.l.b16 %v6026
    %v6432 = vunpack.c.h.b16 %v6026
    %v6433 = vpack.c.b16 %v6181, %v6177
    %v6434 = vpack.c.b16 %v6182, %v6178
    %v6435 = vpack.c.b16 %v6183, %v6179
    %v6436 = vpack.c.b16 %v6184, %v6180
    %v6437 = vpack.c.b16 %v6189, %v6185
    %v6438 = vpack.c.b16 %v6190, %v6186
    %v6439 = vpack.c.b16 %v6191, %v6187
    %v6440 = vpack.c.b16 %v6192, %v6188
    %v6441 = vpack.c.b16 %v6197, %v6193
    %v6442 = vpack.c.b16 %v6198, %v6194
    %v6443 = vpack.c.b16 %v6199, %v6195
    %v6444 = vpack.c.b16 %v6200, %v6196
    %v6445 = vpack.c.b16 %v6205, %v6201
    %v6446 = vpack.c.b16 %v6206, %v6202
    %v6447 = vpack.c.b16 %v6207, %v6203
    %v6448 = vpack.c.b16 %v6208, %v6204
    %v6449 = vpack.c.b16 %v6213, %v6209
    %v6450 = vpack.c.b16 %v6214, %v6210
    %v6451 = vpack.c.b16 %v6215, %v6211
    %v6452 = vpack.c.b16 %v6216, %v6212
    %v6453 = vpack.c.b16 %v6221, %v6217
    %v6454 = vpack.c.b16 %v6222, %v6218
    %v6455 = vpack.c.b16 %v6223, %v6219
    %v6456 = vpack.c.b16 %v6224, %v6220
    %v6457 = vpack.c.b16 %v6229, %v6225
    %v6458 = vpack.c.b16 %v6230, %v6226
    %v6459 = vpack.c.b16 %v6231, %v6227
    %v6460 = vpack.c.b16 %v6232, %v6228
    %v6461 = vpack.c.b16 %v6237, %v6233
    %v6462 = vpack.c.b16 %v6238, %v6234
    %v6463 = vpack.c.b16 %v6239, %v6235
    %v6464 = vpack.c.b16 %v6240, %v6236
    %v6465 = vpack.c.b16 %v6245, %v6241
    %v6466 = vpack.c.b16 %v6246, %v6242
    %v6467 = vpack.c.b16 %v6247, %v6243
    %v6468 = vpack.c.b16 %v6248, %v6244
    %v6469 = vpack.c.b16 %v6253, %v6249
    %v6470 = vpack.c.b16 %v6254, %v6250
    %v6471 = vpack.c.b16 %v6255, %v6251
    %v6472 = vpack.c.b16 %v6256, %v6252
    %v6473 = vpack.c.b16 %v6261, %v6257
    %v6474 = vpack.c.b16 %v6262, %v6258
    %v6475 = vpack.c.b16 %v6263, %v6259
    %v6476 = vpack.c.b16 %v6264, %v6260
    %v6477 = vpack.c.b16 %v6269, %v6265
    %v6478 = vpack.c.b16 %v6270, %v6266
    %v6479 = vpack.c.b16 %v6271, %v6267
    %v6480 = vpack.c.b16 %v6272, %v6268
    %v6481 = vpack.c.b16 %v6277, %v6273
    %v6482 = vpack.c.b16 %v6278, %v6274
    %v6483 = vpack.c.b16 %v6279, %v6275
    %v6484 = vpack.c.b16 %v6280, %v6276
    %v6485 = vpack.c.b16 %v6285, %v6281
    %v6486 = vpack.c.b16 %v6286, %v6282
    %v6487 = vpack.c.b16 %v6287, %v6283
    %v6488 = vpack.c.b16 %v6288, %v6284
    %v6489 = vpack.c.b16 %v6293, %v6289
    %v6490 = vpack.c.b16 %v6294, %v6290
    %v6491 = vpack.c.b16 %v6295, %v6291
    %v6492 = vpack.c.b16 %v6296, %v6292
    %v6493 = vpack.c.b16 %v6301, %v6297
    %v6494 = vpack.c.b16 %v6302, %v6298
    %v6495 = vpack.c.b16 %v6303, %v6299
    %v6496 = vpack.c.b16 %v6304, %v6300
    %v6497 = vpack.c.b16 %v6309, %v6305
    %v6498 = vpack.c.b16 %v6310, %v6306
    %v6499 = vpack.c.b16 %v6311, %v6307
    %v6500 = vpack.c.b16 %v6312, %v6308
    %v6501 = vpack.c.b16 %v6317, %v6313
    %v6502 = vpack.c.b16 %v6318, %v6314
    %v6503 = vpack.c.b16 %v6319, %v6315
    %v6504 = vpack.c.b16 %v6320, %v6316
    %v6505 = vpack.c.b16 %v6325, %v6321
    %v6506 = vpack.c.b16 %v6326, %v6322
    %v6507 = vpack.c.b16 %v6327, %v6323
    %v6508 = vpack.c.b16 %v6328, %v6324
    %v6509 = vpack.c.b16 %v6333, %v6329
    %v6510 = vpack.c.b16 %v6334, %v6330
    %v6511 = vpack.c.b16 %v6335, %v6331
    %v6512 = vpack.c.b16 %v6336, %v6332
    %v6513 = vpack.c.b16 %v6341, %v6337
    %v6514 = vpack.c.b16 %v6342, %v6338
    %v6515 = vpack.c.b16 %v6343, %v6339
    %v6516 = vpack.c.b16 %v6344, %v6340
    %v6517 = vpack.c.b16 %v6349, %v6345
    %v6518 = vpack.c.b16 %v6350, %v6346
    %v6519 = vpack.c.b16 %v6351, %v6347
    %v6520 = vpack.c.b16 %v6352, %v6348
    %v6521 = vpack.c.b16 %v6357, %v6353
    %v6522 = vpack.c.b16 %v6358, %v6354
    %v6523 = vpack.c.b16 %v6359, %v6355
    %v6524 = vpack.c.b16 %v6360, %v6356
    %v6525 = vpack.c.b16 %v6365, %v6361
    %v6526 = vpack.c.b16 %v6366, %v6362
    %v6527 = vpack.c.b16 %v6367, %v6363
    %v6528 = vpack.c.b16 %v6368, %v6364
    %v6529 = vpack.c.b16 %v6373, %v6369
    %v6530 = vpack.c.b16 %v6374, %v6370
    %v6531 = vpack.c.b16 %v6375, %v6371
    %v6532 = vpack.c.b16 %v6376, %v6372
    %v6533 = vpack.c.b16 %v6381, %v6377
    %v6534 = vpack.c.b16 %v6382, %v6378
    %v6535 = vpack.c.b16 %v6383, %v6379
    %v6536 = vpack.c.b16 %v6384, %v6380
    %v6537 = vpack.c.b16 %v6389, %v6385
    %v6538 = vpack.c.b16 %v6390, %v6386
    %v6539 = vpack.c.b16 %v6391, %v6387
    %v6540 = vpack.c.b16 %v6392, %v6388
    %v6541 = vpack.c.b16 %v6397, %v6393
    %v6542 = vpack.c.b16 %v6398, %v6394
    %v6543 = vpack.c.b16 %v6399, %v6395
    %v6544 = vpack.c.b16 %v6400, %v6396
    %v6545 = vpack.c.b16 %v6405, %v6401
    %v6546 = vpack.c.b16 %v6406, %v6402
    %v6547 = vpack.c.b16 %v6407, %v6403
    %v6548 = vpack.c.b16 %v6408, %v6404
    %v6549 = vpack.c.b16 %v6413, %v6409
    %v6550 = vpack.c.b16 %v6414, %v6410
    %v6551 = vpack.c.b16 %v6415, %v6411
    %v6552 = vpack.c.b16 %v6416, %v6412
    %v6553 = vpack.c.b16 %v6421, %v6417
    %v6554 = vpack.c.b16 %v6422, %v6418
    %v6555 = vpack.c.b16 %v6423, %v6419
    %v6556 = vpack.c.b16 %v6424, %v6420
    %v6557 = vpack.c.b16 %v6429, %v6425
    %v6558 = vpack.c.b16 %v6430, %v6426
    %v6559 = vpack.c.b16 %v6431, %v6427
    %v6560 = vpack.c.b16 %v6432, %v6428
    %6689 = vmatprep.subr.bf16.mxu0 %v6462
    %6690 = vmatpush1.bf16.msra.mxu0 %v6461
    %6691 = vmatprep.subr.bf16.mxu0 %v6458
    %6692 = vmatpush1.bf16.msra.mxu0 %v6457
    %6693 = vmatprep.subr.bf16.mxu0 %v6454
    %6694 = vmatpush1.bf16.msra.mxu0 %v6453
    %6695 = vmatprep.subr.bf16.mxu0 %v6450
    %6696 = vmatpush1.bf16.msra.mxu0 %v6449
    %6697 = vmatprep.subr.bf16.mxu0 %v6446
    %6698 = vmatpush1.bf16.msra.mxu0 %v6445
    %6699 = vmatprep.subr.bf16.mxu0 %v6442
    %6700 = vmatpush1.bf16.msra.mxu0 %v6441
    %6701 = vmatprep.subr.bf16.mxu0 %v6438
    %6702 = vmatpush1.bf16.msra.mxu0 %v6437
    %6703 = vmatprep.subr.bf16.mxu0 %v6434
    %6704 = vmatpush1.bf16.msra.mxu0 %v6433
    %6705 = vmatprep.subr.bf16.mxu0 %v6494
    %6706 = vmatpush2.bf16.msra.mxu0 %v6493
    %6707 = vmatprep.subr.bf16.mxu0 %v6490
    %6708 = vmatpush2.bf16.msra.mxu0 %v6489
    %6709 = vmatprep.subr.bf16.mxu0 %v6486
    %6710 = vmatpush2.bf16.msra.mxu0 %v6485
    %6711 = vmatprep.subr.bf16.mxu0 %v6482
    %6712 = vmatpush2.bf16.msra.mxu0 %v6481
    %6713 = vmatprep.subr.bf16.mxu0 %v6478
    %6714 = vmatpush2.bf16.msra.mxu0 %v6477
    %6715 = vmatprep.subr.bf16.mxu0 %v6474
    %6716 = vmatpush2.bf16.msra.mxu0 %v6473
    %6717 = vmatprep.subr.bf16.mxu0 %v6470
    %6718 = vmatpush2.bf16.msra.mxu0 %v6469
    %6719 = vmatprep.subr.bf16.mxu0 %v6466
    %6720 = vmatpush2.bf16.msra.mxu0 %v6465
    %6721 = vmatprep.mubr.bf16.mxu0 %v5896
    %6722 = vmatmul.mubr.bf16.gmra.mxu0 %v5895
    %v6723 = vpop.f32.mrf.mxu0
    %v6724 = vadd.f32 %v6032, %v6723
    %v6725 = vpop.f32.mrf.mxu0
    %v6726 = vadd.f32 %v6036, %v6725
    %v6727 = vpop.f32.mrf.mxu0
    %v6728 = vpop.f32.mrf.mxu0
    %6729 = vdwg.mxu0
    %6730 = vmatprep.subr.bf16.mxu0 %v6526
    %6731 = vmatpush1.bf16.msra.mxu0 %v6525
    %6732 = vmatprep.subr.bf16.mxu0 %v6522
    %6733 = vmatpush1.bf16.msra.mxu0 %v6521
    %6734 = vmatprep.subr.bf16.mxu0 %v6518
    %6735 = vmatpush1.bf16.msra.mxu0 %v6517
    %6736 = vmatprep.subr.bf16.mxu0 %v6514
    %6737 = vmatpush1.bf16.msra.mxu0 %v6513
    %6738 = vmatprep.subr.bf16.mxu0 %v6510
    %6739 = vmatpush1.bf16.msra.mxu0 %v6509
    %6740 = vmatprep.subr.bf16.mxu0 %v6506
    %6741 = vmatpush1.bf16.msra.mxu0 %v6505
    %6742 = vmatprep.subr.bf16.mxu0 %v6502
    %6743 = vmatpush1.bf16.msra.mxu0 %v6501
    %6744 = vmatprep.subr.bf16.mxu0 %v6498
    %6745 = vmatpush1.bf16.msra.mxu0 %v6497
    %6746 = vmatprep.subr.bf16.mxu0 %v6558
    %6747 = vmatpush2.bf16.msra.mxu0 %v6557
    %6748 = vmatprep.subr.bf16.mxu0 %v6554
    %6749 = vmatpush2.bf16.msra.mxu0 %v6553
    %6750 = vmatprep.subr.bf16.mxu0 %v6550
    %6751 = vmatpush2.bf16.msra.mxu0 %v6549
    %6752 = vmatprep.subr.bf16.mxu0 %v6546
    %6753 = vmatpush2.bf16.msra.mxu0 %v6545
    %6754 = vmatprep.subr.bf16.mxu0 %v6542
    %6755 = vmatpush2.bf16.msra.mxu0 %v6541
    %6756 = vmatprep.subr.bf16.mxu0 %v6538
    %6757 = vmatpush2.bf16.msra.mxu0 %v6537
    %6758 = vmatprep.subr.bf16.mxu0 %v6534
    %6759 = vmatpush2.bf16.msra.mxu0 %v6533
    %6760 = vmatprep.subr.bf16.mxu0 %v6530
    %6761 = vmatpush2.bf16.msra.mxu0 %v6529
    %6762 = vmatprep.mubr.bf16.mxu0 %v5898
    %6763 = vmatmul.mubr.bf16.gmra.mxu0 %v5897
    %v6764 = vpop.f32.mrf.mxu0
    %v6765 = vadd.f32 %v6724, %v6764
    %v6766 = vpop.f32.mrf.mxu0
    %v6767 = vadd.f32 %v6726, %v6766
    %v6768 = vpop.f32.mrf.mxu0
    %v6769 = vpop.f32.mrf.mxu0
    %6770 = vdwg.mxu0
    %6771 = vmatprep.subr.bf16.mxu0 %v6464
    %6772 = vmatpush1.bf16.msra.mxu0 %v6463
    %6773 = vmatprep.subr.bf16.mxu0 %v6460
    %6774 = vmatpush1.bf16.msra.mxu0 %v6459
    %6775 = vmatprep.subr.bf16.mxu0 %v6456
    %6776 = vmatpush1.bf16.msra.mxu0 %v6455
    %6777 = vmatprep.subr.bf16.mxu0 %v6452
    %6778 = vmatpush1.bf16.msra.mxu0 %v6451
    %6779 = vmatprep.subr.bf16.mxu0 %v6448
    %6780 = vmatpush1.bf16.msra.mxu0 %v6447
    %6781 = vmatprep.subr.bf16.mxu0 %v6444
    %6782 = vmatpush1.bf16.msra.mxu0 %v6443
    %6783 = vmatprep.subr.bf16.mxu0 %v6440
    %6784 = vmatpush1.bf16.msra.mxu0 %v6439
    %6785 = vmatprep.subr.bf16.mxu0 %v6436
    %6786 = vmatpush1.bf16.msra.mxu0 %v6435
    %6787 = vmatprep.subr.bf16.mxu0 %v6496
    %6788 = vmatpush2.bf16.msra.mxu0 %v6495
    %6789 = vmatprep.subr.bf16.mxu0 %v6492
    %6790 = vmatpush2.bf16.msra.mxu0 %v6491
    %6791 = vmatprep.subr.bf16.mxu0 %v6488
    %6792 = vmatpush2.bf16.msra.mxu0 %v6487
    %6793 = vmatprep.subr.bf16.mxu0 %v6484
    %6794 = vmatpush2.bf16.msra.mxu0 %v6483
    %6795 = vmatprep.subr.bf16.mxu0 %v6480
    %6796 = vmatpush2.bf16.msra.mxu0 %v6479
    %6797 = vmatprep.subr.bf16.mxu0 %v6476
    %6798 = vmatpush2.bf16.msra.mxu0 %v6475
    %6799 = vmatprep.subr.bf16.mxu0 %v6472
    %6800 = vmatpush2.bf16.msra.mxu0 %v6471
    %6801 = vmatprep.subr.bf16.mxu0 %v6468
    %6802 = vmatpush2.bf16.msra.mxu0 %v6467
    %6803 = vmatprep.mubr.bf16.mxu0 %v5896
    %6804 = vmatmul.mubr.bf16.gmra.mxu0 %v5895
    %v6805 = vpop.f32.mrf.mxu0
    %v6806 = vadd.f32 %v6040, %v6805
    %v6807 = vpop.f32.mrf.mxu0
    %v6808 = vadd.f32 %v6044, %v6807
    %v6809 = vpop.f32.mrf.mxu0
    %v6810 = vpop.f32.mrf.mxu0
    %6811 = vdwg.mxu0
    %6812 = vmatprep.subr.bf16.mxu0 %v6528
    %6813 = vmatpush1.bf16.msra.mxu0 %v6527
    %6814 = vmatprep.subr.bf16.mxu0 %v6524
    %6815 = vmatpush1.bf16.msra.mxu0 %v6523
    %6816 = vmatprep.subr.bf16.mxu0 %v6520
    %6817 = vmatpush1.bf16.msra.mxu0 %v6519
    %6818 = vmatprep.subr.bf16.mxu0 %v6516
    %6819 = vmatpush1.bf16.msra.mxu0 %v6515
    %6820 = vmatprep.subr.bf16.mxu0 %v6512
    %6821 = vmatpush1.bf16.msra.mxu0 %v6511
    %6822 = vmatprep.subr.bf16.mxu0 %v6508
    %6823 = vmatpush1.bf16.msra.mxu0 %v6507
    %6824 = vmatprep.subr.bf16.mxu0 %v6504
    %6825 = vmatpush1.bf16.msra.mxu0 %v6503
    %6826 = vmatprep.subr.bf16.mxu0 %v6500
    %6827 = vmatpush1.bf16.msra.mxu0 %v6499
    %6828 = vmatprep.subr.bf16.mxu0 %v6560
    %6829 = vmatpush2.bf16.msra.mxu0 %v6559
    %6830 = vmatprep.subr.bf16.mxu0 %v6556
    %6831 = vmatpush2.bf16.msra.mxu0 %v6555
    %6832 = vmatprep.subr.bf16.mxu0 %v6552
    %6833 = vmatpush2.bf16.msra.mxu0 %v6551
    %6834 = vmatprep.subr.bf16.mxu0 %v6548
    %6835 = vmatpush2.bf16.msra.mxu0 %v6547
    %6836 = vmatprep.subr.bf16.mxu0 %v6544
    %6837 = vmatpush2.bf16.msra.mxu0 %v6543
    %6838 = vmatprep.subr.bf16.mxu0 %v6540
    %6839 = vmatpush2.bf16.msra.mxu0 %v6539
    %6840 = vmatprep.subr.bf16.mxu0 %v6536
    %6841 = vmatpush2.bf16.msra.mxu0 %v6535
    %6842 = vmatprep.subr.bf16.mxu0 %v6532
    %6843 = vmatpush2.bf16.msra.mxu0 %v6531
    %6844 = vmatprep.mubr.bf16.mxu0 %v5898
    %6845 = vmatmul.mubr.bf16.gmra.mxu0 %v5897
    %v6846 = vpop.f32.mrf.mxu0
    %v6847 = vadd.f32 %v6806, %v6846
    %v6848 = vpop.f32.mrf.mxu0
    %v6849 = vadd.f32 %v6808, %v6848
    %v6850 = vpop.f32.mrf.mxu0
    %v6851 = vpop.f32.mrf.mxu0
    %6852 = vdwg.mxu0
    %v6853 = vmax.f32 %v6765, 0.0
    %v6854 = vmax.f32 %v6767, 0.0
    %v6855 = vmax.f32 %v6847, 0.0
    %v6856 = vmax.f32 %v6849, 0.0
    %v6857 = vpack.c.bf16 %v6853, %v6853
    %v6858 = vpack.c.bf16 %v6854, %v6854
    %v6859 = vpack.c.bf16 %v6855, %v6855
    %v6860 = vpack.c.bf16 %v6856, %v6856
    %v6861 = vld [vmem:[#allocation11] sm:$0xf]
    %v6862 = vld [vmem:[#allocation11 + $0x4] sm:$0xf]
    %v6863 = vld [vmem:[#allocation11 + $0x8] sm:$0xf]
    %v6864 = vld [vmem:[#allocation11 + $0xc] sm:$0xf]
    %v6865 = vld [vmem:[#allocation11 + $0x10] sm:$0xf]
    %v6866 = vld [vmem:[#allocation11 + $0x14] sm:$0xf]
    %v6867 = vld [vmem:[#allocation11 + $0x18] sm:$0xf]
    %v6868 = vld [vmem:[#allocation11 + $0x1c] sm:$0xf]
    %v6869 = vld [vmem:[#allocation11 + $0x20] sm:$0xf]
    %v6870 = vld [vmem:[#allocation11 + $0x24] sm:$0xf]
    %v6871 = vld [vmem:[#allocation11 + $0x28] sm:$0xf]
    %v6872 = vld [vmem:[#allocation11 + $0x2c] sm:$0xf]
    %v6873 = vld [vmem:[#allocation11 + $0x30] sm:$0xf]
    %v6874 = vld [vmem:[#allocation11 + $0x34] sm:$0xf]
    %v6875 = vld [vmem:[#allocation11 + $0x38] sm:$0xf]
    %v6876 = vld [vmem:[#allocation11 + $0x3c] sm:$0xf]
    %v6877 = vld [vmem:[#allocation11 + $0x40] sm:$0xf]
    %v6878 = vld [vmem:[#allocation11 + $0x44] sm:$0xf]
    %v6879 = vld [vmem:[#allocation11 + $0x48] sm:$0xf]
    %v6880 = vld [vmem:[#allocation11 + $0x4c] sm:$0xf]
    %v6881 = vld [vmem:[#allocation11 + $0x50] sm:$0xf]
    %v6882 = vld [vmem:[#allocation11 + $0x54] sm:$0xf]
    %v6883 = vld [vmem:[#allocation11 + $0x58] sm:$0xf]
    %v6884 = vld [vmem:[#allocation11 + $0x5c] sm:$0xf]
    %v6885 = vld [vmem:[#allocation11 + $0x60] sm:$0xf]
    %v6886 = vld [vmem:[#allocation11 + $0x64] sm:$0xf]
    %v6887 = vld [vmem:[#allocation11 + $0x68] sm:$0xf]
    %v6888 = vld [vmem:[#allocation11 + $0x6c] sm:$0xf]
    %v6889 = vld [vmem:[#allocation11 + $0x70] sm:$0xf]
    %v6890 = vld [vmem:[#allocation11 + $0x74] sm:$0xf]
    %v6891 = vld [vmem:[#allocation11 + $0x78] sm:$0xf]
    %v6892 = vld [vmem:[#allocation11 + $0x7c] sm:$0xf]
    %v6893 = vld [vmem:[#allocation11 + $0x80] sm:$0xf]
    %v6894 = vld [vmem:[#allocation11 + $0x84] sm:$0xf]
    %v6895 = vld [vmem:[#allocation11 + $0x88] sm:$0xf]
    %v6896 = vld [vmem:[#allocation11 + $0x8c] sm:$0xf]
    %v6897 = vld [vmem:[#allocation11 + $0x90] sm:$0xf]
    %v6898 = vld [vmem:[#allocation11 + $0x94] sm:$0xf]
    %v6899 = vld [vmem:[#allocation11 + $0x98] sm:$0xf]
    %v6900 = vld [vmem:[#allocation11 + $0x9c] sm:$0xf]
    %v6901 = vld [vmem:[#allocation11 + $0xa0] sm:$0xf]
    %v6902 = vld [vmem:[#allocation11 + $0xa4] sm:$0xf]
    %v6903 = vld [vmem:[#allocation11 + $0xa8] sm:$0xf]
    %v6904 = vld [vmem:[#allocation11 + $0xac] sm:$0xf]
    %v6905 = vld [vmem:[#allocation11 + $0xb0] sm:$0xf]
    %v6906 = vld [vmem:[#allocation11 + $0xb4] sm:$0xf]
    %v6907 = vld [vmem:[#allocation11 + $0xb8] sm:$0xf]
    %v6908 = vld [vmem:[#allocation11 + $0xbc] sm:$0xf]
    %v6909 = vld [vmem:[#allocation11 + $0xc0] sm:$0xf]
    %v6910 = vld [vmem:[#allocation11 + $0xc4] sm:$0xf]
    %v6911 = vld [vmem:[#allocation11 + $0xc8] sm:$0xf]
    %v6912 = vld [vmem:[#allocation11 + $0xcc] sm:$0xf]
    %v6913 = vld [vmem:[#allocation11 + $0xd0] sm:$0xf]
    %v6914 = vld [vmem:[#allocation11 + $0xd4] sm:$0xf]
    %v6915 = vld [vmem:[#allocation11 + $0xd8] sm:$0xf]
    %v6916 = vld [vmem:[#allocation11 + $0xdc] sm:$0xf]
    %v6917 = vld [vmem:[#allocation11 + $0xe0] sm:$0xf]
    %v6918 = vld [vmem:[#allocation11 + $0xe4] sm:$0xf]
    %v6919 = vld [vmem:[#allocation11 + $0xe8] sm:$0xf]
    %v6920 = vld [vmem:[#allocation11 + $0xec] sm:$0xf]
    %v6921 = vld [vmem:[#allocation11 + $0xf0] sm:$0xf]
    %v6922 = vld [vmem:[#allocation11 + $0xf4] sm:$0xf]
    %v6923 = vld [vmem:[#allocation11 + $0xf8] sm:$0xf]
    %v6924 = vld [vmem:[#allocation11 + $0xfc] sm:$0xf]
    %v6925 = vld [vmem:[#allocation13] sm:$0x1]
    %v6927 = vlaneseq
    %v6928 = vshrl.u32 %v6927, 7
    %v6929 = vsub.s32 0, %v6928
    %v6930 = vrot.slane %v6925, %v6929
    %v6996 = vunpack.c.l.b16 %v6861
    %v6997 = vunpack.c.l.b16 %v6862
    %v6998 = vunpack.c.l.b16 %v6863
    %v6999 = vunpack.c.l.b16 %v6864
    %v7000 = vunpack.c.l.b16 %v6865
    %v7001 = vunpack.c.l.b16 %v6866
    %v7002 = vunpack.c.l.b16 %v6867
    %v7003 = vunpack.c.l.b16 %v6868
    %v7004 = vunpack.c.l.b16 %v6869
    %v7005 = vunpack.c.l.b16 %v6870
    %v7006 = vunpack.c.l.b16 %v6871
    %v7007 = vunpack.c.l.b16 %v6872
    %v7008 = vunpack.c.l.b16 %v6873
    %v7009 = vunpack.c.l.b16 %v6874
    %v7010 = vunpack.c.l.b16 %v6875
    %v7011 = vunpack.c.l.b16 %v6876
    %v7012 = vunpack.c.l.b16 %v6877
    %v7013 = vunpack.c.l.b16 %v6878
    %v7014 = vunpack.c.l.b16 %v6879
    %v7015 = vunpack.c.l.b16 %v6880
    %v7016 = vunpack.c.l.b16 %v6881
    %v7017 = vunpack.c.l.b16 %v6882
    %v7018 = vunpack.c.l.b16 %v6883
    %v7019 = vunpack.c.l.b16 %v6884
    %v7020 = vunpack.c.l.b16 %v6885
    %v7021 = vunpack.c.l.b16 %v6886
    %v7022 = vunpack.c.l.b16 %v6887
    %v7023 = vunpack.c.l.b16 %v6888
    %v7024 = vunpack.c.l.b16 %v6889
    %v7025 = vunpack.c.l.b16 %v6890
    %v7026 = vunpack.c.l.b16 %v6891
    %v7027 = vunpack.c.l.b16 %v6892
    %v7028 = vunpack.c.l.b16 %v6893
    %v7029 = vunpack.c.l.b16 %v6894
    %v7030 = vunpack.c.l.b16 %v6895
    %v7031 = vunpack.c.l.b16 %v6896
    %v7032 = vunpack.c.l.b16 %v6897
    %v7033 = vunpack.c.l.b16 %v6898
    %v7034 = vunpack.c.l.b16 %v6899
    %v7035 = vunpack.c.l.b16 %v6900
    %v7036 = vunpack.c.l.b16 %v6901
    %v7037 = vunpack.c.l.b16 %v6902
    %v7038 = vunpack.c.l.b16 %v6903
    %v7039 = vunpack.c.l.b16 %v6904
    %v7040 = vunpack.c.l.b16 %v6905
    %v7041 = vunpack.c.l.b16 %v6906
    %v7042 = vunpack.c.l.b16 %v6907
    %v7043 = vunpack.c.l.b16 %v6908
    %v7044 = vunpack.c.l.b16 %v6909
    %v7045 = vunpack.c.l.b16 %v6910
    %v7046 = vunpack.c.l.b16 %v6911
    %v7047 = vunpack.c.l.b16 %v6912
    %v7048 = vunpack.c.l.b16 %v6913
    %v7049 = vunpack.c.l.b16 %v6914
    %v7050 = vunpack.c.l.b16 %v6915
    %v7051 = vunpack.c.l.b16 %v6916
    %v7052 = vunpack.c.l.b16 %v6917
    %v7053 = vunpack.c.l.b16 %v6918
    %v7054 = vunpack.c.l.b16 %v6919
    %v7055 = vunpack.c.l.b16 %v6920
    %v7056 = vunpack.c.l.b16 %v6921
    %v7057 = vunpack.c.l.b16 %v6922
    %v7058 = vunpack.c.l.b16 %v6923
    %v7059 = vunpack.c.l.b16 %v6924
    %v7060 = vpack.c.b16 %v6997, %v6996
    %v7061 = vpack.c.b16 %v6999, %v6998
    %v7062 = vpack.c.b16 %v7001, %v7000
    %v7063 = vpack.c.b16 %v7003, %v7002
    %v7064 = vpack.c.b16 %v7005, %v7004
    %v7065 = vpack.c.b16 %v7007, %v7006
    %v7066 = vpack.c.b16 %v7009, %v7008
    %v7067 = vpack.c.b16 %v7011, %v7010
    %v7068 = vpack.c.b16 %v7013, %v7012
    %v7069 = vpack.c.b16 %v7015, %v7014
    %v7070 = vpack.c.b16 %v7017, %v7016
    %v7071 = vpack.c.b16 %v7019, %v7018
    %v7072 = vpack.c.b16 %v7021, %v7020
    %v7073 = vpack.c.b16 %v7023, %v7022
    %v7074 = vpack.c.b16 %v7025, %v7024
    %v7075 = vpack.c.b16 %v7027, %v7026
    %v7076 = vpack.c.b16 %v7029, %v7028
    %v7077 = vpack.c.b16 %v7031, %v7030
    %v7078 = vpack.c.b16 %v7033, %v7032
    %v7079 = vpack.c.b16 %v7035, %v7034
    %v7080 = vpack.c.b16 %v7037, %v7036
    %v7081 = vpack.c.b16 %v7039, %v7038
    %v7082 = vpack.c.b16 %v7041, %v7040
    %v7083 = vpack.c.b16 %v7043, %v7042
    %v7084 = vpack.c.b16 %v7045, %v7044
    %v7085 = vpack.c.b16 %v7047, %v7046
    %v7086 = vpack.c.b16 %v7049, %v7048
    %v7087 = vpack.c.b16 %v7051, %v7050
    %v7088 = vpack.c.b16 %v7053, %v7052
    %v7089 = vpack.c.b16 %v7055, %v7054
    %v7090 = vpack.c.b16 %v7057, %v7056
    %v7091 = vpack.c.b16 %v7059, %v7058
    %7124 = vmatprep.subr.bf16.mxu0 0
    %7125 = vmatpush1.bf16.msra.mxu0 %v7067
    %7126 = vmatprep.subr.bf16.mxu0 0
    %7127 = vmatpush1.bf16.msra.mxu0 %v7066
    %7128 = vmatprep.subr.bf16.mxu0 0
    %7129 = vmatpush1.bf16.msra.mxu0 %v7065
    %7130 = vmatprep.subr.bf16.mxu0 0
    %7131 = vmatpush1.bf16.msra.mxu0 %v7064
    %7132 = vmatprep.subr.bf16.mxu0 0
    %7133 = vmatpush1.bf16.msra.mxu0 %v7063
    %7134 = vmatprep.subr.bf16.mxu0 0
    %7135 = vmatpush1.bf16.msra.mxu0 %v7062
    %7136 = vmatprep.subr.bf16.mxu0 0
    %7137 = vmatpush1.bf16.msra.mxu0 %v7061
    %7138 = vmatprep.subr.bf16.mxu0 0
    %7139 = vmatpush1.bf16.msra.mxu0 %v7060
    %7140 = vmatprep.subr.bf16.mxu0 0
    %7141 = vmatpush2.bf16.msra.mxu0 %v7075
    %7142 = vmatprep.subr.bf16.mxu0 0
    %7143 = vmatpush2.bf16.msra.mxu0 %v7074
    %7144 = vmatprep.subr.bf16.mxu0 0
    %7145 = vmatpush2.bf16.msra.mxu0 %v7073
    %7146 = vmatprep.subr.bf16.mxu0 0
    %7147 = vmatpush2.bf16.msra.mxu0 %v7072
    %7148 = vmatprep.subr.bf16.mxu0 0
    %7149 = vmatpush2.bf16.msra.mxu0 %v7071
    %7150 = vmatprep.subr.bf16.mxu0 0
    %7151 = vmatpush2.bf16.msra.mxu0 %v7070
    %7152 = vmatprep.subr.bf16.mxu0 0
    %7153 = vmatpush2.bf16.msra.mxu0 %v7069
    %7154 = vmatprep.subr.bf16.mxu0 0
    %7155 = vmatpush2.bf16.msra.mxu0 %v7068
    %7156 = vmatprep.mubr.bf16.mxu0 %v6858
    %7157 = vmatmul.mubr.bf16.gmra.mxu0 %v6857
    %v7158 = vpop.f32.mrf.mxu0
    %v7159 = vadd.f32 %v6930, %v7158
    %v7160 = vpop.f32.mrf.mxu0
    %v7161 = vpop.f32.mrf.mxu0
    %v7162 = vpop.f32.mrf.mxu0
    %7163 = vdwg.mxu0
    %7164 = vmatprep.subr.bf16.mxu0 0
    %7165 = vmatpush1.bf16.msra.mxu0 %v7083
    %7166 = vmatprep.subr.bf16.mxu0 0
    %7167 = vmatpush1.bf16.msra.mxu0 %v7082
    %7168 = vmatprep.subr.bf16.mxu0 0
    %7169 = vmatpush1.bf16.msra.mxu0 %v7081
    %7170 = vmatprep.subr.bf16.mxu0 0
    %7171 = vmatpush1.bf16.msra.mxu0 %v7080
    %7172 = vmatprep.subr.bf16.mxu0 0
    %7173 = vmatpush1.bf16.msra.mxu0 %v7079
    %7174 = vmatprep.subr.bf16.mxu0 0
    %7175 = vmatpush1.bf16.msra.mxu0 %v7078
    %7176 = vmatprep.subr.bf16.mxu0 0
    %7177 = vmatpush1.bf16.msra.mxu0 %v7077
    %7178 = vmatprep.subr.bf16.mxu0 0
    %7179 = vmatpush1.bf16.msra.mxu0 %v7076
    %7180 = vmatprep.subr.bf16.mxu0 0
    %7181 = vmatpush2.bf16.msra.mxu0 %v7091
    %7182 = vmatprep.subr.bf16.mxu0 0
    %7183 = vmatpush2.bf16.msra.mxu0 %v7090
    %7184 = vmatprep.subr.bf16.mxu0 0
    %7185 = vmatpush2.bf16.msra.mxu0 %v7089
    %7186 = vmatprep.subr.bf16.mxu0 0
    %7187 = vmatpush2.bf16.msra.mxu0 %v7088
    %7188 = vmatprep.subr.bf16.mxu0 0
    %7189 = vmatpush2.bf16.msra.mxu0 %v7087
    %7190 = vmatprep.subr.bf16.mxu0 0
    %7191 = vmatpush2.bf16.msra.mxu0 %v7086
    %7192 = vmatprep.subr.bf16.mxu0 0
    %7193 = vmatpush2.bf16.msra.mxu0 %v7085
    %7194 = vmatprep.subr.bf16.mxu0 0
    %7195 = vmatpush2.bf16.msra.mxu0 %v7084
    %7196 = vmatprep.mubr.bf16.mxu0 %v6860
    %7197 = vmatmul.mubr.bf16.gmra.mxu0 %v6859
    %v7198 = vpop.f32.mrf.mxu0
    %v7199 = vadd.f32 %v7159, %v7198
    %v7200 = vpop.f32.mrf.mxu0
    %v7201 = vpop.f32.mrf.mxu0
    %v7202 = vpop.f32.mrf.mxu0
    %7203 = vdwg.mxu0
    %7204 = vst [vmem:[#allocation14] sm:$0x3] %v7199
    // Predicated region
    $region58: #{tpu_custom_call.1} parent=1 // pred_check
      _
    $region59: #{tpu_custom_call.1} parent=1 // pred_check_branch
      %7206 = sbr.rel (0) target = $region61
    $region60: #{tpu_custom_call.1} parent=1 // pred_region
      %s7208 = ssub.s32 32, 32
      %7209 = vsyncadd [#allocation4], %s7208
      %s7211 = sshll.u32 [#allocation14], 4
      %s7212 = int_to_ptr.vmem [resolvable:$true] %s7211
      %7214 = dma.vmem_to_hbm [thread:$0]  %s7212, 32, %s7, [#allocation4]
    $region61: #{tpu_custom_call.1} parent=1 // pred_fallthru
      _
    // Predicated region
    $region62: #{tpu_custom_call.1} parent=1 // pred_check
      _
    $region63: #{tpu_custom_call.1} parent=1 // pred_check_branch
      %7216 = sbr.rel (0) target = $region65
    $region64: #{tpu_custom_call.1} parent=1 // pred_region
      %7217 = dma.done [#allocation4], 32
    $region65: #{tpu_custom_call.1} parent=1 // pred_fallthru
      _
    %7218 = vsyncpa [#allocation3], 1
    %7219 = vsyncpa [#allocation6], 1
    %7220 = vsyncpa [#allocation9], 1
    %7221 = vsyncpa [#allocation12], 1
    %7222 = vsyncpa [#allocation4], 1

</llo_original>
